<compile_context>
chip_gen: v5e
topology: v5e:2x2
jax: 0.10.0
libtpu: 0.0.40
codegen_flags: <defaults>
</compile_context>

<pallas_src>
import functools

import jax
import jax.numpy as jnp
from jax.experimental import pallas as pl
from jax.experimental.pallas import tpu as pltpu


def _round_up(x, m):
    return ((x + m - 1) // m) * m


def _pick_chunk(seq_len, max_chunk=64):
    """Largest sublane-aligned (multiple-of-8) chunk <= max_chunk that divides
    the padded sequence length (minimizes padding)."""
    s8 = _round_up(seq_len, 8)
    cap = min(max_chunk, s8)
    cap -= cap % 8
    for cand in range(cap, 7, -8):
        if s8 % cand == 0:
            return cand
    return 8


# -----------------------------------------------------------------------------
# Pallas kernel: one time chunk of the mLSTM recurrence, chunkwise-parallel.
#
#   grid = (S_pad // tc,)   sequential ("arbitrary") over time chunks.
#   inputs : x  (B, tc, D)   streamed per chunk
#            W  (6, D, H)    VMEM-resident (constant index), gates [i|f|o|q|k|v]
#            b  (6, 1, H)    VMEM-resident
#   outputs: h  (B, tc, H)   per chunk
#            C  (B, H, H), n (B, H), m (B, H)   constant-index blocks that both
#            carry the recurrent state across chunks and hold the final state.
#   scratch: r  (B, tc, H)   running max of the stabilizer recursion.
#
# Math (exact rewrite of the per-step recurrence, per batch b, hidden row i):
#   a_s   = logsigmoid(f~_s);   l_t = sum_{s<=t} a_s;   Fdec_t = exp(l_t)
#   m_t   = l_t + r_t,          r_t = max(m_prev, max_{s<=t}(i~_s - l_s))
#   W_s   = exp(i~_s - m_s - l_s)                      (source weight)
#   C_t   = Fdec_t . (C_prev + sum_{s<=t} W_s v_s k_s^T)
#   n_t   = Fdec_t . (n_prev + sum_{s<=t} W_s k_s)
#   h_t   = sigmoid(o~_t) . Fdec_t . (C_prev q_t + sum_{s<=t}(k_s.q_t) W_s v_s)
#           / max(|n_t . q_t|, 1)
# -----------------------------------------------------------------------------
def _mlstm_chunk_kernel(x_ref, w_ref, b_ref,
                        h_ref, c_ref, n_ref, m_ref,
                        r_sc, *, tc, valid_len):
    B = x_ref.shape[0]
    D = x_ref.shape[2]
    H = h_ref.shape[-1]

    # Init the carried state in the (VMEM-resident) output blocks themselves
    # -- no duplicated state scratch (review item 2).
    @pl.when(pl.program_id(0) == 0)
    def _init():
        c_ref[...] = jnp.zeros_like(c_ref)
        n_ref[...] = jnp.zeros_like(n_ref)
        m_ref[...] = jnp.zeros_like(m_ref)

    c_prev = c_ref[...]                      # (B, H, H)
    n_prev = n_ref[...]                      # (B, H)
    m_prev = m_ref[...]                      # (B, H)

    x = x_ref[...]                           # (B, tc, D)

    # --- fused projections: W resident in VMEM, one batched MXU matmul per
    # --- gate; the leading gate axis avoids any lane-offset 6H slicing.
    def proj(g):
        w_g = jnp.broadcast_to(w_ref[g], (B, D, H))      # (B, D, H)
        z = jnp.einsum('btd,bdh->bth', x, w_g,
                       preferred_element_type=jnp.float32)
        return z + b_ref[g]                              # bias (1, H) broadcasts

    i_pre = proj(0)
    f_pre = proj(1)
    o_pre = proj(2)
    q_g = proj(3)
    k_g = proj(4)          # 1/sqrt(H) key scale folded into W/b by the wrapper
    v_g = proj(5)

    o_sig = jax.nn.sigmoid(o_pre)
    # stable log(sigmoid(x)) = min(x,0) - log(1 + exp(-|x|))
    log_f = jnp.minimum(f_pre, 0.0) - jnp.log(1.0 + jnp.exp(-jnp.abs(f_pre)))

    if valid_len is not None:
        # Ragged tail: make padded steps exact no-ops on the carried state.
        t_loc = jax.lax.broadcasted_iota(jnp.int32, (tc, 1), 0)
        t_glb = pl.program_id(0) * tc + t_loc
        valid = (t_glb < valid_len)[None, :, :]          # (1, tc, 1)
        log_f = jnp.where(valid, log_f, 0.0)             # f -> 1 (no decay)
        i_pre = jnp.where(valid, i_pre, -1e30)           # i' -> 0 (no write)

    # Causal (inclusive lower-triangular) mask, also used as the cumulative-sum
    # operator so the running sums go through the MXU.
    row = jax.lax.broadcasted_iota(jnp.int32, (tc, tc), 0)
    col = jax.lax.broadcasted_iota(jnp.int32, (tc, tc), 1)
    causal = (col <= row).astype(jnp.float32)            # (tc, tc)
    causal_b = jnp.broadcast_to(causal, (B, tc, tc))

    # cumulative log-decay  l_t = sum_{s<=t} log_f_s      (MXU)
    l_cum = jnp.einsum('bts,bsh->bth', causal_b, log_f,
                       preferred_element_type=jnp.float32)

    u = i_pre - l_cum                                     # (B, tc, H)

    # Stabilizer running max r_t = max(m_prev, max_{s<=t} u_s): the only
    # sequential piece (cheap O(tc*B*H) VPU work), written into a small scratch.
    running = jnp.maximum(m_prev, u[:, 0, :])
    r_sc[:, 0, :] = running
    for t in range(1, tc):
        running = jnp.maximum(running, u[:, t, :])
        r_sc[:, t, :] = running
    r_all = r_sc[...]                                     # (B, tc, H)

    f_dec = jnp.exp(l_cum)                                # prod of sigmoids <= 1
    # TODO(synk): exp(-l_s) can overflow only for pathological saturation over a
    # whole chunk (total within-chunk decay < e^-85); bounded by max_chunk=64.
    w_src = jnp.exp(u - r_all - l_cum)                    # exp(i~_s - m_s - l_s)

    k_src = w_src * k_g                                   # decay-weighted keys
    v_src = w_src * v_g                                   # decay-weighted values

    # ---- chunkwise-parallel output (all MXU) ----
    att = jnp.einsum('bth,bsh->bts', q_g, k_g,
                     preferred_element_type=jnp.float32) * causal
    intra = jnp.einsum('bts,bsh->bth', att, v_src,
                       preferred_element_type=jnp.float32)
    inter = jnp.einsum('btj,bij->bti', q_g, c_prev,
                       preferred_element_type=jnp.float32)
    numer = f_dec * (inter + intra)                       # (B, tc, H)

    # normalizer n_t . q_t  (cumulative decay-weighted keys via MXU)
    cum_k = jnp.einsum('bts,bsh->bth', causal_b, k_src,
                       preferred_element_type=jnp.float32)
    n_all = f_dec * (n_prev[:, None, :] + cum_k)          # (B, tc, H)
    inner = jnp.sum(n_all * q_g, axis=-1, keepdims=True)  # (B, tc, 1)
    denom = jnp.maximum(jnp.abs(inner), 1.0)

    h_ref[...] = (o_sig * numer / denom).astype(h_ref.dtype)

    # ---- chunk-end state update (MXU), written straight into the resident
    # ---- output blocks so the next chunk picks it up.
    v_src_t = jnp.swapaxes(v_src, 1, 2)                   # (B, H, tc)
    d_c = jnp.einsum('bht,btj->bhj', v_src_t, k_g,
                     preferred_element_type=jnp.float32)  # sum_s W_s v_s k_s^T
    f_dec_last = f_dec[:, tc - 1, :]                      # (B, H)
    c_ref[...] = f_dec_last[:, :, None] * (c_prev + d_c)
    n_ref[...] = n_all[:, tc - 1, :]
    m_ref[...] = l_cum[:, tc - 1, :] + running


def _run_layer(x_pad, w6, b6, hidden_size, tc, valid_len):
    """One mLSTM layer over the whole (padded) sequence."""
    B, s_pad, _ = x_pad.shape
    H = hidden_size
    kernel = functools.partial(
        _mlstm_chunk_kernel, tc=tc,
        valid_len=None if valid_len == s_pad else valid_len)
    # TODO(synk): on v7x add a leading "parallel" grid axis over batch blocks
    # (independent recurrences, one per TensorCore); batch=2 here is too small.
    return pl.pallas_call(
        kernel,
        out_shape=(
            jax.ShapeDtypeStruct((B, s_pad, H), jnp.float32),   # h sequence
            jax.ShapeDtypeStruct((B, H, H), jnp.float32),       # final C
            jax.ShapeDtypeStruct((B, H), jnp.float32),          # final n
            jax.ShapeDtypeStruct((B, H), jnp.float32),          # final m
        ),
        grid_spec=pltpu.PrefetchScalarGridSpec(
            num_scalar_prefetch=0,
            grid=(s_pad // tc,),
            in_specs=[
                pl.BlockSpec((B, tc, x_pad.shape[2]), lambda c: (0, c, 0)),
                pl.BlockSpec((6, w6.shape[1], H), lambda c: (0, 0, 0)),
                pl.BlockSpec((6, 1, H), lambda c: (0, 0, 0)),
            ],
            out_specs=[
                pl.BlockSpec((B, tc, H), lambda c: (0, c, 0)),
                pl.BlockSpec((B, H, H), lambda c: (0, 0, 0)),
                pl.BlockSpec((B, H), lambda c: (0, 0)),
                pl.BlockSpec((B, H), lambda c: (0, 0)),
            ],
            scratch_shapes=[pltpu.VMEM((B, tc, H), jnp.float32)],
        ),
        compiler_params=pltpu.CompilerParams(
            dimension_semantics=("arbitrary",)),
    )(x_pad, w6, b6)


@jax.jit
def mlstm_forward(x, Ws, bs):
    """mLSTM.forward with hidden_states=None.

    x : (B, S, input_size)
    Ws: tuple of per-layer weights (D_l, 6H), columns ordered [i | f | o | q | k | v]
    bs: tuple of per-layer biases  (1, 6H)
    Returns: outputs (B, S, H), list of final (C, n, m) per layer.
    """
    B, S, _ = x.shape
    tc = _pick_chunk(S)
    s_pad = _round_up(S, tc)
    x_l = x.astype(jnp.float32)
    if s_pad != S:
        x_l = jnp.pad(x_l, ((0, 0), (0, s_pad - S), (0, 0)))

    finals = []
    for W, b in zip(Ws, bs):
        D = W.shape[0]
        H = W.shape[1] // 6
        # Fold the 1/sqrt(H) key scale into the k columns (exact rewrite).
        scale = jnp.concatenate([
            jnp.ones((4 * H,), jnp.float32),
            jnp.full((H,), 1.0 / jnp.sqrt(jnp.float32(H)), jnp.float32),
            jnp.ones((H,), jnp.float32)])
        W_s = (W.astype(jnp.float32) * scale[None, :])
        b_s = (b.astype(jnp.float32) * scale[None, :])
        # Leading gate axis so the kernel never lane-slices a fused 6H axis.
        w6 = W_s.reshape(D, 6, H).transpose(1, 0, 2)       # (6, D, H)
        b6 = b_s.reshape(6, H)[:, None, :]                 # (6, 1, H)

        h_seq, C_f, n_f, m_f = _run_layer(x_l, w6, b6, H, tc, S)
        finals.append((C_f, n_f, m_f))
        x_l = h_seq                                        # feed next layer (padded)

    out = x_l[:, :S, :] if s_pad != S else x_l
    return out, finals


# -----------------------------------------------------------------------------
# Deterministic parameter init (mimics torch.nn.Linear default U(-1/sqrt(fan_in), +))
# -----------------------------------------------------------------------------
def init_mlstm_params(key, input_size, hidden_size, num_layers):
    Ws, bs = [], []
    for layer in range(num_layers):
        d_in = input_size if layer == 0 else hidden_size
        bound = 1.0 / (d_in ** 0.5)
        key, kw, kb = jax.random.split(key, 3)
        # columns ordered [i | f | o | q | k | v]
        W = jax.random.uniform(kw, (d_in, 6 * hidden_size),
                               minval=-bound, maxval=bound, dtype=jnp.float32)
        b = jax.random.uniform(kb, (1, 6 * hidden_size),
                               minval=-bound, maxval=bound, dtype=jnp.float32)
        Ws.append(W)
        bs.append(b)
    return tuple(Ws), tuple(bs)


# -----------------------------------------------------------------------------
# Pure-JAX reference (mirrors the PyTorch forward exactly) for verification.
# -----------------------------------------------------------------------------
def mlstm_reference(x, Ws, bs):
    B, S, _ = x.shape
    hi = jax.lax.Precision.HIGHEST
    states = []
    for W in Ws:
        H = W.shape[1] // 6
        states.append((jnp.zeros((B, H, H), jnp.float32),
                       jnp.zeros((B, H), jnp.float32),
                       jnp.zeros((B, H), jnp.float32)))
    outs = []
    for t in range(S):
        x_t = x[:, t, :]
        for li, (W, b) in enumerate(zip(Ws, bs)):
            H = W.shape[1] // 6
            C, n, m = states[li]
            z = jnp.dot(x_t, W, precision=hi) + b[0]
            i_tilda, f_tilda, o_tilda = z[:, :H], z[:, H:2 * H], z[:, 2 * H:3 * H]
            q = z[:, 3 * H:4 * H]
            k = z[:, 4 * H:5 * H] / jnp.sqrt(jnp.float32(H))
            v = z[:, 5 * H:6 * H]
            i_g = jnp.exp(i_tilda)
            f_g = jax.nn.sigmoid(f_tilda)
            o_g = jax.nn.sigmoid(o_tilda)
            m_t = jnp.maximum(jnp.log(f_g) + m, jnp.log(i_g))
            i_prime = jnp.exp(i_tilda - m_t)
            C_t = f_g[:, :, None] * C + i_prime[:, :, None] * (v[:, :, None] * k[:, None, :])
            n_t = f_g * n + i_prime * k
            ni = jnp.sum(n_t * q, axis=-1)
            div = jnp.maximum(jnp.abs(ni), jnp.ones_like(ni))
            h_tilda = jnp.einsum('bkj,bj->bk', C_t, q, precision=hi) / div[:, None]
            h_t = o_g * h_tilda
            states[li] = (C_t, n_t, m_t)
            x_t = h_t
        outs.append(x_t)
    return jnp.stack(outs, axis=1), states


if __name__ == "__main__":
    BATCH, SEQ, INPUT, HIDDEN, LAYERS = 2, 8, 16, 32, 2

    key = jax.random.PRNGKey(0)
    key, kx, kp = jax.random.split(key, 3)
    x = jax.random.normal(kx, (BATCH, SEQ, INPUT), dtype=jnp.float32)
    Ws, bs = init_mlstm_params(kp, INPUT, HIDDEN, LAYERS)

    outputs, finals = mlstm_forward(x, Ws, bs)
    outputs = jax.block_until_ready(outputs)
    for C_f, n_f, m_f in finals:
        jax.block_until_ready(C_f)

    # Verify against the pure-JAX reference of the PyTorch forward.
    ref_out, ref_states = mlstm_reference(x, Ws, bs)
    assert outputs.shape == (BATCH, SEQ, HIDDEN)
    assert jnp.allclose(outputs, ref_out, rtol=5e-3, atol=5e-3), "output mismatch"
    for (C_f, n_f, m_f), (C_r, n_r, m_r) in zip(finals, ref_states):
        assert jnp.allclose(C_f, C_r, rtol=5e-3, atol=5e-3), "C mismatch"
        assert jnp.allclose(n_f, n_r, rtol=5e-3, atol=5e-3), "n mismatch"
        assert jnp.allclose(m_f, m_r, rtol=5e-3, atol=5e-3), "m mismatch"

    print("KERNEL_OK")
</pallas_src>

<mosaic_0001>
module attributes {stable_mosaic.version = 11 : i64} {
  func.func @_mlstm_chunk_kernel(%arg0: i32, %arg1: memref<2x8x16xf32, #tpu.memory_space<vmem>>, %arg2: memref<6x16x32xf32, #tpu.memory_space<vmem>>, %arg3: memref<6x1x32xf32, #tpu.memory_space<vmem>>, %arg4: memref<2x8x32xf32, #tpu.memory_space<vmem>>, %arg5: memref<2x32x32xf32, #tpu.memory_space<vmem>>, %arg6: memref<2x32xf32, #tpu.memory_space<vmem>>, %arg7: memref<2x32xf32, #tpu.memory_space<vmem>>, %arg8: memref<2x8x32xf32, #tpu.memory_space<vmem>>) attributes {dimension_semantics = [#tpu.dimension_semantics<arbitrary>], iteration_bounds = array<i64: 1>, scalar_prefetch = 0 : i64, scratch_operands = 1 : i64, tpu.core_type = #tpu.core_type<tc>, window_params = [{transform_indices = @transform_0, window_bounds = array<i64: 2, 8, 16>}, {pipeline_mode = #tpu.pipeline_mode<synchronous>, transform_indices = @transform_1, window_bounds = array<i64: 6, 16, 32>}, {pipeline_mode = #tpu.pipeline_mode<synchronous>, transform_indices = @transform_2, window_bounds = array<i64: 6, 1, 32>}, {transform_indices = @transform_3, window_bounds = array<i64: 2, 8, 32>}, {pipeline_mode = #tpu.pipeline_mode<synchronous>, transform_indices = @transform_4, window_bounds = array<i64: 2, 32, 32>}, {pipeline_mode = #tpu.pipeline_mode<synchronous>, transform_indices = @transform_5, window_bounds = array<i64: 2, 32>}, {pipeline_mode = #tpu.pipeline_mode<synchronous>, transform_indices = @transform_6, window_bounds = array<i64: 2, 32>}]} {
    %c0_i32 = arith.constant 0 : i32
    %0 = arith.cmpi eq, %arg0, %c0_i32 : i32
    %1 = arith.extui %0 : i1 to i32
    %c0_i32_0 = arith.constant 0 : i32
    %2 = arith.cmpi ne, %1, %c0_i32_0 : i32
    scf.if %2 {
      %cst_93 = arith.constant 0.000000e+00 : f32
      %185 = vector.broadcast %cst_93 : f32 to vector<2x32x32xf32>
      %c0_94 = arith.constant 0 : index
      %c0_95 = arith.constant 0 : index
      %c0_96 = arith.constant 0 : index
      %186 = vector.load %arg5[%c0_94, %c0_95, %c0_96] : memref<2x32x32xf32, #tpu.memory_space<vmem>>, vector<2x32x32xf32>
      tpu.vector_store %arg5[%c0_94, %c0_95, %c0_96], %185 {strides = array<i32>} : memref<2x32x32xf32, #tpu.memory_space<vmem>>, vector<2x32x32xf32>,
      %cst_97 = arith.constant 0.000000e+00 : f32
      %187 = vector.broadcast %cst_97 : f32 to vector<2x32xf32>
      %c0_98 = arith.constant 0 : index
      %c0_99 = arith.constant 0 : index
      %188 = vector.load %arg6[%c0_98, %c0_99] : memref<2x32xf32, #tpu.memory_space<vmem>>, vector<2x32xf32>
      tpu.vector_store %arg6[%c0_98, %c0_99], %187 {strides = array<i32>} : memref<2x32xf32, #tpu.memory_space<vmem>>, vector<2x32xf32>,
      %cst_100 = arith.constant 0.000000e+00 : f32
      %189 = vector.broadcast %cst_100 : f32 to vector<2x32xf32>
      %c0_101 = arith.constant 0 : index
      %c0_102 = arith.constant 0 : index
      %190 = vector.load %arg7[%c0_101, %c0_102] : memref<2x32xf32, #tpu.memory_space<vmem>>, vector<2x32xf32>
      tpu.vector_store %arg7[%c0_101, %c0_102], %189 {strides = array<i32>} : memref<2x32xf32, #tpu.memory_space<vmem>>, vector<2x32xf32>,
    } else {
    }
    %c0 = arith.constant 0 : index
    %c0_1 = arith.constant 0 : index
    %c0_2 = arith.constant 0 : index
    %3 = vector.load %arg5[%c0, %c0_1, %c0_2] : memref<2x32x32xf32, #tpu.memory_space<vmem>>, vector<2x32x32xf32>
    %c0_3 = arith.constant 0 : index
    %c0_4 = arith.constant 0 : index
    %4 = vector.load %arg6[%c0_3, %c0_4] : memref<2x32xf32, #tpu.memory_space<vmem>>, vector<2x32xf32>
    %c0_5 = arith.constant 0 : index
    %c0_6 = arith.constant 0 : index
    %5 = vector.load %arg7[%c0_5, %c0_6] : memref<2x32xf32, #tpu.memory_space<vmem>>, vector<2x32xf32>
    %c0_7 = arith.constant 0 : index
    %c0_8 = arith.constant 0 : index
    %c0_9 = arith.constant 0 : index
    %6 = vector.load %arg1[%c0_7, %c0_8, %c0_9] : memref<2x8x16xf32, #tpu.memory_space<vmem>>, vector<2x8x16xf32>
    %c0_10 = arith.constant 0 : index
    %c0_11 = arith.constant 0 : index
    %c0_12 = arith.constant 0 : index
    %7 = vector.load %arg2[%c0_10, %c0_11, %c0_12] : memref<6x16x32xf32, #tpu.memory_space<vmem>>, vector<1x16x32xf32>
    %8 = vector.shape_cast %7 : vector<1x16x32xf32> to vector<16x32xf32>
    %9 = vector.shape_cast %8 : vector<16x32xf32> to vector<1x16x32xf32>
    %10 = vector.broadcast %9 : vector<1x16x32xf32> to vector<2x16x32xf32>
    "tpu.trace_start"() <{level = 10 : i32, message = "btd,bdh->bth"}> : () -> ()
    %cst = arith.constant dense<0.000000e+00> : vector<2x8x32xf32>
    %11 = tpu.matmul %6, %10, %cst {dimension_numbers = #tpu.dot_dimension_numbers<[2], [1], [1], [2], [0, 0, 0, 1, 1, 2], [0], [0]>} : vector<2x8x16xf32>, vector<2x16x32xf32>, vector<2x8x32xf32> -> vector<2x8x32xf32>
    "tpu.trace_stop"() : () -> ()
    %c0_13 = arith.constant 0 : index
    %c0_14 = arith.constant 0 : index
    %c0_15 = arith.constant 0 : index
    %12 = vector.load %arg3[%c0_13, %c0_14, %c0_15] : memref<6x1x32xf32, #tpu.memory_space<vmem>>, vector<1x1x32xf32>
    %13 = vector.shape_cast %12 : vector<1x1x32xf32> to vector<1x32xf32>
    %14 = vector.shape_cast %13 : vector<1x32xf32> to vector<1x1x32xf32>
    %15 = vector.broadcast %14 : vector<1x1x32xf32> to vector<2x8x32xf32>
    %16 = arith.addf %11, %15 : vector<2x8x32xf32>
    %c1 = arith.constant 1 : index
    %c0_16 = arith.constant 0 : index
    %c0_17 = arith.constant 0 : index
    %17 = vector.load %arg2[%c1, %c0_16, %c0_17] : memref<6x16x32xf32, #tpu.memory_space<vmem>>, vector<1x16x32xf32>
    %18 = vector.shape_cast %17 : vector<1x16x32xf32> to vector<16x32xf32>
    %19 = vector.shape_cast %18 : vector<16x32xf32> to vector<1x16x32xf32>
    %20 = vector.broadcast %19 : vector<1x16x32xf32> to vector<2x16x32xf32>
    "tpu.trace_start"() <{level = 10 : i32, message = "btd,bdh->bth"}> : () -> ()
    %cst_18 = arith.constant dense<0.000000e+00> : vector<2x8x32xf32>
    %21 = tpu.matmul %6, %20, %cst_18 {dimension_numbers = #tpu.dot_dimension_numbers<[2], [1], [1], [2], [0, 0, 0, 1, 1, 2], [0], [0]>} : vector<2x8x16xf32>, vector<2x16x32xf32>, vector<2x8x32xf32> -> vector<2x8x32xf32>
    "tpu.trace_stop"() : () -> ()
    %c1_19 = arith.constant 1 : index
    %c0_20 = arith.constant 0 : index
    %c0_21 = arith.constant 0 : index
    %22 = vector.load %arg3[%c1_19, %c0_20, %c0_21] : memref<6x1x32xf32, #tpu.memory_space<vmem>>, vector<1x1x32xf32>
    %23 = vector.shape_cast %22 : vector<1x1x32xf32> to vector<1x32xf32>
    %24 = vector.shape_cast %23 : vector<1x32xf32> to vector<1x1x32xf32>
    %25 = vector.broadcast %24 : vector<1x1x32xf32> to vector<2x8x32xf32>
    %26 = arith.addf %21, %25 : vector<2x8x32xf32>
    %c2 = arith.constant 2 : index
    %c0_22 = arith.constant 0 : index
    %c0_23 = arith.constant 0 : index
    %27 = vector.load %arg2[%c2, %c0_22, %c0_23] : memref<6x16x32xf32, #tpu.memory_space<vmem>>, vector<1x16x32xf32>
    %28 = vector.shape_cast %27 : vector<1x16x32xf32> to vector<16x32xf32>
    %29 = vector.shape_cast %28 : vector<16x32xf32> to vector<1x16x32xf32>
    %30 = vector.broadcast %29 : vector<1x16x32xf32> to vector<2x16x32xf32>
    "tpu.trace_start"() <{level = 10 : i32, message = "btd,bdh->bth"}> : () -> ()
    %cst_24 = arith.constant dense<0.000000e+00> : vector<2x8x32xf32>
    %31 = tpu.matmul %6, %30, %cst_24 {dimension_numbers = #tpu.dot_dimension_numbers<[2], [1], [1], [2], [0, 0, 0, 1, 1, 2], [0], [0]>} : vector<2x8x16xf32>, vector<2x16x32xf32>, vector<2x8x32xf32> -> vector<2x8x32xf32>
    "tpu.trace_stop"() : () -> ()
    %c2_25 = arith.constant 2 : index
    %c0_26 = arith.constant 0 : index
    %c0_27 = arith.constant 0 : index
    %32 = vector.load %arg3[%c2_25, %c0_26, %c0_27] : memref<6x1x32xf32, #tpu.memory_space<vmem>>, vector<1x1x32xf32>
    %33 = vector.shape_cast %32 : vector<1x1x32xf32> to vector<1x32xf32>
    %34 = vector.shape_cast %33 : vector<1x32xf32> to vector<1x1x32xf32>
    %35 = vector.broadcast %34 : vector<1x1x32xf32> to vector<2x8x32xf32>
    %36 = arith.addf %31, %35 : vector<2x8x32xf32>
    %c3 = arith.constant 3 : index
    %c0_28 = arith.constant 0 : index
    %c0_29 = arith.constant 0 : index
    %37 = vector.load %arg2[%c3, %c0_28, %c0_29] : memref<6x16x32xf32, #tpu.memory_space<vmem>>, vector<1x16x32xf32>
    %38 = vector.shape_cast %37 : vector<1x16x32xf32> to vector<16x32xf32>
    %39 = vector.shape_cast %38 : vector<16x32xf32> to vector<1x16x32xf32>
    %40 = vector.broadcast %39 : vector<1x16x32xf32> to vector<2x16x32xf32>
    "tpu.trace_start"() <{level = 10 : i32, message = "btd,bdh->bth"}> : () -> ()
    %cst_30 = arith.constant dense<0.000000e+00> : vector<2x8x32xf32>
    %41 = tpu.matmul %6, %40, %cst_30 {dimension_numbers = #tpu.dot_dimension_numbers<[2], [1], [1], [2], [0, 0, 0, 1, 1, 2], [0], [0]>} : vector<2x8x16xf32>, vector<2x16x32xf32>, vector<2x8x32xf32> -> vector<2x8x32xf32>
    "tpu.trace_stop"() : () -> ()
    %c3_31 = arith.constant 3 : index
    %c0_32 = arith.constant 0 : index
    %c0_33 = arith.constant 0 : index
    %42 = vector.load %arg3[%c3_31, %c0_32, %c0_33] : memref<6x1x32xf32, #tpu.memory_space<vmem>>, vector<1x1x32xf32>
    %43 = vector.shape_cast %42 : vector<1x1x32xf32> to vector<1x32xf32>
    %44 = vector.shape_cast %43 : vector<1x32xf32> to vector<1x1x32xf32>
    %45 = vector.broadcast %44 : vector<1x1x32xf32> to vector<2x8x32xf32>
    %46 = arith.addf %41, %45 : vector<2x8x32xf32>
    %c4 = arith.constant 4 : index
    %c0_34 = arith.constant 0 : index
    %c0_35 = arith.constant 0 : index
    %47 = vector.load %arg2[%c4, %c0_34, %c0_35] : memref<6x16x32xf32, #tpu.memory_space<vmem>>, vector<1x16x32xf32>
    %48 = vector.shape_cast %47 : vector<1x16x32xf32> to vector<16x32xf32>
    %49 = vector.shape_cast %48 : vector<16x32xf32> to vector<1x16x32xf32>
    %50 = vector.broadcast %49 : vector<1x16x32xf32> to vector<2x16x32xf32>
    "tpu.trace_start"() <{level = 10 : i32, message = "btd,bdh->bth"}> : () -> ()
    %cst_36 = arith.constant dense<0.000000e+00> : vector<2x8x32xf32>
    %51 = tpu.matmul %6, %50, %cst_36 {dimension_numbers = #tpu.dot_dimension_numbers<[2], [1], [1], [2], [0, 0, 0, 1, 1, 2], [0], [0]>} : vector<2x8x16xf32>, vector<2x16x32xf32>, vector<2x8x32xf32> -> vector<2x8x32xf32>
    "tpu.trace_stop"() : () -> ()
    %c4_37 = arith.constant 4 : index
    %c0_38 = arith.constant 0 : index
    %c0_39 = arith.constant 0 : index
    %52 = vector.load %arg3[%c4_37, %c0_38, %c0_39] : memref<6x1x32xf32, #tpu.memory_space<vmem>>, vector<1x1x32xf32>
    %53 = vector.shape_cast %52 : vector<1x1x32xf32> to vector<1x32xf32>
    %54 = vector.shape_cast %53 : vector<1x32xf32> to vector<1x1x32xf32>
    %55 = vector.broadcast %54 : vector<1x1x32xf32> to vector<2x8x32xf32>
    %56 = arith.addf %51, %55 : vector<2x8x32xf32>
    %c5 = arith.constant 5 : index
    %c0_40 = arith.constant 0 : index
    %c0_41 = arith.constant 0 : index
    %57 = vector.load %arg2[%c5, %c0_40, %c0_41] : memref<6x16x32xf32, #tpu.memory_space<vmem>>, vector<1x16x32xf32>
    %58 = vector.shape_cast %57 : vector<1x16x32xf32> to vector<16x32xf32>
    %59 = vector.shape_cast %58 : vector<16x32xf32> to vector<1x16x32xf32>
    %60 = vector.broadcast %59 : vector<1x16x32xf32> to vector<2x16x32xf32>
    "tpu.trace_start"() <{level = 10 : i32, message = "btd,bdh->bth"}> : () -> ()
    %cst_42 = arith.constant dense<0.000000e+00> : vector<2x8x32xf32>
    %61 = tpu.matmul %6, %60, %cst_42 {dimension_numbers = #tpu.dot_dimension_numbers<[2], [1], [1], [2], [0, 0, 0, 1, 1, 2], [0], [0]>} : vector<2x8x16xf32>, vector<2x16x32xf32>, vector<2x8x32xf32> -> vector<2x8x32xf32>
    "tpu.trace_stop"() : () -> ()
    %c5_43 = arith.constant 5 : index
    %c0_44 = arith.constant 0 : index
    %c0_45 = arith.constant 0 : index
    %62 = vector.load %arg3[%c5_43, %c0_44, %c0_45] : memref<6x1x32xf32, #tpu.memory_space<vmem>>, vector<1x1x32xf32>
    %63 = vector.shape_cast %62 : vector<1x1x32xf32> to vector<1x32xf32>
    %64 = vector.shape_cast %63 : vector<1x32xf32> to vector<1x1x32xf32>
    %65 = vector.broadcast %64 : vector<1x1x32xf32> to vector<2x8x32xf32>
    %66 = arith.addf %61, %65 : vector<2x8x32xf32>
    %67 = arith.negf %36 : vector<2x8x32xf32>
    %68 = math.exp %67 : vector<2x8x32xf32>
    %cst_46 = arith.constant 1.000000e+00 : f32
    %69 = vector.broadcast %cst_46 : f32 to vector<2x8x32xf32>
    %70 = arith.addf %69, %68 : vector<2x8x32xf32>
    %71 = arith.divf %69, %70 : vector<2x8x32xf32>
    %cst_47 = arith.constant 0.000000e+00 : f32
    %72 = vector.broadcast %cst_47 : f32 to vector<2x8x32xf32>
    %73 = arith.minimumf %26, %72 : vector<2x8x32xf32>
    %74 = math.absf %26 : vector<2x8x32xf32>
    %cst_48 = arith.constant 0.000000e+00 : f32
    %75 = vector.broadcast %cst_48 : f32 to vector<2x8x32xf32>
    %76 = arith.subf %75, %74 : vector<2x8x32xf32>
    %77 = math.exp %76 : vector<2x8x32xf32>
    %cst_49 = arith.constant 1.000000e+00 : f32
    %78 = vector.broadcast %cst_49 : f32 to vector<2x8x32xf32>
    %79 = arith.addf %78, %77 : vector<2x8x32xf32>
    %80 = math.log %79 : vector<2x8x32xf32>
    %81 = arith.subf %73, %80 : vector<2x8x32xf32>
    %82 = tpu.iota {dimensions = array<i32: 0>} : vector<8x8xi32>
    %83 = tpu.iota {dimensions = array<i32: 1>} : vector<8x8xi32>
    %84 = arith.cmpi sle, %83, %82 : vector<8x8xi32>
    %85 = arith.extui %84 : vector<8x8xi1> to vector<8x8xi32>
    %86 = arith.sitofp %85 : vector<8x8xi32> to vector<8x8xf32>
    %87 = vector.shape_cast %86 : vector<8x8xf32> to vector<1x8x8xf32>
    %88 = vector.broadcast %87 : vector<1x8x8xf32> to vector<2x8x8xf32>
    "tpu.trace_start"() <{level = 10 : i32, message = "bts,bsh->bth"}> : () -> ()
    %cst_50 = arith.constant dense<0.000000e+00> : vector<2x8x32xf32>
    %89 = tpu.matmul %88, %81, %cst_50 {dimension_numbers = #tpu.dot_dimension_numbers<[2], [1], [1], [2], [0, 0, 0, 1, 1, 2], [0], [0]>} : vector<2x8x8xf32>, vector<2x8x32xf32>, vector<2x8x32xf32> -> vector<2x8x32xf32>
    "tpu.trace_stop"() : () -> ()
    %90 = arith.subf %16, %89 : vector<2x8x32xf32>
    %91 = vector.extract_strided_slice %90 {offsets = [0, 0, 0], sizes = [2, 1, 32], strides = [1, 1, 1]} : vector<2x8x32xf32> to vector<2x1x32xf32>
    %92 = vector.shape_cast %91 : vector<2x1x32xf32> to vector<2x32xf32>
    %93 = arith.maximumf %5, %92 : vector<2x32xf32>
    %c0_51 = arith.constant 0 : index
    %c0_52 = arith.constant 0 : index
    %c0_53 = arith.constant 0 : index
    %94 = vector.load %arg8[%c0_51, %c0_52, %c0_53] : memref<2x8x32xf32, #tpu.memory_space<vmem>>, vector<2x1x32xf32>
    %95 = vector.shape_cast %94 : vector<2x1x32xf32> to vector<2x32xf32>
    %96 = vector.shape_cast %93 : vector<2x32xf32> to vector<2x1x32xf32>
    tpu.vector_store %arg8[%c0_51, %c0_52, %c0_53], %96 {strides = array<i32>} : memref<2x8x32xf32, #tpu.memory_space<vmem>>, vector<2x1x32xf32>,
    %97 = vector.extract_strided_slice %90 {offsets = [0, 1, 0], sizes = [2, 1, 32], strides = [1, 1, 1]} : vector<2x8x32xf32> to vector<2x1x32xf32>
    %98 = vector.shape_cast %97 : vector<2x1x32xf32> to vector<2x32xf32>
    %99 = arith.maximumf %93, %98 : vector<2x32xf32>
    %c0_54 = arith.constant 0 : index
    %c1_55 = arith.constant 1 : index
    %c0_56 = arith.constant 0 : index
    %100 = vector.load %arg8[%c0_54, %c1_55, %c0_56] : memref<2x8x32xf32, #tpu.memory_space<vmem>>, vector<2x1x32xf32>
    %101 = vector.shape_cast %100 : vector<2x1x32xf32> to vector<2x32xf32>
    %102 = vector.shape_cast %99 : vector<2x32xf32> to vector<2x1x32xf32>
    tpu.vector_store %arg8[%c0_54, %c1_55, %c0_56], %102 {strides = array<i32>} : memref<2x8x32xf32, #tpu.memory_space<vmem>>, vector<2x1x32xf32>,
    %103 = vector.extract_strided_slice %90 {offsets = [0, 2, 0], sizes = [2, 1, 32], strides = [1, 1, 1]} : vector<2x8x32xf32> to vector<2x1x32xf32>
    %104 = vector.shape_cast %103 : vector<2x1x32xf32> to vector<2x32xf32>
    %105 = arith.maximumf %99, %104 : vector<2x32xf32>
    %c0_57 = arith.constant 0 : index
    %c2_58 = arith.constant 2 : index
    %c0_59 = arith.constant 0 : index
    %106 = vector.load %arg8[%c0_57, %c2_58, %c0_59] : memref<2x8x32xf32, #tpu.memory_space<vmem>>, vector<2x1x32xf32>
    %107 = vector.shape_cast %106 : vector<2x1x32xf32> to vector<2x32xf32>
    %108 = vector.shape_cast %105 : vector<2x32xf32> to vector<2x1x32xf32>
    tpu.vector_store %arg8[%c0_57, %c2_58, %c0_59], %108 {strides = array<i32>} : memref<2x8x32xf32, #tpu.memory_space<vmem>>, vector<2x1x32xf32>,
    %109 = vector.extract_strided_slice %90 {offsets = [0, 3, 0], sizes = [2, 1, 32], strides = [1, 1, 1]} : vector<2x8x32xf32> to vector<2x1x32xf32>
    %110 = vector.shape_cast %109 : vector<2x1x32xf32> to vector<2x32xf32>
    %111 = arith.maximumf %105, %110 : vector<2x32xf32>
    %c0_60 = arith.constant 0 : index
    %c3_61 = arith.constant 3 : index
    %c0_62 = arith.constant 0 : index
    %112 = vector.load %arg8[%c0_60, %c3_61, %c0_62] : memref<2x8x32xf32, #tpu.memory_space<vmem>>, vector<2x1x32xf32>
    %113 = vector.shape_cast %112 : vector<2x1x32xf32> to vector<2x32xf32>
    %114 = vector.shape_cast %111 : vector<2x32xf32> to vector<2x1x32xf32>
    tpu.vector_store %arg8[%c0_60, %c3_61, %c0_62], %114 {strides = array<i32>} : memref<2x8x32xf32, #tpu.memory_space<vmem>>, vector<2x1x32xf32>,
    %115 = vector.extract_strided_slice %90 {offsets = [0, 4, 0], sizes = [2, 1, 32], strides = [1, 1, 1]} : vector<2x8x32xf32> to vector<2x1x32xf32>
    %116 = vector.shape_cast %115 : vector<2x1x32xf32> to vector<2x32xf32>
    %117 = arith.maximumf %111, %116 : vector<2x32xf32>
    %c0_63 = arith.constant 0 : index
    %c4_64 = arith.constant 4 : index
    %c0_65 = arith.constant 0 : index
    %118 = vector.load %arg8[%c0_63, %c4_64, %c0_65] : memref<2x8x32xf32, #tpu.memory_space<vmem>>, vector<2x1x32xf32>
    %119 = vector.shape_cast %118 : vector<2x1x32xf32> to vector<2x32xf32>
    %120 = vector.shape_cast %117 : vector<2x32xf32> to vector<2x1x32xf32>
    tpu.vector_store %arg8[%c0_63, %c4_64, %c0_65], %120 {strides = array<i32>} : memref<2x8x32xf32, #tpu.memory_space<vmem>>, vector<2x1x32xf32>,
    %121 = vector.extract_strided_slice %90 {offsets = [0, 5, 0], sizes = [2, 1, 32], strides = [1, 1, 1]} : vector<2x8x32xf32> to vector<2x1x32xf32>
    %122 = vector.shape_cast %121 : vector<2x1x32xf32> to vector<2x32xf32>
    %123 = arith.maximumf %117, %122 : vector<2x32xf32>
    %c0_66 = arith.constant 0 : index
    %c5_67 = arith.constant 5 : index
    %c0_68 = arith.constant 0 : index
    %124 = vector.load %arg8[%c0_66, %c5_67, %c0_68] : memref<2x8x32xf32, #tpu.memory_space<vmem>>, vector<2x1x32xf32>
    %125 = vector.shape_cast %124 : vector<2x1x32xf32> to vector<2x32xf32>
    %126 = vector.shape_cast %123 : vector<2x32xf32> to vector<2x1x32xf32>
    tpu.vector_store %arg8[%c0_66, %c5_67, %c0_68], %126 {strides = array<i32>} : memref<2x8x32xf32, #tpu.memory_space<vmem>>, vector<2x1x32xf32>,
    %127 = vector.extract_strided_slice %90 {offsets = [0, 6, 0], sizes = [2, 1, 32], strides = [1, 1, 1]} : vector<2x8x32xf32> to vector<2x1x32xf32>
    %128 = vector.shape_cast %127 : vector<2x1x32xf32> to vector<2x32xf32>
    %129 = arith.maximumf %123, %128 : vector<2x32xf32>
    %c0_69 = arith.constant 0 : index
    %c6 = arith.constant 6 : index
    %c0_70 = arith.constant 0 : index
    %130 = vector.load %arg8[%c0_69, %c6, %c0_70] : memref<2x8x32xf32, #tpu.memory_space<vmem>>, vector<2x1x32xf32>
    %131 = vector.shape_cast %130 : vector<2x1x32xf32> to vector<2x32xf32>
    %132 = vector.shape_cast %129 : vector<2x32xf32> to vector<2x1x32xf32>
    tpu.vector_store %arg8[%c0_69, %c6, %c0_70], %132 {strides = array<i32>} : memref<2x8x32xf32, #tpu.memory_space<vmem>>, vector<2x1x32xf32>,
    %133 = vector.extract_strided_slice %90 {offsets = [0, 7, 0], sizes = [2, 1, 32], strides = [1, 1, 1]} : vector<2x8x32xf32> to vector<2x1x32xf32>
    %134 = vector.shape_cast %133 : vector<2x1x32xf32> to vector<2x32xf32>
    %135 = arith.maximumf %129, %134 : vector<2x32xf32>
    %c0_71 = arith.constant 0 : index
    %c7 = arith.constant 7 : index
    %c0_72 = arith.constant 0 : index
    %136 = vector.load %arg8[%c0_71, %c7, %c0_72] : memref<2x8x32xf32, #tpu.memory_space<vmem>>, vector<2x1x32xf32>
    %137 = vector.shape_cast %136 : vector<2x1x32xf32> to vector<2x32xf32>
    %138 = vector.shape_cast %135 : vector<2x32xf32> to vector<2x1x32xf32>
    tpu.vector_store %arg8[%c0_71, %c7, %c0_72], %138 {strides = array<i32>} : memref<2x8x32xf32, #tpu.memory_space<vmem>>, vector<2x1x32xf32>,
    %c0_73 = arith.constant 0 : index
    %c0_74 = arith.constant 0 : index
    %c0_75 = arith.constant 0 : index
    %139 = vector.load %arg8[%c0_73, %c0_74, %c0_75] : memref<2x8x32xf32, #tpu.memory_space<vmem>>, vector<2x8x32xf32>
    %140 = math.exp %89 : vector<2x8x32xf32>
    %141 = arith.subf %90, %139 : vector<2x8x32xf32>
    %142 = arith.subf %141, %89 : vector<2x8x32xf32>
    %143 = math.exp %142 : vector<2x8x32xf32>
    %144 = arith.mulf %143, %56 : vector<2x8x32xf32>
    %145 = arith.mulf %143, %66 : vector<2x8x32xf32>
    "tpu.trace_start"() <{level = 10 : i32, message = "bth,bsh->bts"}> : () -> ()
    %cst_76 = arith.constant dense<0.000000e+00> : vector<2x8x8xf32>
    %146 = tpu.matmul %46, %56, %cst_76 {dimension_numbers = #tpu.dot_dimension_numbers<[2], [2], [1], [1], [0, 0, 0, 1, 1, 1], [0], [0]>} : vector<2x8x32xf32>, vector<2x8x32xf32>, vector<2x8x8xf32> -> vector<2x8x8xf32>
    "tpu.trace_stop"() : () -> ()
    %147 = vector.shape_cast %86 : vector<8x8xf32> to vector<1x8x8xf32>
    %148 = vector.broadcast %147 : vector<1x8x8xf32> to vector<2x8x8xf32>
    %149 = arith.mulf %146, %148 : vector<2x8x8xf32>
    "tpu.trace_start"() <{level = 10 : i32, message = "bts,bsh->bth"}> : () -> ()
    %cst_77 = arith.constant dense<0.000000e+00> : vector<2x8x32xf32>
    %150 = tpu.matmul %149, %145, %cst_77 {dimension_numbers = #tpu.dot_dimension_numbers<[2], [1], [1], [2], [0, 0, 0, 1, 1, 2], [0], [0]>} : vector<2x8x8xf32>, vector<2x8x32xf32>, vector<2x8x32xf32> -> vector<2x8x32xf32>
    "tpu.trace_stop"() : () -> ()
    "tpu.trace_start"() <{level = 10 : i32, message = "btj,bij->bti"}> : () -> ()
    %cst_78 = arith.constant dense<0.000000e+00> : vector<2x8x32xf32>
    %151 = tpu.matmul %46, %3, %cst_78 {dimension_numbers = #tpu.dot_dimension_numbers<[2], [2], [1], [1], [0, 0, 0, 1, 1, 1], [0], [0]>} : vector<2x8x32xf32>, vector<2x32x32xf32>, vector<2x8x32xf32> -> vector<2x8x32xf32>
    "tpu.trace_stop"() : () -> ()
    %152 = arith.addf %151, %150 : vector<2x8x32xf32>
    %153 = arith.mulf %140, %152 : vector<2x8x32xf32>
    "tpu.trace_start"() <{level = 10 : i32, message = "bts,bsh->bth"}> : () -> ()
    %cst_79 = arith.constant dense<0.000000e+00> : vector<2x8x32xf32>
    %154 = tpu.matmul %88, %144, %cst_79 {dimension_numbers = #tpu.dot_dimension_numbers<[2], [1], [1], [2], [0, 0, 0, 1, 1, 2], [0], [0]>} : vector<2x8x8xf32>, vector<2x8x32xf32>, vector<2x8x32xf32> -> vector<2x8x32xf32>
    "tpu.trace_stop"() : () -> ()
    %155 = vector.shape_cast %4 : vector<2x32xf32> to vector<2x1x32xf32>
    %156 = vector.broadcast %155 : vector<2x1x32xf32> to vector<2x8x32xf32>
    %157 = arith.addf %156, %154 : vector<2x8x32xf32>
    %158 = arith.mulf %140, %157 : vector<2x8x32xf32>
    %159 = arith.mulf %158, %46 : vector<2x8x32xf32>
    %cst_80 = arith.constant dense<0.000000e+00> : vector<2x8xf32>
    %160 = vector.multi_reduction <add>, %159, %cst_80 [2] : vector<2x8x32xf32> to vector<2x8xf32>
    %161 = vector.shape_cast %160 : vector<2x8xf32> to vector<2x8x1xf32>
    %162 = math.absf %161 : vector<2x8x1xf32>
    %cst_81 = arith.constant 1.000000e+00 : f32
    %163 = vector.broadcast %cst_81 : f32 to vector<2x8x1xf32>
    %164 = arith.maximumf %162, %163 : vector<2x8x1xf32>
    %165 = arith.mulf %71, %153 : vector<2x8x32xf32>
    %166 = vector.broadcast %164 : vector<2x8x1xf32> to vector<2x8x32xf32>
    %167 = arith.divf %165, %166 : vector<2x8x32xf32>
    %c0_82 = arith.constant 0 : index
    %c0_83 = arith.constant 0 : index
    %c0_84 = arith.constant 0 : index
    %168 = vector.load %arg4[%c0_82, %c0_83, %c0_84] : memref<2x8x32xf32, #tpu.memory_space<vmem>>, vector<2x8x32xf32>
    tpu.vector_store %arg4[%c0_82, %c0_83, %c0_84], %167 {strides = array<i32>} : memref<2x8x32xf32, #tpu.memory_space<vmem>>, vector<2x8x32xf32>,
    %169 = tpu.transpose %145, [0, 2, 1] : vector<2x8x32xf32> -> vector<2x32x8xf32>
    "tpu.trace_start"() <{level = 10 : i32, message = "bht,btj->bhj"}> : () -> ()
    %cst_85 = arith.constant dense<0.000000e+00> : vector<2x32x32xf32>
    %170 = tpu.matmul %169, %56, %cst_85 {dimension_numbers = #tpu.dot_dimension_numbers<[2], [1], [1], [2], [0, 0, 0, 1, 1, 2], [0], [0]>} : vector<2x32x8xf32>, vector<2x8x32xf32>, vector<2x32x32xf32> -> vector<2x32x32xf32>
    "tpu.trace_stop"() : () -> ()
    %171 = vector.extract_strided_slice %140 {offsets = [0, 7, 0], sizes = [2, 1, 32], strides = [1, 1, 1]} : vector<2x8x32xf32> to vector<2x1x32xf32>
    %172 = vector.shape_cast %171 : vector<2x1x32xf32> to vector<2x32xf32>
    %173 = vector.shape_cast %172 : vector<2x32xf32> to vector<2x32x1xf32>
    %174 = arith.addf %3, %170 : vector<2x32x32xf32>
    %175 = vector.broadcast %173 : vector<2x32x1xf32> to vector<2x32x32xf32>
    %176 = arith.mulf %175, %174 : vector<2x32x32xf32>
    %c0_86 = arith.constant 0 : index
    %c0_87 = arith.constant 0 : index
    %c0_88 = arith.constant 0 : index
    %177 = vector.load %arg5[%c0_86, %c0_87, %c0_88] : memref<2x32x32xf32, #tpu.memory_space<vmem>>, vector<2x32x32xf32>
    tpu.vector_store %arg5[%c0_86, %c0_87, %c0_88], %176 {strides = array<i32>} : memref<2x32x32xf32, #tpu.memory_space<vmem>>, vector<2x32x32xf32>,
    %178 = vector.extract_strided_slice %158 {offsets = [0, 7, 0], sizes = [2, 1, 32], strides = [1, 1, 1]} : vector<2x8x32xf32> to vector<2x1x32xf32>
    %179 = vector.shape_cast %178 : vector<2x1x32xf32> to vector<2x32xf32>
    %c0_89 = arith.constant 0 : index
    %c0_90 = arith.constant 0 : index
    %180 = vector.load %arg6[%c0_89, %c0_90] : memref<2x32xf32, #tpu.memory_space<vmem>>, vector<2x32xf32>
    tpu.vector_store %arg6[%c0_89, %c0_90], %179 {strides = array<i32>} : memref<2x32xf32, #tpu.memory_space<vmem>>, vector<2x32xf32>,
    %181 = vector.extract_strided_slice %89 {offsets = [0, 7, 0], sizes = [2, 1, 32], strides = [1, 1, 1]} : vector<2x8x32xf32> to vector<2x1x32xf32>
    %182 = vector.shape_cast %181 : vector<2x1x32xf32> to vector<2x32xf32>
    %183 = arith.addf %182, %135 : vector<2x32xf32>
    %c0_91 = arith.constant 0 : index
    %c0_92 = arith.constant 0 : index
    %184 = vector.load %arg7[%c0_91, %c0_92] : memref<2x32xf32, #tpu.memory_space<vmem>>, vector<2x32xf32>
    tpu.vector_store %arg7[%c0_91, %c0_92], %183 {strides = array<i32>} : memref<2x32xf32, #tpu.memory_space<vmem>>, vector<2x32xf32>,
    return
  }
  func.func @transform_0(%arg0: i32) -> (i32, i32, i32) {
    %c0_i32 = arith.constant 0 : i32
    %c0_i32_0 = arith.constant 0 : i32
    %c0_i32_1 = arith.constant 0 : i32
    return %c0_i32, %arg0, %c0_i32_0 : i32, i32, i32
  }
  func.func @transform_1(%arg0: i32) -> (i32, i32, i32) {
    %c0_i32 = arith.constant 0 : i32
    %c0_i32_0 = arith.constant 0 : i32
    %c0_i32_1 = arith.constant 0 : i32
    %c0_i32_2 = arith.constant 0 : i32
    return %c0_i32, %c0_i32_0, %c0_i32_1 : i32, i32, i32
  }
  func.func @transform_2(%arg0: i32) -> (i32, i32, i32) {
    %c0_i32 = arith.constant 0 : i32
    %c0_i32_0 = arith.constant 0 : i32
    %c0_i32_1 = arith.constant 0 : i32
    %c0_i32_2 = arith.constant 0 : i32
    return %c0_i32, %c0_i32_0, %c0_i32_1 : i32, i32, i32
  }
  func.func @transform_3(%arg0: i32) -> (i32, i32, i32) {
    %c0_i32 = arith.constant 0 : i32
    %c0_i32_0 = arith.constant 0 : i32
    %c0_i32_1 = arith.constant 0 : i32
    return %c0_i32, %arg0, %c0_i32_0 : i32, i32, i32
  }
  func.func @transform_4(%arg0: i32) -> (i32, i32, i32) {
    %c0_i32 = arith.constant 0 : i32
    %c0_i32_0 = arith.constant 0 : i32
    %c0_i32_1 = arith.constant 0 : i32
    %c0_i32_2 = arith.constant 0 : i32
    return %c0_i32, %c0_i32_0, %c0_i32_1 : i32, i32, i32
  }
  func.func @transform_5(%arg0: i32) -> (i32, i32) {
    %c0_i32 = arith.constant 0 : i32
    %c0_i32_0 = arith.constant 0 : i32
    %c0_i32_1 = arith.constant 0 : i32
    return %c0_i32, %c0_i32_0 : i32, i32
  }
  func.func @transform_6(%arg0: i32) -> (i32, i32) {
    %c0_i32 = arith.constant 0 : i32
    %c0_i32_0 = arith.constant 0 : i32
    %c0_i32_1 = arith.constant 0 : i32
    return %c0_i32, %c0_i32_0 : i32, i32
  }
}

module attributes {stable_mosaic.version = 11 : i64} {
  func.func @_mlstm_chunk_kernel(%arg0: i32, %arg1: memref<2x8x32xf32, #tpu.memory_space<vmem>>, %arg2: memref<6x32x32xf32, #tpu.memory_space<vmem>>, %arg3: memref<6x1x32xf32, #tpu.memory_space<vmem>>, %arg4: memref<2x8x32xf32, #tpu.memory_space<vmem>>, %arg5: memref<2x32x32xf32, #tpu.memory_space<vmem>>, %arg6: memref<2x32xf32, #tpu.memory_space<vmem>>, %arg7: memref<2x32xf32, #tpu.memory_space<vmem>>, %arg8: memref<2x8x32xf32, #tpu.memory_space<vmem>>) attributes {dimension_semantics = [#tpu.dimension_semantics<arbitrary>], iteration_bounds = array<i64: 1>, scalar_prefetch = 0 : i64, scratch_operands = 1 : i64, tpu.core_type = #tpu.core_type<tc>, window_params = [{transform_indices = @transform_0, window_bounds = array<i64: 2, 8, 32>}, {pipeline_mode = #tpu.pipeline_mode<synchronous>, transform_indices = @transform_1, window_bounds = array<i64: 6, 32, 32>}, {pipeline_mode = #tpu.pipeline_mode<synchronous>, transform_indices = @transform_2, window_bounds = array<i64: 6, 1, 32>}, {transform_indices = @transform_3, window_bounds = array<i64: 2, 8, 32>}, {pipeline_mode = #tpu.pipeline_mode<synchronous>, transform_indices = @transform_4, window_bounds = array<i64: 2, 32, 32>}, {pipeline_mode = #tpu.pipeline_mode<synchronous>, transform_indices = @transform_5, window_bounds = array<i64: 2, 32>}, {pipeline_mode = #tpu.pipeline_mode<synchronous>, transform_indices = @transform_6, window_bounds = array<i64: 2, 32>}]} {
    %c0_i32 = arith.constant 0 : i32
    %0 = arith.cmpi eq, %arg0, %c0_i32 : i32
    %1 = arith.extui %0 : i1 to i32
    %c0_i32_0 = arith.constant 0 : i32
    %2 = arith.cmpi ne, %1, %c0_i32_0 : i32
    scf.if %2 {
      %cst_93 = arith.constant 0.000000e+00 : f32
      %185 = vector.broadcast %cst_93 : f32 to vector<2x32x32xf32>
      %c0_94 = arith.constant 0 : index
      %c0_95 = arith.constant 0 : index
      %c0_96 = arith.constant 0 : index
      %186 = vector.load %arg5[%c0_94, %c0_95, %c0_96] : memref<2x32x32xf32, #tpu.memory_space<vmem>>, vector<2x32x32xf32>
      tpu.vector_store %arg5[%c0_94, %c0_95, %c0_96], %185 {strides = array<i32>} : memref<2x32x32xf32, #tpu.memory_space<vmem>>, vector<2x32x32xf32>,
      %cst_97 = arith.constant 0.000000e+00 : f32
      %187 = vector.broadcast %cst_97 : f32 to vector<2x32xf32>
      %c0_98 = arith.constant 0 : index
      %c0_99 = arith.constant 0 : index
      %188 = vector.load %arg6[%c0_98, %c0_99] : memref<2x32xf32, #tpu.memory_space<vmem>>, vector<2x32xf32>
      tpu.vector_store %arg6[%c0_98, %c0_99], %187 {strides = array<i32>} : memref<2x32xf32, #tpu.memory_space<vmem>>, vector<2x32xf32>,
      %cst_100 = arith.constant 0.000000e+00 : f32
      %189 = vector.broadcast %cst_100 : f32 to vector<2x32xf32>
      %c0_101 = arith.constant 0 : index
      %c0_102 = arith.constant 0 : index
      %190 = vector.load %arg7[%c0_101, %c0_102] : memref<2x32xf32, #tpu.memory_space<vmem>>, vector<2x32xf32>
      tpu.vector_store %arg7[%c0_101, %c0_102], %189 {strides = array<i32>} : memref<2x32xf32, #tpu.memory_space<vmem>>, vector<2x32xf32>,
    } else {
    }
    %c0 = arith.constant 0 : index
    %c0_1 = arith.constant 0 : index
    %c0_2 = arith.constant 0 : index
    %3 = vector.load %arg5[%c0, %c0_1, %c0_2] : memref<2x32x32xf32, #tpu.memory_space<vmem>>, vector<2x32x32xf32>
    %c0_3 = arith.constant 0 : index
    %c0_4 = arith.constant 0 : index
    %4 = vector.load %arg6[%c0_3, %c0_4] : memref<2x32xf32, #tpu.memory_space<vmem>>, vector<2x32xf32>
    %c0_5 = arith.constant 0 : index
    %c0_6 = arith.constant 0 : index
    %5 = vector.load %arg7[%c0_5, %c0_6] : memref<2x32xf32, #tpu.memory_space<vmem>>, vector<2x32xf32>
    %c0_7 = arith.constant 0 : index
    %c0_8 = arith.constant 0 : index
    %c0_9 = arith.constant 0 : index
    %6 = vector.load %arg1[%c0_7, %c0_8, %c0_9] : memref<2x8x32xf32, #tpu.memory_space<vmem>>, vector<2x8x32xf32>
    %c0_10 = arith.constant 0 : index
    %c0_11 = arith.constant 0 : index
    %c0_12 = arith.constant 0 : index
    %7 = vector.load %arg2[%c0_10, %c0_11, %c0_12] : memref<6x32x32xf32, #tpu.memory_space<vmem>>, vector<1x32x32xf32>
    %8 = vector.shape_cast %7 : vector<1x32x32xf32> to vector<32x32xf32>
    %9 = vector.shape_cast %8 : vector<32x32xf32> to vector<1x32x32xf32>
    %10 = vector.broadcast %9 : vector<1x32x32xf32> to vector<2x32x32xf32>
    "tpu.trace_start"() <{level = 10 : i32, message = "btd,bdh->bth"}> : () -> ()
    %cst = arith.constant dense<0.000000e+00> : vector<2x8x32xf32>
    %11 = tpu.matmul %6, %10, %cst {dimension_numbers = #tpu.dot_dimension_numbers<[2], [1], [1], [2], [0, 0, 0, 1, 1, 2], [0], [0]>} : vector<2x8x32xf32>, vector<2x32x32xf32>, vector<2x8x32xf32> -> vector<2x8x32xf32>
    "tpu.trace_stop"() : () -> ()
    %c0_13 = arith.constant 0 : index
    %c0_14 = arith.constant 0 : index
    %c0_15 = arith.constant 0 : index
    %12 = vector.load %arg3[%c0_13, %c0_14, %c0_15] : memref<6x1x32xf32, #tpu.memory_space<vmem>>, vector<1x1x32xf32>
    %13 = vector.shape_cast %12 : vector<1x1x32xf32> to vector<1x32xf32>
    %14 = vector.shape_cast %13 : vector<1x32xf32> to vector<1x1x32xf32>
    %15 = vector.broadcast %14 : vector<1x1x32xf32> to vector<2x8x32xf32>
    %16 = arith.addf %11, %15 : vector<2x8x32xf32>
    %c1 = arith.constant 1 : index
    %c0_16 = arith.constant 0 : index
    %c0_17 = arith.constant 0 : index
    %17 = vector.load %arg2[%c1, %c0_16, %c0_17] : memref<6x32x32xf32, #tpu.memory_space<vmem>>, vector<1x32x32xf32>
    %18 = vector.shape_cast %17 : vector<1x32x32xf32> to vector<32x32xf32>
    %19 = vector.shape_cast %18 : vector<32x32xf32> to vector<1x32x32xf32>
    %20 = vector.broadcast %19 : vector<1x32x32xf32> to vector<2x32x32xf32>
    "tpu.trace_start"() <{level = 10 : i32, message = "btd,bdh->bth"}> : () -> ()
    %cst_18 = arith.constant dense<0.000000e+00> : vector<2x8x32xf32>
    %21 = tpu.matmul %6, %20, %cst_18 {dimension_numbers = #tpu.dot_dimension_numbers<[2], [1], [1], [2], [0, 0, 0, 1, 1, 2], [0], [0]>} : vector<2x8x32xf32>, vector<2x32x32xf32>, vector<2x8x32xf32> -> vector<2x8x32xf32>
    "tpu.trace_stop"() : () -> ()
    %c1_19 = arith.constant 1 : index
    %c0_20 = arith.constant 0 : index
    %c0_21 = arith.constant 0 : index
    %22 = vector.load %arg3[%c1_19, %c0_20, %c0_21] : memref<6x1x32xf32, #tpu.memory_space<vmem>>, vector<1x1x32xf32>
    %23 = vector.shape_cast %22 : vector<1x1x32xf32> to vector<1x32xf32>
    %24 = vector.shape_cast %23 : vector<1x32xf32> to vector<1x1x32xf32>
    %25 = vector.broadcast %24 : vector<1x1x32xf32> to vector<2x8x32xf32>
    %26 = arith.addf %21, %25 : vector<2x8x32xf32>
    %c2 = arith.constant 2 : index
    %c0_22 = arith.constant 0 : index
    %c0_23 = arith.constant 0 : index
    %27 = vector.load %arg2[%c2, %c0_22, %c0_23] : memref<6x32x32xf32, #tpu.memory_space<vmem>>, vector<1x32x32xf32>
    %28 = vector.shape_cast %27 : vector<1x32x32xf32> to vector<32x32xf32>
    %29 = vector.shape_cast %28 : vector<32x32xf32> to vector<1x32x32xf32>
    %30 = vector.broadcast %29 : vector<1x32x32xf32> to vector<2x32x32xf32>
    "tpu.trace_start"() <{level = 10 : i32, message = "btd,bdh->bth"}> : () -> ()
    %cst_24 = arith.constant dense<0.000000e+00> : vector<2x8x32xf32>
    %31 = tpu.matmul %6, %30, %cst_24 {dimension_numbers = #tpu.dot_dimension_numbers<[2], [1], [1], [2], [0, 0, 0, 1, 1, 2], [0], [0]>} : vector<2x8x32xf32>, vector<2x32x32xf32>, vector<2x8x32xf32> -> vector<2x8x32xf32>
    "tpu.trace_stop"() : () -> ()
    %c2_25 = arith.constant 2 : index
    %c0_26 = arith.constant 0 : index
    %c0_27 = arith.constant 0 : index
    %32 = vector.load %arg3[%c2_25, %c0_26, %c0_27] : memref<6x1x32xf32, #tpu.memory_space<vmem>>, vector<1x1x32xf32>
    %33 = vector.shape_cast %32 : vector<1x1x32xf32> to vector<1x32xf32>
    %34 = vector.shape_cast %33 : vector<1x32xf32> to vector<1x1x32xf32>
    %35 = vector.broadcast %34 : vector<1x1x32xf32> to vector<2x8x32xf32>
    %36 = arith.addf %31, %35 : vector<2x8x32xf32>
    %c3 = arith.constant 3 : index
    %c0_28 = arith.constant 0 : index
    %c0_29 = arith.constant 0 : index
    %37 = vector.load %arg2[%c3, %c0_28, %c0_29] : memref<6x32x32xf32, #tpu.memory_space<vmem>>, vector<1x32x32xf32>
    %38 = vector.shape_cast %37 : vector<1x32x32xf32> to vector<32x32xf32>
    %39 = vector.shape_cast %38 : vector<32x32xf32> to vector<1x32x32xf32>
    %40 = vector.broadcast %39 : vector<1x32x32xf32> to vector<2x32x32xf32>
    "tpu.trace_start"() <{level = 10 : i32, message = "btd,bdh->bth"}> : () -> ()
    %cst_30 = arith.constant dense<0.000000e+00> : vector<2x8x32xf32>
    %41 = tpu.matmul %6, %40, %cst_30 {dimension_numbers = #tpu.dot_dimension_numbers<[2], [1], [1], [2], [0, 0, 0, 1, 1, 2], [0], [0]>} : vector<2x8x32xf32>, vector<2x32x32xf32>, vector<2x8x32xf32> -> vector<2x8x32xf32>
    "tpu.trace_stop"() : () -> ()
    %c3_31 = arith.constant 3 : index
    %c0_32 = arith.constant 0 : index
    %c0_33 = arith.constant 0 : index
    %42 = vector.load %arg3[%c3_31, %c0_32, %c0_33] : memref<6x1x32xf32, #tpu.memory_space<vmem>>, vector<1x1x32xf32>
    %43 = vector.shape_cast %42 : vector<1x1x32xf32> to vector<1x32xf32>
    %44 = vector.shape_cast %43 : vector<1x32xf32> to vector<1x1x32xf32>
    %45 = vector.broadcast %44 : vector<1x1x32xf32> to vector<2x8x32xf32>
    %46 = arith.addf %41, %45 : vector<2x8x32xf32>
    %c4 = arith.constant 4 : index
    %c0_34 = arith.constant 0 : index
    %c0_35 = arith.constant 0 : index
    %47 = vector.load %arg2[%c4, %c0_34, %c0_35] : memref<6x32x32xf32, #tpu.memory_space<vmem>>, vector<1x32x32xf32>
    %48 = vector.shape_cast %47 : vector<1x32x32xf32> to vector<32x32xf32>
    %49 = vector.shape_cast %48 : vector<32x32xf32> to vector<1x32x32xf32>
    %50 = vector.broadcast %49 : vector<1x32x32xf32> to vector<2x32x32xf32>
    "tpu.trace_start"() <{level = 10 : i32, message = "btd,bdh->bth"}> : () -> ()
    %cst_36 = arith.constant dense<0.000000e+00> : vector<2x8x32xf32>
    %51 = tpu.matmul %6, %50, %cst_36 {dimension_numbers = #tpu.dot_dimension_numbers<[2], [1], [1], [2], [0, 0, 0, 1, 1, 2], [0], [0]>} : vector<2x8x32xf32>, vector<2x32x32xf32>, vector<2x8x32xf32> -> vector<2x8x32xf32>
    "tpu.trace_stop"() : () -> ()
    %c4_37 = arith.constant 4 : index
    %c0_38 = arith.constant 0 : index
    %c0_39 = arith.constant 0 : index
    %52 = vector.load %arg3[%c4_37, %c0_38, %c0_39] : memref<6x1x32xf32, #tpu.memory_space<vmem>>, vector<1x1x32xf32>
    %53 = vector.shape_cast %52 : vector<1x1x32xf32> to vector<1x32xf32>
    %54 = vector.shape_cast %53 : vector<1x32xf32> to vector<1x1x32xf32>
    %55 = vector.broadcast %54 : vector<1x1x32xf32> to vector<2x8x32xf32>
    %56 = arith.addf %51, %55 : vector<2x8x32xf32>
    %c5 = arith.constant 5 : index
    %c0_40 = arith.constant 0 : index
    %c0_41 = arith.constant 0 : index
    %57 = vector.load %arg2[%c5, %c0_40, %c0_41] : memref<6x32x32xf32, #tpu.memory_space<vmem>>, vector<1x32x32xf32>
    %58 = vector.shape_cast %57 : vector<1x32x32xf32> to vector<32x32xf32>
    %59 = vector.shape_cast %58 : vector<32x32xf32> to vector<1x32x32xf32>
    %60 = vector.broadcast %59 : vector<1x32x32xf32> to vector<2x32x32xf32>
    "tpu.trace_start"() <{level = 10 : i32, message = "btd,bdh->bth"}> : () -> ()
    %cst_42 = arith.constant dense<0.000000e+00> : vector<2x8x32xf32>
    %61 = tpu.matmul %6, %60, %cst_42 {dimension_numbers = #tpu.dot_dimension_numbers<[2], [1], [1], [2], [0, 0, 0, 1, 1, 2], [0], [0]>} : vector<2x8x32xf32>, vector<2x32x32xf32>, vector<2x8x32xf32> -> vector<2x8x32xf32>
    "tpu.trace_stop"() : () -> ()
    %c5_43 = arith.constant 5 : index
    %c0_44 = arith.constant 0 : index
    %c0_45 = arith.constant 0 : index
    %62 = vector.load %arg3[%c5_43, %c0_44, %c0_45] : memref<6x1x32xf32, #tpu.memory_space<vmem>>, vector<1x1x32xf32>
    %63 = vector.shape_cast %62 : vector<1x1x32xf32> to vector<1x32xf32>
    %64 = vector.shape_cast %63 : vector<1x32xf32> to vector<1x1x32xf32>
    %65 = vector.broadcast %64 : vector<1x1x32xf32> to vector<2x8x32xf32>
    %66 = arith.addf %61, %65 : vector<2x8x32xf32>
    %67 = arith.negf %36 : vector<2x8x32xf32>
    %68 = math.exp %67 : vector<2x8x32xf32>
    %cst_46 = arith.constant 1.000000e+00 : f32
    %69 = vector.broadcast %cst_46 : f32 to vector<2x8x32xf32>
    %70 = arith.addf %69, %68 : vector<2x8x32xf32>
    %71 = arith.divf %69, %70 : vector<2x8x32xf32>
    %cst_47 = arith.constant 0.000000e+00 : f32
    %72 = vector.broadcast %cst_47 : f32 to vector<2x8x32xf32>
    %73 = arith.minimumf %26, %72 : vector<2x8x32xf32>
    %74 = math.absf %26 : vector<2x8x32xf32>
    %cst_48 = arith.constant 0.000000e+00 : f32
    %75 = vector.broadcast %cst_48 : f32 to vector<2x8x32xf32>
    %76 = arith.subf %75, %74 : vector<2x8x32xf32>
    %77 = math.exp %76 : vector<2x8x32xf32>
    %cst_49 = arith.constant 1.000000e+00 : f32
    %78 = vector.broadcast %cst_49 : f32 to vector<2x8x32xf32>
    %79 = arith.addf %78, %77 : vector<2x8x32xf32>
    %80 = math.log %79 : vector<2x8x32xf32>
    %81 = arith.subf %73, %80 : vector<2x8x32xf32>
    %82 = tpu.iota {dimensions = array<i32: 0>} : vector<8x8xi32>
    %83 = tpu.iota {dimensions = array<i32: 1>} : vector<8x8xi32>
    %84 = arith.cmpi sle, %83, %82 : vector<8x8xi32>
    %85 = arith.extui %84 : vector<8x8xi1> to vector<8x8xi32>
    %86 = arith.sitofp %85 : vector<8x8xi32> to vector<8x8xf32>
    %87 = vector.shape_cast %86 : vector<8x8xf32> to vector<1x8x8xf32>
    %88 = vector.broadcast %87 : vector<1x8x8xf32> to vector<2x8x8xf32>
    "tpu.trace_start"() <{level = 10 : i32, message = "bts,bsh->bth"}> : () -> ()
    %cst_50 = arith.constant dense<0.000000e+00> : vector<2x8x32xf32>
    %89 = tpu.matmul %88, %81, %cst_50 {dimension_numbers = #tpu.dot_dimension_numbers<[2], [1], [1], [2], [0, 0, 0, 1, 1, 2], [0], [0]>} : vector<2x8x8xf32>, vector<2x8x32xf32>, vector<2x8x32xf32> -> vector<2x8x32xf32>
    "tpu.trace_stop"() : () -> ()
    %90 = arith.subf %16, %89 : vector<2x8x32xf32>
    %91 = vector.extract_strided_slice %90 {offsets = [0, 0, 0], sizes = [2, 1, 32], strides = [1, 1, 1]} : vector<2x8x32xf32> to vector<2x1x32xf32>
    %92 = vector.shape_cast %91 : vector<2x1x32xf32> to vector<2x32xf32>
    %93 = arith.maximumf %5, %92 : vector<2x32xf32>
    %c0_51 = arith.constant 0 : index
    %c0_52 = arith.constant 0 : index
    %c0_53 = arith.constant 0 : index
    %94 = vector.load %arg8[%c0_51, %c0_52, %c0_53] : memref<2x8x32xf32, #tpu.memory_space<vmem>>, vector<2x1x32xf32>
    %95 = vector.shape_cast %94 : vector<2x1x32xf32> to vector<2x32xf32>
    %96 = vector.shape_cast %93 : vector<2x32xf32> to vector<2x1x32xf32>
    tpu.vector_store %arg8[%c0_51, %c0_52, %c0_53], %96 {strides = array<i32>} : memref<2x8x32xf32, #tpu.memory_space<vmem>>, vector<2x1x32xf32>,
    %97 = vector.extract_strided_slice %90 {offsets = [0, 1, 0], sizes = [2, 1, 32], strides = [1, 1, 1]} : vector<2x8x32xf32> to vector<2x1x32xf32>
    %98 = vector.shape_cast %97 : vector<2x1x32xf32> to vector<2x32xf32>
    %99 = arith.maximumf %93, %98 : vector<2x32xf32>
    %c0_54 = arith.constant 0 : index
    %c1_55 = arith.constant 1 : index
    %c0_56 = arith.constant 0 : index
    %100 = vector.load %arg8[%c0_54, %c1_55, %c0_56] : memref<2x8x32xf32, #tpu.memory_space<vmem>>, vector<2x1x32xf32>
    %101 = vector.shape_cast %100 : vector<2x1x32xf32> to vector<2x32xf32>
    %102 = vector.shape_cast %99 : vector<2x32xf32> to vector<2x1x32xf32>
    tpu.vector_store %arg8[%c0_54, %c1_55, %c0_56], %102 {strides = array<i32>} : memref<2x8x32xf32, #tpu.memory_space<vmem>>, vector<2x1x32xf32>,
    %103 = vector.extract_strided_slice %90 {offsets = [0, 2, 0], sizes = [2, 1, 32], strides = [1, 1, 1]} : vector<2x8x32xf32> to vector<2x1x32xf32>
    %104 = vector.shape_cast %103 : vector<2x1x32xf32> to vector<2x32xf32>
    %105 = arith.maximumf %99, %104 : vector<2x32xf32>
    %c0_57 = arith.constant 0 : index
    %c2_58 = arith.constant 2 : index
    %c0_59 = arith.constant 0 : index
    %106 = vector.load %arg8[%c0_57, %c2_58, %c0_59] : memref<2x8x32xf32, #tpu.memory_space<vmem>>, vector<2x1x32xf32>
    %107 = vector.shape_cast %106 : vector<2x1x32xf32> to vector<2x32xf32>
    %108 = vector.shape_cast %105 : vector<2x32xf32> to vector<2x1x32xf32>
    tpu.vector_store %arg8[%c0_57, %c2_58, %c0_59], %108 {strides = array<i32>} : memref<2x8x32xf32, #tpu.memory_space<vmem>>, vector<2x1x32xf32>,
    %109 = vector.extract_strided_slice %90 {offsets = [0, 3, 0], sizes = [2, 1, 32], strides = [1, 1, 1]} : vector<2x8x32xf32> to vector<2x1x32xf32>
    %110 = vector.shape_cast %109 : vector<2x1x32xf32> to vector<2x32xf32>
    %111 = arith.maximumf %105, %110 : vector<2x32xf32>
    %c0_60 = arith.constant 0 : index
    %c3_61 = arith.constant 3 : index
    %c0_62 = arith.constant 0 : index
    %112 = vector.load %arg8[%c0_60, %c3_61, %c0_62] : memref<2x8x32xf32, #tpu.memory_space<vmem>>, vector<2x1x32xf32>
    %113 = vector.shape_cast %112 : vector<2x1x32xf32> to vector<2x32xf32>
    %114 = vector.shape_cast %111 : vector<2x32xf32> to vector<2x1x32xf32>
    tpu.vector_store %arg8[%c0_60, %c3_61, %c0_62], %114 {strides = array<i32>} : memref<2x8x32xf32, #tpu.memory_space<vmem>>, vector<2x1x32xf32>,
    %115 = vector.extract_strided_slice %90 {offsets = [0, 4, 0], sizes = [2, 1, 32], strides = [1, 1, 1]} : vector<2x8x32xf32> to vector<2x1x32xf32>
    %116 = vector.shape_cast %115 : vector<2x1x32xf32> to vector<2x32xf32>
    %117 = arith.maximumf %111, %116 : vector<2x32xf32>
    %c0_63 = arith.constant 0 : index
    %c4_64 = arith.constant 4 : index
    %c0_65 = arith.constant 0 : index
    %118 = vector.load %arg8[%c0_63, %c4_64, %c0_65] : memref<2x8x32xf32, #tpu.memory_space<vmem>>, vector<2x1x32xf32>
    %119 = vector.shape_cast %118 : vector<2x1x32xf32> to vector<2x32xf32>
    %120 = vector.shape_cast %117 : vector<2x32xf32> to vector<2x1x32xf32>
    tpu.vector_store %arg8[%c0_63, %c4_64, %c0_65], %120 {strides = array<i32>} : memref<2x8x32xf32, #tpu.memory_space<vmem>>, vector<2x1x32xf32>,
    %121 = vector.extract_strided_slice %90 {offsets = [0, 5, 0], sizes = [2, 1, 32], strides = [1, 1, 1]} : vector<2x8x32xf32> to vector<2x1x32xf32>
    %122 = vector.shape_cast %121 : vector<2x1x32xf32> to vector<2x32xf32>
    %123 = arith.maximumf %117, %122 : vector<2x32xf32>
    %c0_66 = arith.constant 0 : index
    %c5_67 = arith.constant 5 : index
    %c0_68 = arith.constant 0 : index
    %124 = vector.load %arg8[%c0_66, %c5_67, %c0_68] : memref<2x8x32xf32, #tpu.memory_space<vmem>>, vector<2x1x32xf32>
    %125 = vector.shape_cast %124 : vector<2x1x32xf32> to vector<2x32xf32>
    %126 = vector.shape_cast %123 : vector<2x32xf32> to vector<2x1x32xf32>
    tpu.vector_store %arg8[%c0_66, %c5_67, %c0_68], %126 {strides = array<i32>} : memref<2x8x32xf32, #tpu.memory_space<vmem>>, vector<2x1x32xf32>,
    %127 = vector.extract_strided_slice %90 {offsets = [0, 6, 0], sizes = [2, 1, 32], strides = [1, 1, 1]} : vector<2x8x32xf32> to vector<2x1x32xf32>
    %128 = vector.shape_cast %127 : vector<2x1x32xf32> to vector<2x32xf32>
    %129 = arith.maximumf %123, %128 : vector<2x32xf32>
    %c0_69 = arith.constant 0 : index
    %c6 = arith.constant 6 : index
    %c0_70 = arith.constant 0 : index
    %130 = vector.load %arg8[%c0_69, %c6, %c0_70] : memref<2x8x32xf32, #tpu.memory_space<vmem>>, vector<2x1x32xf32>
    %131 = vector.shape_cast %130 : vector<2x1x32xf32> to vector<2x32xf32>
    %132 = vector.shape_cast %129 : vector<2x32xf32> to vector<2x1x32xf32>
    tpu.vector_store %arg8[%c0_69, %c6, %c0_70], %132 {strides = array<i32>} : memref<2x8x32xf32, #tpu.memory_space<vmem>>, vector<2x1x32xf32>,
    %133 = vector.extract_strided_slice %90 {offsets = [0, 7, 0], sizes = [2, 1, 32], strides = [1, 1, 1]} : vector<2x8x32xf32> to vector<2x1x32xf32>
    %134 = vector.shape_cast %133 : vector<2x1x32xf32> to vector<2x32xf32>
    %135 = arith.maximumf %129, %134 : vector<2x32xf32>
    %c0_71 = arith.constant 0 : index
    %c7 = arith.constant 7 : index
    %c0_72 = arith.constant 0 : index
    %136 = vector.load %arg8[%c0_71, %c7, %c0_72] : memref<2x8x32xf32, #tpu.memory_space<vmem>>, vector<2x1x32xf32>
    %137 = vector.shape_cast %136 : vector<2x1x32xf32> to vector<2x32xf32>
    %138 = vector.shape_cast %135 : vector<2x32xf32> to vector<2x1x32xf32>
    tpu.vector_store %arg8[%c0_71, %c7, %c0_72], %138 {strides = array<i32>} : memref<2x8x32xf32, #tpu.memory_space<vmem>>, vector<2x1x32xf32>,
    %c0_73 = arith.constant 0 : index
    %c0_74 = arith.constant 0 : index
    %c0_75 = arith.constant 0 : index
    %139 = vector.load %arg8[%c0_73, %c0_74, %c0_75] : memref<2x8x32xf32, #tpu.memory_space<vmem>>, vector<2x8x32xf32>
    %140 = math.exp %89 : vector<2x8x32xf32>
    %141 = arith.subf %90, %139 : vector<2x8x32xf32>
    %142 = arith.subf %141, %89 : vector<2x8x32xf32>
    %143 = math.exp %142 : vector<2x8x32xf32>
    %144 = arith.mulf %143, %56 : vector<2x8x32xf32>
    %145 = arith.mulf %143, %66 : vector<2x8x32xf32>
    "tpu.trace_start"() <{level = 10 : i32, message = "bth,bsh->bts"}> : () -> ()
    %cst_76 = arith.constant dense<0.000000e+00> : vector<2x8x8xf32>
    %146 = tpu.matmul %46, %56, %cst_76 {dimension_numbers = #tpu.dot_dimension_numbers<[2], [2], [1], [1], [0, 0, 0, 1, 1, 1], [0], [0]>} : vector<2x8x32xf32>, vector<2x8x32xf32>, vector<2x8x8xf32> -> vector<2x8x8xf32>
    "tpu.trace_stop"() : () -> ()
    %147 = vector.shape_cast %86 : vector<8x8xf32> to vector<1x8x8xf32>
    %148 = vector.broadcast %147 : vector<1x8x8xf32> to vector<2x8x8xf32>
    %149 = arith.mulf %146, %148 : vector<2x8x8xf32>
    "tpu.trace_start"() <{level = 10 : i32, message = "bts,bsh->bth"}> : () -> ()
    %cst_77 = arith.constant dense<0.000000e+00> : vector<2x8x32xf32>
    %150 = tpu.matmul %149, %145, %cst_77 {dimension_numbers = #tpu.dot_dimension_numbers<[2], [1], [1], [2], [0, 0, 0, 1, 1, 2], [0], [0]>} : vector<2x8x8xf32>, vector<2x8x32xf32>, vector<2x8x32xf32> -> vector<2x8x32xf32>
    "tpu.trace_stop"() : () -> ()
    "tpu.trace_start"() <{level = 10 : i32, message = "btj,bij->bti"}> : () -> ()
    %cst_78 = arith.constant dense<0.000000e+00> : vector<2x8x32xf32>
    %151 = tpu.matmul %46, %3, %cst_78 {dimension_numbers = #tpu.dot_dimension_numbers<[2], [2], [1], [1], [0, 0, 0, 1, 1, 1], [0], [0]>} : vector<2x8x32xf32>, vector<2x32x32xf32>, vector<2x8x32xf32> -> vector<2x8x32xf32>
    "tpu.trace_stop"() : () -> ()
    %152 = arith.addf %151, %150 : vector<2x8x32xf32>
    %153 = arith.mulf %140, %152 : vector<2x8x32xf32>
    "tpu.trace_start"() <{level = 10 : i32, message = "bts,bsh->bth"}> : () -> ()
    %cst_79 = arith.constant dense<0.000000e+00> : vector<2x8x32xf32>
    %154 = tpu.matmul %88, %144, %cst_79 {dimension_numbers = #tpu.dot_dimension_numbers<[2], [1], [1], [2], [0, 0, 0, 1, 1, 2], [0], [0]>} : vector<2x8x8xf32>, vector<2x8x32xf32>, vector<2x8x32xf32> -> vector<2x8x32xf32>
    "tpu.trace_stop"() : () -> ()
    %155 = vector.shape_cast %4 : vector<2x32xf32> to vector<2x1x32xf32>
    %156 = vector.broadcast %155 : vector<2x1x32xf32> to vector<2x8x32xf32>
    %157 = arith.addf %156, %154 : vector<2x8x32xf32>
    %158 = arith.mulf %140, %157 : vector<2x8x32xf32>
    %159 = arith.mulf %158, %46 : vector<2x8x32xf32>
    %cst_80 = arith.constant dense<0.000000e+00> : vector<2x8xf32>
    %160 = vector.multi_reduction <add>, %159, %cst_80 [2] : vector<2x8x32xf32> to vector<2x8xf32>
    %161 = vector.shape_cast %160 : vector<2x8xf32> to vector<2x8x1xf32>
    %162 = math.absf %161 : vector<2x8x1xf32>
    %cst_81 = arith.constant 1.000000e+00 : f32
    %163 = vector.broadcast %cst_81 : f32 to vector<2x8x1xf32>
    %164 = arith.maximumf %162, %163 : vector<2x8x1xf32>
    %165 = arith.mulf %71, %153 : vector<2x8x32xf32>
    %166 = vector.broadcast %164 : vector<2x8x1xf32> to vector<2x8x32xf32>
    %167 = arith.divf %165, %166 : vector<2x8x32xf32>
    %c0_82 = arith.constant 0 : index
    %c0_83 = arith.constant 0 : index
    %c0_84 = arith.constant 0 : index
    %168 = vector.load %arg4[%c0_82, %c0_83, %c0_84] : memref<2x8x32xf32, #tpu.memory_space<vmem>>, vector<2x8x32xf32>
    tpu.vector_store %arg4[%c0_82, %c0_83, %c0_84], %167 {strides = array<i32>} : memref<2x8x32xf32, #tpu.memory_space<vmem>>, vector<2x8x32xf32>,
    %169 = tpu.transpose %145, [0, 2, 1] : vector<2x8x32xf32> -> vector<2x32x8xf32>
    "tpu.trace_start"() <{level = 10 : i32, message = "bht,btj->bhj"}> : () -> ()
    %cst_85 = arith.constant dense<0.000000e+00> : vector<2x32x32xf32>
    %170 = tpu.matmul %169, %56, %cst_85 {dimension_numbers = #tpu.dot_dimension_numbers<[2], [1], [1], [2], [0, 0, 0, 1, 1, 2], [0], [0]>} : vector<2x32x8xf32>, vector<2x8x32xf32>, vector<2x32x32xf32> -> vector<2x32x32xf32>
    "tpu.trace_stop"() : () -> ()
    %171 = vector.extract_strided_slice %140 {offsets = [0, 7, 0], sizes = [2, 1, 32], strides = [1, 1, 1]} : vector<2x8x32xf32> to vector<2x1x32xf32>
    %172 = vector.shape_cast %171 : vector<2x1x32xf32> to vector<2x32xf32>
    %173 = vector.shape_cast %172 : vector<2x32xf32> to vector<2x32x1xf32>
    %174 = arith.addf %3, %170 : vector<2x32x32xf32>
    %175 = vector.broadcast %173 : vector<2x32x1xf32> to vector<2x32x32xf32>
    %176 = arith.mulf %175, %174 : vector<2x32x32xf32>
    %c0_86 = arith.constant 0 : index
    %c0_87 = arith.constant 0 : index
    %c0_88 = arith.constant 0 : index
    %177 = vector.load %arg5[%c0_86, %c0_87, %c0_88] : memref<2x32x32xf32, #tpu.memory_space<vmem>>, vector<2x32x32xf32>
    tpu.vector_store %arg5[%c0_86, %c0_87, %c0_88], %176 {strides = array<i32>} : memref<2x32x32xf32, #tpu.memory_space<vmem>>, vector<2x32x32xf32>,
    %178 = vector.extract_strided_slice %158 {offsets = [0, 7, 0], sizes = [2, 1, 32], strides = [1, 1, 1]} : vector<2x8x32xf32> to vector<2x1x32xf32>
    %179 = vector.shape_cast %178 : vector<2x1x32xf32> to vector<2x32xf32>
    %c0_89 = arith.constant 0 : index
    %c0_90 = arith.constant 0 : index
    %180 = vector.load %arg6[%c0_89, %c0_90] : memref<2x32xf32, #tpu.memory_space<vmem>>, vector<2x32xf32>
    tpu.vector_store %arg6[%c0_89, %c0_90], %179 {strides = array<i32>} : memref<2x32xf32, #tpu.memory_space<vmem>>, vector<2x32xf32>,
    %181 = vector.extract_strided_slice %89 {offsets = [0, 7, 0], sizes = [2, 1, 32], strides = [1, 1, 1]} : vector<2x8x32xf32> to vector<2x1x32xf32>
    %182 = vector.shape_cast %181 : vector<2x1x32xf32> to vector<2x32xf32>
    %183 = arith.addf %182, %135 : vector<2x32xf32>
    %c0_91 = arith.constant 0 : index
    %c0_92 = arith.constant 0 : index
    %184 = vector.load %arg7[%c0_91, %c0_92] : memref<2x32xf32, #tpu.memory_space<vmem>>, vector<2x32xf32>
    tpu.vector_store %arg7[%c0_91, %c0_92], %183 {strides = array<i32>} : memref<2x32xf32, #tpu.memory_space<vmem>>, vector<2x32xf32>,
    return
  }
  func.func @transform_0(%arg0: i32) -> (i32, i32, i32) {
    %c0_i32 = arith.constant 0 : i32
    %c0_i32_0 = arith.constant 0 : i32
    %c0_i32_1 = arith.constant 0 : i32
    return %c0_i32, %arg0, %c0_i32_0 : i32, i32, i32
  }
  func.func @transform_1(%arg0: i32) -> (i32, i32, i32) {
    %c0_i32 = arith.constant 0 : i32
    %c0_i32_0 = arith.constant 0 : i32
    %c0_i32_1 = arith.constant 0 : i32
    %c0_i32_2 = arith.constant 0 : i32
    return %c0_i32, %c0_i32_0, %c0_i32_1 : i32, i32, i32
  }
  func.func @transform_2(%arg0: i32) -> (i32, i32, i32) {
    %c0_i32 = arith.constant 0 : i32
    %c0_i32_0 = arith.constant 0 : i32
    %c0_i32_1 = arith.constant 0 : i32
    %c0_i32_2 = arith.constant 0 : i32
    return %c0_i32, %c0_i32_0, %c0_i32_1 : i32, i32, i32
  }
  func.func @transform_3(%arg0: i32) -> (i32, i32, i32) {
    %c0_i32 = arith.constant 0 : i32
    %c0_i32_0 = arith.constant 0 : i32
    %c0_i32_1 = arith.constant 0 : i32
    return %c0_i32, %arg0, %c0_i32_0 : i32, i32, i32
  }
  func.func @transform_4(%arg0: i32) -> (i32, i32, i32) {
    %c0_i32 = arith.constant 0 : i32
    %c0_i32_0 = arith.constant 0 : i32
    %c0_i32_1 = arith.constant 0 : i32
    %c0_i32_2 = arith.constant 0 : i32
    return %c0_i32, %c0_i32_0, %c0_i32_1 : i32, i32, i32
  }
  func.func @transform_5(%arg0: i32) -> (i32, i32) {
    %c0_i32 = arith.constant 0 : i32
    %c0_i32_0 = arith.constant 0 : i32
    %c0_i32_1 = arith.constant 0 : i32
    return %c0_i32, %c0_i32_0 : i32, i32
  }
  func.func @transform_6(%arg0: i32) -> (i32, i32) {
    %c0_i32 = arith.constant 0 : i32
    %c0_i32_0 = arith.constant 0 : i32
    %c0_i32_1 = arith.constant 0 : i32
    return %c0_i32, %c0_i32_0 : i32, i32
  }
}

</mosaic_0001>

<llo_original>
// kernel: mlstm_forward.3
$region0: #{mlstm_forward.3}
  #allocation0 [shape = 'u32[]', space=smem, size = 0x4, offset = 0x4, fixed_abs, tag = 'smem constant byte address 0x4 - core index']
  #allocation1 [shape = 'u32[72,128]{1,0:T(1,128)}', space=vmem, size = 0x9000, scoped, tag = 'internal scratch']
  #allocation2 [shape = 'f32[2,8,32]{2,1,0:T(8,128)}', space=vmem, size = 0x2000, scoped, tag = 'scratch operand']
  %s0 = inlined_call_operand.vmem [shape: f32[2,8,32], index: 0, kind: input, shape index: {}]
  %s1 = inlined_call_operand.vmem [shape: f32[6,32,32], index: 1, kind: input, shape index: {}]
  %s2 = inlined_call_operand.vmem [shape: f32[6,1,32], index: 2, kind: input, shape index: {}]
  %s3 = inlined_call_operand.hbm [shape: f32[2,8,32], index: 3, kind: output, shape index: {0}]
  %s4 = inlined_call_operand.hbm [shape: f32[2,32,32], index: 4, kind: output, shape index: {1}]
  %s5 = inlined_call_operand.hbm [shape: f32[2,32], index: 5, kind: output, shape index: {2}]
  %s6 = inlined_call_operand.hbm [shape: f32[2,32], index: 6, kind: output, shape index: {3}]
  %7 = xla_tuple %s3, %s4, %s5, %s6
  %s8 = sld [smem:[#allocation0]]
  $region50: #{mlstm_forward.3} parent=0
    _
  %s10 = ssub.s32 1, %s8
  %s11 = scalar_select 0, %s10, %s8
  $region1: #{mlstm_forward.3} parent=0
    #allocation3 [shape = 'u8[8192]{0}', space=vmem, size = 0x2000, scoped, tag = 'output window, operand 0, single buffered']
    #allocation4 [shape = 's32[1]{0}', space=sflag, size = 0x4, scoped, tag = 'scoped memory for mlstm_forward.3']
    #allocation5 [shape = 'u8[32768]{0}', space=vmem, size = 0x8000, scoped, tag = 'output window, operand 1, single buffered']
    #allocation6 [shape = 's32[1]{0}', space=sflag, size = 0x4, scoped, tag = 'scoped memory for mlstm_forward.3']
    #allocation7 [shape = 'u8[1024]{0}', space=vmem, size = 0x400, scoped, tag = 'output window, operand 2, single buffered']
    #allocation8 [shape = 'u8[1024]{0}', space=vmem, size = 0x400, scoped, tag = 'output window, operand 3, single buffered']
    #allocation9 [shape = 's32[1]{0}', space=sflag, size = 0x4, scoped, tag = 'scoped memory for mlstm_forward.3']
    %12 = vsyncpa [#allocation4], 0
    %13 = vsyncpa [#allocation6], 0
    %14 = vsyncpa [#allocation9], 0
    // Predicated region
    $region2: #{mlstm_forward.3} parent=1 // pred_check
      _
    $region3: #{mlstm_forward.3} parent=1 // pred_check_branch
      %16 = sbr.rel (0) target = $region5
    $region4: #{mlstm_forward.3} parent=1 // pred_region
      _
    $region5: #{mlstm_forward.3} parent=1 // pred_fallthru
      _
    // Predicated region
    $region6: #{mlstm_forward.3} parent=1 // pred_check
      _
    $region7: #{mlstm_forward.3} parent=1 // pred_check_branch
      %18 = sbr.rel (0) target = $region9
    $region8: #{mlstm_forward.3} parent=1 // pred_region
      _
    $region9: #{mlstm_forward.3} parent=1 // pred_fallthru
      _
    // Predicated region
    $region10: #{mlstm_forward.3} parent=1 // pred_check
      _
    $region11: #{mlstm_forward.3} parent=1 // pred_check_branch
      %20 = sbr.rel (0) target = $region13
    $region12: #{mlstm_forward.3} parent=1 // pred_region
      _
    $region13: #{mlstm_forward.3} parent=1 // pred_fallthru
      _
    %p21 = scmp.eq.s32.totalorder 0, 0
    // Predicated region
    $region14: #{mlstm_forward.3} parent=1 // pred_check
      %p22 = pneg %p21
    $region15: #{mlstm_forward.3} parent=1 // pred_check_branch
      %24 = sbr.rel (%p22) target = $region17
    $region16: #{mlstm_forward.3} parent=1 // pred_region
      %vm25 = vcmask 261120
      %26 = vst.msk [vmem:[#allocation5] sm:$0xff] %vm25, 0.0
      %27 = vst.msk [vmem:[#allocation5 + $0x8] sm:$0xff] %vm25, 0.0
      %28 = vst.msk [vmem:[#allocation5 + $0x10] sm:$0xff] %vm25, 0.0
      %29 = vst.msk [vmem:[#allocation5 + $0x18] sm:$0xff] %vm25, 0.0
      %30 = vst.msk [vmem:[#allocation5 + $0x20] sm:$0xff] %vm25, 0.0
      %31 = vst.msk [vmem:[#allocation5 + $0x28] sm:$0xff] %vm25, 0.0
      %32 = vst.msk [vmem:[#allocation5 + $0x30] sm:$0xff] %vm25, 0.0
      %33 = vst.msk [vmem:[#allocation5 + $0x38] sm:$0xff] %vm25, 0.0
      %vm34 = vcmask 254976
      %35 = vst.msk [vmem:[#allocation7] sm:$0x3] %vm34, 0.0
      %36 = vst.msk [vmem:[#allocation8] sm:$0x3] %vm34, 0.0
    $region17: #{mlstm_forward.3} parent=1 // pred_fallthru
      _
    %v37 = vld [vmem:[#allocation5] sm:$0xff]
    %v38 = vld [vmem:[#allocation5 + $0x8] sm:$0xff]
    %v39 = vld [vmem:[#allocation5 + $0x10] sm:$0xff]
    %v40 = vld [vmem:[#allocation5 + $0x18] sm:$0xff]
    %v41 = vld [vmem:[#allocation5 + $0x20] sm:$0xff]
    %v42 = vld [vmem:[#allocation5 + $0x28] sm:$0xff]
    %v43 = vld [vmem:[#allocation5 + $0x30] sm:$0xff]
    %v44 = vld [vmem:[#allocation5 + $0x38] sm:$0xff]
    %v45 = vld [vmem:[#allocation7] sm:$0x3]
    %v46 = vld [vmem:[#allocation8] sm:$0x3]
    %v47 = vld [vmem:[%s0] sm:$0xff]
    %v48 = vld [vmem:[%s0 + $0x8] sm:$0xff]
    %v49 = vld [vmem:[%s1] sm:$0xff]
    %v50 = vld [vmem:[%s1 + $0x8] sm:$0xff]
    %v51 = vld [vmem:[%s1 + $0x10] sm:$0xff]
    %v52 = vld [vmem:[%s1 + $0x18] sm:$0xff]
    %v53 = vld [vmem:[%s2] sm:$0x1]
    %v55 = vperm.slane %v53, 0
    %vm57 = vcmask 261120
    %v59 = vsel %vm57, %v47, 0
    %61 = vmatpush.msra.mxu0 0.0
    %62 = vmatpush.msra.mxu0 0.0
    %63 = vmatpush.msra.mxu0 0.0
    %64 = vmatpush.msra.mxu0 0.0
    %65 = vmatpush.msra.mxu0 0.0
    %66 = vmatpush.msra.mxu0 0.0
    %67 = vmatpush.msra.mxu0 0.0
    %68 = vmatpush.msra.mxu0 0.0
    %69 = vmatpush.msra.mxu0 0.0
    %70 = vmatpush.msra.mxu0 0.0
    %71 = vmatpush.msra.mxu0 0.0
    %72 = vmatpush.msra.mxu0 0.0
    %73 = vmatpush.msra.mxu0 %v52
    %74 = vmatpush.msra.mxu0 %v51
    %75 = vmatpush.msra.mxu0 %v50
    %76 = vmatpush.msra.mxu0 %v49
    %77 = vmatmul.f32.gmra.mxu0 %v59
    %v78 = vpop.f32.mrf.mxu0
    %v79 = vadd.f32 %v55, %v78
    %80 = vdwg.mxu0
    %v82 = vsel %vm57, %v48, 0
    %84 = vmatpush.msra.mxu0 0.0
    %85 = vmatpush.msra.mxu0 0.0
    %86 = vmatpush.msra.mxu0 0.0
    %87 = vmatpush.msra.mxu0 0.0
    %88 = vmatpush.msra.mxu0 0.0
    %89 = vmatpush.msra.mxu0 0.0
    %90 = vmatpush.msra.mxu0 0.0
    %91 = vmatpush.msra.mxu0 0.0
    %92 = vmatpush.msra.mxu0 0.0
    %93 = vmatpush.msra.mxu0 0.0
    %94 = vmatpush.msra.mxu0 0.0
    %95 = vmatpush.msra.mxu0 0.0
    %96 = vmatpush.msra.mxu0 %v52
    %97 = vmatpush.msra.mxu0 %v51
    %98 = vmatpush.msra.mxu0 %v50
    %99 = vmatpush.msra.mxu0 %v49
    %100 = vmatmul.f32.gmra.mxu0 %v82
    %v101 = vpop.f32.mrf.mxu0
    %v102 = vadd.f32 %v55, %v101
    %103 = vdwg.mxu0
    %s104 = scalar_lea.vmem %s1, 32
    %v105 = vld [vmem:[%s104] sm:$0xff]
    %v106 = vld [vmem:[%s104 + $0x8] sm:$0xff]
    %v107 = vld [vmem:[%s104 + $0x10] sm:$0xff]
    %v108 = vld [vmem:[%s104 + $0x18] sm:$0xff]
    %s109 = scalar_lea.vmem %s2, 1
    %v110 = vld [vmem:[%s109] sm:$0x1]
    %v112 = vperm.slane %v110, 0
    %114 = vmatpush.msra.mxu0 0.0
    %115 = vmatpush.msra.mxu0 0.0
    %116 = vmatpush.msra.mxu0 0.0
    %117 = vmatpush.msra.mxu0 0.0
    %118 = vmatpush.msra.mxu0 0.0
    %119 = vmatpush.msra.mxu0 0.0
    %120 = vmatpush.msra.mxu0 0.0
    %121 = vmatpush.msra.mxu0 0.0
    %122 = vmatpush.msra.mxu0 0.0
    %123 = vmatpush.msra.mxu0 0.0
    %124 = vmatpush.msra.mxu0 0.0
    %125 = vmatpush.msra.mxu0 0.0
    %126 = vmatpush.msra.mxu0 %v108
    %127 = vmatpush.msra.mxu0 %v107
    %128 = vmatpush.msra.mxu0 %v106
    %129 = vmatpush.msra.mxu0 %v105
    %130 = vmatmul.f32.gmra.mxu0 %v59
    %v131 = vpop.f32.mrf.mxu0
    %v132 = vadd.f32 %v112, %v131
    %133 = vdwg.mxu0
    %134 = vmatpush.msra.mxu0 0.0
    %135 = vmatpush.msra.mxu0 0.0
    %136 = vmatpush.msra.mxu0 0.0
    %137 = vmatpush.msra.mxu0 0.0
    %138 = vmatpush.msra.mxu0 0.0
    %139 = vmatpush.msra.mxu0 0.0
    %140 = vmatpush.msra.mxu0 0.0
    %141 = vmatpush.msra.mxu0 0.0
    %142 = vmatpush.msra.mxu0 0.0
    %143 = vmatpush.msra.mxu0 0.0
    %144 = vmatpush.msra.mxu0 0.0
    %145 = vmatpush.msra.mxu0 0.0
    %146 = vmatpush.msra.mxu0 %v108
    %147 = vmatpush.msra.mxu0 %v107
    %148 = vmatpush.msra.mxu0 %v106
    %149 = vmatpush.msra.mxu0 %v105
    %150 = vmatmul.f32.gmra.mxu0 %v82
    %v151 = vpop.f32.mrf.mxu0
    %v152 = vadd.f32 %v112, %v151
    %153 = vdwg.mxu0
    %s154 = scalar_lea.vmem %s1, 64
    %v155 = vld [vmem:[%s154] sm:$0xff]
    %v156 = vld [vmem:[%s154 + $0x8] sm:$0xff]
    %v157 = vld [vmem:[%s154 + $0x10] sm:$0xff]
    %v158 = vld [vmem:[%s154 + $0x18] sm:$0xff]
    %s159 = scalar_lea.vmem %s2, 2
    %v160 = vld [vmem:[%s159] sm:$0x1]
    %v162 = vperm.slane %v160, 0
    %164 = vmatpush.msra.mxu0 0.0
    %165 = vmatpush.msra.mxu0 0.0
    %166 = vmatpush.msra.mxu0 0.0
    %167 = vmatpush.msra.mxu0 0.0
    %168 = vmatpush.msra.mxu0 0.0
    %169 = vmatpush.msra.mxu0 0.0
    %170 = vmatpush.msra.mxu0 0.0
    %171 = vmatpush.msra.mxu0 0.0
    %172 = vmatpush.msra.mxu0 0.0
    %173 = vmatpush.msra.mxu0 0.0
    %174 = vmatpush.msra.mxu0 0.0
    %175 = vmatpush.msra.mxu0 0.0
    %176 = vmatpush.msra.mxu0 %v158
    %177 = vmatpush.msra.mxu0 %v157
    %178 = vmatpush.msra.mxu0 %v156
    %179 = vmatpush.msra.mxu0 %v155
    %180 = vmatmul.f32.gmra.mxu0 %v59
    %v181 = vpop.f32.mrf.mxu0
    %v182 = vadd.f32 %v162, %v181
    %183 = vdwg.mxu0
    %184 = vmatpush.msra.mxu0 0.0
    %185 = vmatpush.msra.mxu0 0.0
    %186 = vmatpush.msra.mxu0 0.0
    %187 = vmatpush.msra.mxu0 0.0
    %188 = vmatpush.msra.mxu0 0.0
    %189 = vmatpush.msra.mxu0 0.0
    %190 = vmatpush.msra.mxu0 0.0
    %191 = vmatpush.msra.mxu0 0.0
    %192 = vmatpush.msra.mxu0 0.0
    %193 = vmatpush.msra.mxu0 0.0
    %194 = vmatpush.msra.mxu0 0.0
    %195 = vmatpush.msra.mxu0 0.0
    %196 = vmatpush.msra.mxu0 %v158
    %197 = vmatpush.msra.mxu0 %v157
    %198 = vmatpush.msra.mxu0 %v156
    %199 = vmatpush.msra.mxu0 %v155
    %200 = vmatmul.f32.gmra.mxu0 %v82
    %v201 = vpop.f32.mrf.mxu0
    %v202 = vadd.f32 %v162, %v201
    %203 = vdwg.mxu0
    %s204 = scalar_lea.vmem %s1, 96
    %v205 = vld [vmem:[%s204] sm:$0xff]
    %v206 = vld [vmem:[%s204 + $0x8] sm:$0xff]
    %v207 = vld [vmem:[%s204 + $0x10] sm:$0xff]
    %v208 = vld [vmem:[%s204 + $0x18] sm:$0xff]
    %s209 = scalar_lea.vmem %s2, 3
    %v210 = vld [vmem:[%s209] sm:$0x1]
    %v212 = vperm.slane %v210, 0
    %214 = vmatpush.msra.mxu0 0.0
    %215 = vmatpush.msra.mxu0 0.0
    %216 = vmatpush.msra.mxu0 0.0
    %217 = vmatpush.msra.mxu0 0.0
    %218 = vmatpush.msra.mxu0 0.0
    %219 = vmatpush.msra.mxu0 0.0
    %220 = vmatpush.msra.mxu0 0.0
    %221 = vmatpush.msra.mxu0 0.0
    %222 = vmatpush.msra.mxu0 0.0
    %223 = vmatpush.msra.mxu0 0.0
    %224 = vmatpush.msra.mxu0 0.0
    %225 = vmatpush.msra.mxu0 0.0
    %226 = vmatpush.msra.mxu0 %v208
    %227 = vmatpush.msra.mxu0 %v207
    %228 = vmatpush.msra.mxu0 %v206
    %229 = vmatpush.msra.mxu0 %v205
    %230 = vmatmul.f32.gmra.mxu0 %v59
    %v231 = vpop.f32.mrf.mxu0
    %v232 = vadd.f32 %v212, %v231
    %233 = vdwg.mxu0
    %234 = vmatpush.msra.mxu0 0.0
    %235 = vmatpush.msra.mxu0 0.0
    %236 = vmatpush.msra.mxu0 0.0
    %237 = vmatpush.msra.mxu0 0.0
    %238 = vmatpush.msra.mxu0 0.0
    %239 = vmatpush.msra.mxu0 0.0
    %240 = vmatpush.msra.mxu0 0.0
    %241 = vmatpush.msra.mxu0 0.0
    %242 = vmatpush.msra.mxu0 0.0
    %243 = vmatpush.msra.mxu0 0.0
    %244 = vmatpush.msra.mxu0 0.0
    %245 = vmatpush.msra.mxu0 0.0
    %246 = vmatpush.msra.mxu0 %v208
    %247 = vmatpush.msra.mxu0 %v207
    %248 = vmatpush.msra.mxu0 %v206
    %249 = vmatpush.msra.mxu0 %v205
    %250 = vmatmul.f32.gmra.mxu0 %v82
    %v251 = vpop.f32.mrf.mxu0
    %v252 = vadd.f32 %v212, %v251
    %253 = vdwg.mxu0
    %s254 = scalar_lea.vmem %s1, 128
    %v255 = vld [vmem:[%s254] sm:$0xff]
    %v256 = vld [vmem:[%s254 + $0x8] sm:$0xff]
    %v257 = vld [vmem:[%s254 + $0x10] sm:$0xff]
    %v258 = vld [vmem:[%s254 + $0x18] sm:$0xff]
    %s259 = scalar_lea.vmem %s2, 4
    %v260 = vld [vmem:[%s259] sm:$0x1]
    %v262 = vperm.slane %v260, 0
    %264 = vmatpush.msra.mxu0 0.0
    %265 = vmatpush.msra.mxu0 0.0
    %266 = vmatpush.msra.mxu0 0.0
    %267 = vmatpush.msra.mxu0 0.0
    %268 = vmatpush.msra.mxu0 0.0
    %269 = vmatpush.msra.mxu0 0.0
    %270 = vmatpush.msra.mxu0 0.0
    %271 = vmatpush.msra.mxu0 0.0
    %272 = vmatpush.msra.mxu0 0.0
    %273 = vmatpush.msra.mxu0 0.0
    %274 = vmatpush.msra.mxu0 0.0
    %275 = vmatpush.msra.mxu0 0.0
    %276 = vmatpush.msra.mxu0 %v258
    %277 = vmatpush.msra.mxu0 %v257
    %278 = vmatpush.msra.mxu0 %v256
    %279 = vmatpush.msra.mxu0 %v255
    %280 = vmatmul.f32.gmra.mxu0 %v59
    %v281 = vpop.f32.mrf.mxu0
    %v282 = vadd.f32 %v262, %v281
    %283 = vdwg.mxu0
    %284 = vmatpush.msra.mxu0 0.0
    %285 = vmatpush.msra.mxu0 0.0
    %286 = vmatpush.msra.mxu0 0.0
    %287 = vmatpush.msra.mxu0 0.0
    %288 = vmatpush.msra.mxu0 0.0
    %289 = vmatpush.msra.mxu0 0.0
    %290 = vmatpush.msra.mxu0 0.0
    %291 = vmatpush.msra.mxu0 0.0
    %292 = vmatpush.msra.mxu0 0.0
    %293 = vmatpush.msra.mxu0 0.0
    %294 = vmatpush.msra.mxu0 0.0
    %295 = vmatpush.msra.mxu0 0.0
    %296 = vmatpush.msra.mxu0 %v258
    %297 = vmatpush.msra.mxu0 %v257
    %298 = vmatpush.msra.mxu0 %v256
    %299 = vmatpush.msra.mxu0 %v255
    %300 = vmatmul.f32.gmra.mxu0 %v82
    %v301 = vpop.f32.mrf.mxu0
    %v302 = vadd.f32 %v262, %v301
    %303 = vdwg.mxu0
    %s304 = scalar_lea.vmem %s1, 160
    %v305 = vld [vmem:[%s304] sm:$0xff]
    %v306 = vld [vmem:[%s304 + $0x8] sm:$0xff]
    %v307 = vld [vmem:[%s304 + $0x10] sm:$0xff]
    %v308 = vld [vmem:[%s304 + $0x18] sm:$0xff]
    %s309 = scalar_lea.vmem %s2, 5
    %v310 = vld [vmem:[%s309] sm:$0x1]
    %v312 = vperm.slane %v310, 0
    %314 = vmatpush.msra.mxu0 0.0
    %315 = vmatpush.msra.mxu0 0.0
    %316 = vmatpush.msra.mxu0 0.0
    %317 = vmatpush.msra.mxu0 0.0
    %318 = vmatpush.msra.mxu0 0.0
    %319 = vmatpush.msra.mxu0 0.0
    %320 = vmatpush.msra.mxu0 0.0
    %321 = vmatpush.msra.mxu0 0.0
    %322 = vmatpush.msra.mxu0 0.0
    %323 = vmatpush.msra.mxu0 0.0
    %324 = vmatpush.msra.mxu0 0.0
    %325 = vmatpush.msra.mxu0 0.0
    %326 = vmatpush.msra.mxu0 %v308
    %327 = vmatpush.msra.mxu0 %v307
    %328 = vmatpush.msra.mxu0 %v306
    %329 = vmatpush.msra.mxu0 %v305
    %330 = vmatmul.f32.gmra.mxu0 %v59
    %v331 = vpop.f32.mrf.mxu0
    %v332 = vadd.f32 %v312, %v331
    %333 = vdwg.mxu0
    %334 = vmatpush.msra.mxu0 0.0
    %335 = vmatpush.msra.mxu0 0.0
    %336 = vmatpush.msra.mxu0 0.0
    %337 = vmatpush.msra.mxu0 0.0
    %338 = vmatpush.msra.mxu0 0.0
    %339 = vmatpush.msra.mxu0 0.0
    %340 = vmatpush.msra.mxu0 0.0
    %341 = vmatpush.msra.mxu0 0.0
    %342 = vmatpush.msra.mxu0 0.0
    %343 = vmatpush.msra.mxu0 0.0
    %344 = vmatpush.msra.mxu0 0.0
    %345 = vmatpush.msra.mxu0 0.0
    %346 = vmatpush.msra.mxu0 %v308
    %347 = vmatpush.msra.mxu0 %v307
    %348 = vmatpush.msra.mxu0 %v306
    %349 = vmatpush.msra.mxu0 %v305
    %350 = vmatmul.f32.gmra.mxu0 %v82
    %v351 = vpop.f32.mrf.mxu0
    %v352 = vadd.f32 %v312, %v351
    %353 = vdwg.mxu0
    %v354 = vxor.u32 %v182, 2147483648
    %v355 = vxor.u32 %v202, 2147483648
    %v356 = vmul.f32 %v354, 1.442695
    %v357 = vpow.pop %v356
    %v358 = vmul.f32 %v355, 1.442695
    %v359 = vpow.pop %v358
    %v360 = vadd.f32 %v357, 1.0
    %v361 = vadd.f32 %v359, 1.0
    %v362 = vrcp.pop %v360
    %v363 = vmul.f32 %v360, %v362
    %v364 = vsub.f32 1.0, %v363
    %v365 = vmul.f32 %v362, %v364
    %v366 = vadd.f32 %v362, %v365
    %vm367 = vweird.f32 %v360
    %vm368 = vweird.f32 %v362
    %vm369 = vmor %vm367, %vm368
    %v370 = vsel %vm369, %v362, %v366
    %v371 = vand.u32 2147483647, %v360
    %vm372 = vcmp.eq.f32.partialorder %v371, 8.507059e+37
    %v373 = vand.u32 %v360, 2147483648
    %v374 = vor.u32 1.1754944e-38, %v373
    %v375 = vsel %vm372, %v374, %v370
    %v376 = vmul.f32 1.0, %v375
    %v377 = vrcp.pop %v361
    %v378 = vmul.f32 %v361, %v377
    %v379 = vsub.f32 1.0, %v378
    %v380 = vmul.f32 %v377, %v379
    %v381 = vadd.f32 %v377, %v380
    %vm382 = vweird.f32 %v361
    %vm383 = vweird.f32 %v377
    %vm384 = vmor %vm382, %vm383
    %v385 = vsel %vm384, %v377, %v381
    %v386 = vand.u32 2147483647, %v361
    %vm387 = vcmp.eq.f32.partialorder %v386, 8.507059e+37
    %v388 = vand.u32 %v361, 2147483648
    %v389 = vor.u32 1.1754944e-38, %v388
    %v390 = vsel %vm387, %v389, %v385
    %v391 = vmul.f32 1.0, %v390
    %v392 = vmin.f32 %v132, 0.0
    %v393 = vmin.f32 %v152, 0.0
    %v394 = vand.u32 2147483647, %v132
    %v395 = vand.u32 2147483647, %v152
    %v396 = vsub.f32 0.0, %v394
    %v397 = vsub.f32 0.0, %v395
    %v398 = vmul.f32 %v396, 1.442695
    %v399 = vpow.pop %v398
    %v400 = vmul.f32 %v397, 1.442695
    %v401 = vpow.pop %v400
    %v402 = vadd.f32 %v399, 1.0
    %v403 = vadd.f32 %v401, 1.0
    %v404 = vlog2.pop %v402
    %v405 = vmul.f32 %v404, 0.6931472
    %v406 = vlog2.pop %v403
    %v407 = vmul.f32 %v406, 0.6931472
    %v408 = vsub.f32 %v392, %v405
    %v409 = vsub.f32 %v393, %v407
    %v410 = vlaneseq
    %v411 = vshrl.u32 %v410, 7
    %v412 = vlaneseq
    %v413 = vand.u32 %v412, 127
    %vm414 = vcmp.le.s32.totalorder %v413, %v411
    %v415 = vsel %vm414, 1, 0
    %v416 = vcvt.s32.f32 %v415
    %vm417 = vcmask 64512
    %v419 = vsel %vm417, %v416, 0
    %421 = vmatpush.msra.mxu0 0.0
    %422 = vmatpush.msra.mxu0 0.0
    %423 = vmatpush.msra.mxu0 0.0
    %424 = vmatpush.msra.mxu0 0.0
    %425 = vmatpush.msra.mxu0 0.0
    %426 = vmatpush.msra.mxu0 0.0
    %427 = vmatpush.msra.mxu0 0.0
    %428 = vmatpush.msra.mxu0 0.0
    %429 = vmatpush.msra.mxu0 0.0
    %430 = vmatpush.msra.mxu0 0.0
    %431 = vmatpush.msra.mxu0 0.0
    %432 = vmatpush.msra.mxu0 0.0
    %433 = vmatpush.msra.mxu0 0.0
    %434 = vmatpush.msra.mxu0 0.0
    %435 = vmatpush.msra.mxu0 0.0
    %436 = vmatpush.msra.mxu0 %v408
    %437 = vmatmul.f32.gmra.mxu0 %v419
    %v438 = vpop.f32.mrf.mxu0
    %v439 = vadd.f32 0.0, %v438
    %440 = vdwg.mxu0
    %441 = vmatpush.msra.mxu0 0.0
    %442 = vmatpush.msra.mxu0 0.0
    %443 = vmatpush.msra.mxu0 0.0
    %444 = vmatpush.msra.mxu0 0.0
    %445 = vmatpush.msra.mxu0 0.0
    %446 = vmatpush.msra.mxu0 0.0
    %447 = vmatpush.msra.mxu0 0.0
    %448 = vmatpush.msra.mxu0 0.0
    %449 = vmatpush.msra.mxu0 0.0
    %450 = vmatpush.msra.mxu0 0.0
    %451 = vmatpush.msra.mxu0 0.0
    %452 = vmatpush.msra.mxu0 0.0
    %453 = vmatpush.msra.mxu0 0.0
    %454 = vmatpush.msra.mxu0 0.0
    %455 = vmatpush.msra.mxu0 0.0
    %456 = vmatpush.msra.mxu0 %v409
    %457 = vmatmul.f32.gmra.mxu0 %v419
    %v458 = vpop.f32.mrf.mxu0
    %v459 = vadd.f32 0.0, %v458
    %460 = vdwg.mxu0
    %v461 = vsub.f32 %v79, %v439
    %v462 = vsub.f32 %v102, %v459
    %v465 = vrot.slane %v462, 7
    %vm466 = vcmask 1041409
    %v467 = vsel %vm466, %v465, %v461
    %v469 = vmax.f32 %v46, %v467
    %v471 = vrot.slane %v469, 1
    %vm473 = vcmask 253952
    %474 = vst.msk [vmem:[#allocation2] sm:$0x1] %vm473, %v469
    %475 = vst.msk [vmem:[#allocation2 + $0x8] sm:$0x1] %vm473, %v471
    %v476 = vrot.slane %v461, 1
    %v477 = vsel %vm466, %v462, %v476
    %v479 = vmax.f32 %v469, %v477
    %v481 = vrot.slane %v479, 1
    %483 = vst.msk [vmem:[#allocation2 + $0x1] sm:$0x1] %vm473, %v479
    %484 = vst.msk [vmem:[#allocation2 + $0x9] sm:$0x1] %vm473, %v481
    %v485 = vrot.slane %v461, 2
    %v486 = vrot.slane %v462, 1
    %v487 = vsel %vm466, %v486, %v485
    %v489 = vmax.f32 %v479, %v487
    %v491 = vrot.slane %v489, 1
    %493 = vst.msk [vmem:[#allocation2 + $0x2] sm:$0x1] %vm473, %v489
    %494 = vst.msk [vmem:[#allocation2 + $0xa] sm:$0x1] %vm473, %v491
    %v495 = vrot.slane %v461, 3
    %v496 = vrot.slane %v462, 2
    %v497 = vsel %vm466, %v496, %v495
    %v499 = vmax.f32 %v489, %v497
    %v501 = vrot.slane %v499, 1
    %503 = vst.msk [vmem:[#allocation2 + $0x3] sm:$0x1] %vm473, %v499
    %504 = vst.msk [vmem:[#allocation2 + $0xb] sm:$0x1] %vm473, %v501
    %v505 = vrot.slane %v461, 4
    %v506 = vrot.slane %v462, 3
    %v507 = vsel %vm466, %v506, %v505
    %v509 = vmax.f32 %v499, %v507
    %v511 = vrot.slane %v509, 1
    %513 = vst.msk [vmem:[#allocation2 + $0x4] sm:$0x1] %vm473, %v509
    %514 = vst.msk [vmem:[#allocation2 + $0xc] sm:$0x1] %vm473, %v511
    %v515 = vrot.slane %v461, 5
    %v516 = vrot.slane %v462, 4
    %v517 = vsel %vm466, %v516, %v515
    %v519 = vmax.f32 %v509, %v517
    %v521 = vrot.slane %v519, 1
    %523 = vst.msk [vmem:[#allocation2 + $0x5] sm:$0x1] %vm473, %v519
    %524 = vst.msk [vmem:[#allocation2 + $0xd] sm:$0x1] %vm473, %v521
    %v525 = vrot.slane %v461, 6
    %v526 = vrot.slane %v462, 5
    %v527 = vsel %vm466, %v526, %v525
    %v529 = vmax.f32 %v519, %v527
    %v531 = vrot.slane %v529, 1
    %533 = vst.msk [vmem:[#allocation2 + $0x6] sm:$0x1] %vm473, %v529
    %534 = vst.msk [vmem:[#allocation2 + $0xe] sm:$0x1] %vm473, %v531
    %v535 = vrot.slane %v461, 7
    %v536 = vrot.slane %v462, 6
    %v537 = vsel %vm466, %v536, %v535
    %v539 = vmax.f32 %v529, %v537
    %v541 = vrot.slane %v539, 1
    %543 = vst.msk [vmem:[#allocation2 + $0x7] sm:$0x1] %vm473, %v539
    %544 = vst.msk [vmem:[#allocation2 + $0xf] sm:$0x1] %vm473, %v541
    %v545 = vld [vmem:[#allocation2] sm:$0xff]
    %v546 = vld [vmem:[#allocation2 + $0x8] sm:$0xff]
    %v547 = vmul.f32 %v439, 1.442695
    %v548 = vpow.pop %v547
    %v549 = vmul.f32 %v459, 1.442695
    %v550 = vpow.pop %v549
    %v551 = vsub.f32 %v461, %v545
    %v552 = vsub.f32 %v462, %v546
    %v553 = vsub.f32 %v551, %v439
    %v554 = vsub.f32 %v552, %v459
    %v555 = vmul.f32 %v553, 1.442695
    %v556 = vpow.pop %v555
    %v557 = vmul.f32 %v554, 1.442695
    %v558 = vpow.pop %v557
    %v559 = vmul.f32 %v556, %v282
    %v560 = vmul.f32 %v558, %v302
    %v561 = vmul.f32 %v556, %v332
    %v562 = vmul.f32 %v558, %v352
    %v564 = vsel %vm57, %v232, 0
    %v567 = vsel %vm57, %v282, 0
    %569 = vmatpush.xpose.msra.mxu0 0.0
    %570 = vmatpush.xpose.msra.mxu0 0.0
    %571 = vmatpush.xpose.msra.mxu0 0.0
    %572 = vmatpush.xpose.msra.mxu0 0.0
    %573 = vmatpush.xpose.msra.mxu0 0.0
    %574 = vmatpush.xpose.msra.mxu0 0.0
    %575 = vmatpush.xpose.msra.mxu0 0.0
    %576 = vmatpush.xpose.msra.mxu0 0.0
    %577 = vmatpush.xpose.msra.mxu0 0.0
    %578 = vmatpush.xpose.msra.mxu0 0.0
    %579 = vmatpush.xpose.msra.mxu0 0.0
    %580 = vmatpush.xpose.msra.mxu0 0.0
    %581 = vmatpush.xpose.msra.mxu0 0.0
    %582 = vmatpush.xpose.msra.mxu0 0.0
    %583 = vmatpush.xpose.msra.mxu0 0.0
    %584 = vmatpush.xpose.msra.mxu0 %v567
    %585 = vmatmul.f32.gmra.mxu0 %v564
    %v586 = vpop.f32.mrf.mxu0
    %v587 = vadd.f32 0.0, %v586
    %588 = vdwg.mxu0
    %v590 = vsel %vm57, %v252, 0
    %v593 = vsel %vm57, %v302, 0
    %595 = vmatpush.xpose.msra.mxu0 0.0
    %596 = vmatpush.xpose.msra.mxu0 0.0
    %597 = vmatpush.xpose.msra.mxu0 0.0
    %598 = vmatpush.xpose.msra.mxu0 0.0
    %599 = vmatpush.xpose.msra.mxu0 0.0
    %600 = vmatpush.xpose.msra.mxu0 0.0
    %601 = vmatpush.xpose.msra.mxu0 0.0
    %602 = vmatpush.xpose.msra.mxu0 0.0
    %603 = vmatpush.xpose.msra.mxu0 0.0
    %604 = vmatpush.xpose.msra.mxu0 0.0
    %605 = vmatpush.xpose.msra.mxu0 0.0
    %606 = vmatpush.xpose.msra.mxu0 0.0
    %607 = vmatpush.xpose.msra.mxu0 0.0
    %608 = vmatpush.xpose.msra.mxu0 0.0
    %609 = vmatpush.xpose.msra.mxu0 0.0
    %610 = vmatpush.xpose.msra.mxu0 %v593
    %611 = vmatmul.f32.gmra.mxu0 %v590
    %v612 = vpop.f32.mrf.mxu0
    %v613 = vadd.f32 0.0, %v612
    %614 = vdwg.mxu0
    %v615 = vmul.f32 %v587, %v416
    %v616 = vmul.f32 %v613, %v416
    %v618 = vsel %vm417, %v615, 0
    %620 = vmatpush.msra.mxu0 0.0
    %621 = vmatpush.msra.mxu0 0.0
    %622 = vmatpush.msra.mxu0 0.0
    %623 = vmatpush.msra.mxu0 0.0
    %624 = vmatpush.msra.mxu0 0.0
    %625 = vmatpush.msra.mxu0 0.0
    %626 = vmatpush.msra.mxu0 0.0
    %627 = vmatpush.msra.mxu0 0.0
    %628 = vmatpush.msra.mxu0 0.0
    %629 = vmatpush.msra.mxu0 0.0
    %630 = vmatpush.msra.mxu0 0.0
    %631 = vmatpush.msra.mxu0 0.0
    %632 = vmatpush.msra.mxu0 0.0
    %633 = vmatpush.msra.mxu0 0.0
    %634 = vmatpush.msra.mxu0 0.0
    %635 = vmatpush.msra.mxu0 %v561
    %636 = vmatmul.f32.gmra.mxu0 %v618
    %v637 = vpop.f32.mrf.mxu0
    %v638 = vadd.f32 0.0, %v637
    %639 = vdwg.mxu0
    %v641 = vsel %vm417, %v616, 0
    %643 = vmatpush.msra.mxu0 0.0
    %644 = vmatpush.msra.mxu0 0.0
    %645 = vmatpush.msra.mxu0 0.0
    %646 = vmatpush.msra.mxu0 0.0
    %647 = vmatpush.msra.mxu0 0.0
    %648 = vmatpush.msra.mxu0 0.0
    %649 = vmatpush.msra.mxu0 0.0
    %650 = vmatpush.msra.mxu0 0.0
    %651 = vmatpush.msra.mxu0 0.0
    %652 = vmatpush.msra.mxu0 0.0
    %653 = vmatpush.msra.mxu0 0.0
    %654 = vmatpush.msra.mxu0 0.0
    %655 = vmatpush.msra.mxu0 0.0
    %656 = vmatpush.msra.mxu0 0.0
    %657 = vmatpush.msra.mxu0 0.0
    %658 = vmatpush.msra.mxu0 %v562
    %659 = vmatmul.f32.gmra.mxu0 %v641
    %v660 = vpop.f32.mrf.mxu0
    %v661 = vadd.f32 0.0, %v660
    %662 = vdwg.mxu0
    %v664 = vsel %vm57, %v37, 0
    %v667 = vsel %vm57, %v38, 0
    %v670 = vsel %vm57, %v39, 0
    %v673 = vsel %vm57, %v40, 0
    %675 = vmatpush.xpose.msra.mxu0 0.0
    %676 = vmatpush.xpose.msra.mxu0 0.0
    %677 = vmatpush.xpose.msra.mxu0 0.0
    %678 = vmatpush.xpose.msra.mxu0 0.0
    %679 = vmatpush.xpose.msra.mxu0 0.0
    %680 = vmatpush.xpose.msra.mxu0 0.0
    %681 = vmatpush.xpose.msra.mxu0 0.0
    %682 = vmatpush.xpose.msra.mxu0 0.0
    %683 = vmatpush.xpose.msra.mxu0 0.0
    %684 = vmatpush.xpose.msra.mxu0 0.0
    %685 = vmatpush.xpose.msra.mxu0 0.0
    %686 = vmatpush.xpose.msra.mxu0 0.0
    %687 = vmatpush.xpose.msra.mxu0 %v673
    %688 = vmatpush.xpose.msra.mxu0 %v670
    %689 = vmatpush.xpose.msra.mxu0 %v667
    %690 = vmatpush.xpose.msra.mxu0 %v664
    %691 = vmatmul.f32.gmra.mxu0 %v564
    %v692 = vpop.f32.mrf.mxu0
    %v693 = vadd.f32 %v638, %v692
    %694 = vdwg.mxu0
    %v696 = vsel %vm57, %v41, 0
    %v699 = vsel %vm57, %v42, 0
    %v702 = vsel %vm57, %v43, 0
    %v705 = vsel %vm57, %v44, 0
    %707 = vmatpush.xpose.msra.mxu0 0.0
    %708 = vmatpush.xpose.msra.mxu0 0.0
    %709 = vmatpush.xpose.msra.mxu0 0.0
    %710 = vmatpush.xpose.msra.mxu0 0.0
    %711 = vmatpush.xpose.msra.mxu0 0.0
    %712 = vmatpush.xpose.msra.mxu0 0.0
    %713 = vmatpush.xpose.msra.mxu0 0.0
    %714 = vmatpush.xpose.msra.mxu0 0.0
    %715 = vmatpush.xpose.msra.mxu0 0.0
    %716 = vmatpush.xpose.msra.mxu0 0.0
    %717 = vmatpush.xpose.msra.mxu0 0.0
    %718 = vmatpush.xpose.msra.mxu0 0.0
    %719 = vmatpush.xpose.msra.mxu0 %v705
    %720 = vmatpush.xpose.msra.mxu0 %v702
    %721 = vmatpush.xpose.msra.mxu0 %v699
    %722 = vmatpush.xpose.msra.mxu0 %v696
    %723 = vmatmul.f32.gmra.mxu0 %v590
    %v724 = vpop.f32.mrf.mxu0
    %v725 = vadd.f32 %v661, %v724
    %726 = vdwg.mxu0
    %v727 = vmul.f32 %v548, %v693
    %v728 = vmul.f32 %v550, %v725
    %729 = vmatpush.msra.mxu0 0.0
    %730 = vmatpush.msra.mxu0 0.0
    %731 = vmatpush.msra.mxu0 0.0
    %732 = vmatpush.msra.mxu0 0.0
    %733 = vmatpush.msra.mxu0 0.0
    %734 = vmatpush.msra.mxu0 0.0
    %735 = vmatpush.msra.mxu0 0.0
    %736 = vmatpush.msra.mxu0 0.0
    %737 = vmatpush.msra.mxu0 0.0
    %738 = vmatpush.msra.mxu0 0.0
    %739 = vmatpush.msra.mxu0 0.0
    %740 = vmatpush.msra.mxu0 0.0
    %741 = vmatpush.msra.mxu0 0.0
    %742 = vmatpush.msra.mxu0 0.0
    %743 = vmatpush.msra.mxu0 0.0
    %744 = vmatpush.msra.mxu0 %v559
    %745 = vmatmul.f32.gmra.mxu0 %v419
    %v746 = vpop.f32.mrf.mxu0
    %v747 = vadd.f32 0.0, %v746
    %748 = vdwg.mxu0
    %749 = vmatpush.msra.mxu0 0.0
    %750 = vmatpush.msra.mxu0 0.0
    %751 = vmatpush.msra.mxu0 0.0
    %752 = vmatpush.msra.mxu0 0.0
    %753 = vmatpush.msra.mxu0 0.0
    %754 = vmatpush.msra.mxu0 0.0
    %755 = vmatpush.msra.mxu0 0.0
    %756 = vmatpush.msra.mxu0 0.0
    %757 = vmatpush.msra.mxu0 0.0
    %758 = vmatpush.msra.mxu0 0.0
    %759 = vmatpush.msra.mxu0 0.0
    %760 = vmatpush.msra.mxu0 0.0
    %761 = vmatpush.msra.mxu0 0.0
    %762 = vmatpush.msra.mxu0 0.0
    %763 = vmatpush.msra.mxu0 0.0
    %764 = vmatpush.msra.mxu0 %v560
    %765 = vmatmul.f32.gmra.mxu0 %v419
    %v766 = vpop.f32.mrf.mxu0
    %v767 = vadd.f32 0.0, %v766
    %768 = vdwg.mxu0
    %v770 = vrot.slane %v45, 1
    %v771 = vperm.slane %v45, 0
    %v772 = vperm.slane %v770, 0
    %v775 = vadd.f32 %v771, %v747
    %v776 = vadd.f32 %v772, %v767
    %v777 = vmul.f32 %v548, %v775
    %v778 = vmul.f32 %v550, %v776
    %v779 = vmul.f32 %v777, %v232
    %v780 = vmul.f32 %v778, %v252
    %v781 = vsel %vm57, %v779, 0.0
    %782 = vadd.xlane.f32.xlu0 %v781
    %v783 = vpop.xlane.xlu0 %782
    %v784 = vsel %vm57, %v780, 0.0
    %785 = vadd.xlane.f32.xlu0 %v784
    %v786 = vpop.xlane.xlu0 %785
    %v787 = vand.u32 2147483647, %v783
    %v788 = vand.u32 2147483647, %v786
    %v789 = vmax.f32 %v787, 1.0
    %v790 = vmax.f32 %v788, 1.0
    %v791 = vmul.f32 %v376, %v727
    %v792 = vmul.f32 %v391, %v728
    %v793 = vrcp.pop %v789
    %v794 = vmul.f32 %v789, %v793
    %v795 = vsub.f32 1.0, %v794
    %v796 = vmul.f32 %v793, %v795
    %v797 = vadd.f32 %v793, %v796
    %vm798 = vweird.f32 %v789
    %vm799 = vweird.f32 %v793
    %vm800 = vmor %vm798, %vm799
    %v801 = vsel %vm800, %v793, %v797
    %v802 = vand.u32 2147483647, %v789
    %vm803 = vcmp.eq.f32.partialorder %v802, 8.507059e+37
    %v804 = vand.u32 %v789, 2147483648
    %v805 = vor.u32 1.1754944e-38, %v804
    %v806 = vsel %vm803, %v805, %v801
    %v807 = vmul.f32 %v791, %v806
    %v808 = vrcp.pop %v790
    %v809 = vmul.f32 %v790, %v808
    %v810 = vsub.f32 1.0, %v809
    %v811 = vmul.f32 %v808, %v810
    %v812 = vadd.f32 %v808, %v811
    %vm813 = vweird.f32 %v790
    %vm814 = vweird.f32 %v808
    %vm815 = vmor %vm813, %vm814
    %v816 = vsel %vm815, %v808, %v812
    %v817 = vand.u32 2147483647, %v790
    %vm818 = vcmp.eq.f32.partialorder %v817, 8.507059e+37
    %v819 = vand.u32 %v790, 2147483648
    %v820 = vor.u32 1.1754944e-38, %v819
    %v821 = vsel %vm818, %v820, %v816
    %v822 = vmul.f32 %v792, %v821
    %823 = vst.msk [vmem:[#allocation3] sm:$0xff] %vm57, %v807
    %824 = vst.msk [vmem:[#allocation3 + $0x8] sm:$0xff] %vm57, %v822
    %825 = vxpose.xlu0.b32.start [1/16] %v561, 128
    %826 = vxpose.xlu0.b32.cont [2/16] 0.0, 128
    %827 = vxpose.xlu0.b32.cont [3/16] 0.0, 128
    %828 = vxpose.xlu0.b32.cont [4/16] 0.0, 128
    %829 = vxpose.xlu0.b32.cont [5/16] 0.0, 128
    %830 = vxpose.xlu0.b32.cont [6/16] 0.0, 128
    %831 = vxpose.xlu0.b32.cont [7/16] 0.0, 128
    %832 = vxpose.xlu0.b32.cont [8/16] 0.0, 128
    %833 = vxpose.xlu0.b32.cont [9/16] 0.0, 128
    %834 = vxpose.xlu0.b32.cont [10/16] 0.0, 128
    %835 = vxpose.xlu0.b32.cont [11/16] 0.0, 128
    %836 = vxpose.xlu0.b32.cont [12/16] 0.0, 128
    %837 = vxpose.xlu0.b32.cont [13/16] 0.0, 128
    %838 = vxpose.xlu0.b32.cont [14/16] 0.0, 128
    %839 = vxpose.xlu0.b32.cont [15/16] 0.0, 128
    %840 = vxpose.xlu0.b32.end [16/16] 0.0, 128
    %v841 = vpop.trf.xlu0
    %v842 = vpop.trf.xlu0
    %v843 = vpop.trf.xlu0
    %v844 = vpop.trf.xlu0
    %v845 = vpop.trf.xlu0
    %v846 = vpop.trf.xlu0
    %v847 = vpop.trf.xlu0
    %v848 = vpop.trf.xlu0
    %v849 = vpop.trf.xlu0
    %v850 = vpop.trf.xlu0
    %v851 = vpop.trf.xlu0
    %v852 = vpop.trf.xlu0
    %v853 = vpop.trf.xlu0
    %v854 = vpop.trf.xlu0
    %v855 = vpop.trf.xlu0
    %v856 = vpop.trf.xlu0
    %857 = vxpose.xlu0.b32.start [1/16] %v562, 128
    %858 = vxpose.xlu0.b32.cont [2/16] 0.0, 128
    %859 = vxpose.xlu0.b32.cont [3/16] 0.0, 128
    %860 = vxpose.xlu0.b32.cont [4/16] 0.0, 128
    %861 = vxpose.xlu0.b32.cont [5/16] 0.0, 128
    %862 = vxpose.xlu0.b32.cont [6/16] 0.0, 128
    %863 = vxpose.xlu0.b32.cont [7/16] 0.0, 128
    %864 = vxpose.xlu0.b32.cont [8/16] 0.0, 128
    %865 = vxpose.xlu0.b32.cont [9/16] 0.0, 128
    %866 = vxpose.xlu0.b32.cont [10/16] 0.0, 128
    %867 = vxpose.xlu0.b32.cont [11/16] 0.0, 128
    %868 = vxpose.xlu0.b32.cont [12/16] 0.0, 128
    %869 = vxpose.xlu0.b32.cont [13/16] 0.0, 128
    %870 = vxpose.xlu0.b32.cont [14/16] 0.0, 128
    %871 = vxpose.xlu0.b32.cont [15/16] 0.0, 128
    %872 = vxpose.xlu0.b32.end [16/16] 0.0, 128
    %v873 = vpop.trf.xlu0
    %v874 = vpop.trf.xlu0
    %v875 = vpop.trf.xlu0
    %v876 = vpop.trf.xlu0
    %v877 = vpop.trf.xlu0
    %v878 = vpop.trf.xlu0
    %v879 = vpop.trf.xlu0
    %v880 = vpop.trf.xlu0
    %v881 = vpop.trf.xlu0
    %v882 = vpop.trf.xlu0
    %v883 = vpop.trf.xlu0
    %v884 = vpop.trf.xlu0
    %v885 = vpop.trf.xlu0
    %v886 = vpop.trf.xlu0
    %v887 = vpop.trf.xlu0
    %v888 = vpop.trf.xlu0
    %v890 = vsel %vm417, %v841, 0
    %v893 = vsel %vm417, %v842, 0
    %v896 = vsel %vm417, %v843, 0
    %v899 = vsel %vm417, %v844, 0
    %901 = vmatpush.msra.mxu0 0.0
    %902 = vmatpush.msra.mxu0 0.0
    %903 = vmatpush.msra.mxu0 0.0
    %904 = vmatpush.msra.mxu0 0.0
    %905 = vmatpush.msra.mxu0 0.0
    %906 = vmatpush.msra.mxu0 0.0
    %907 = vmatpush.msra.mxu0 0.0
    %908 = vmatpush.msra.mxu0 0.0
    %909 = vmatpush.msra.mxu0 0.0
    %910 = vmatpush.msra.mxu0 0.0
    %911 = vmatpush.msra.mxu0 0.0
    %912 = vmatpush.msra.mxu0 0.0
    %913 = vmatpush.msra.mxu0 0.0
    %914 = vmatpush.msra.mxu0 0.0
    %915 = vmatpush.msra.mxu0 0.0
    %916 = vmatpush.msra.mxu0 %v282
    %917 = vmatmul.f32.gmra.mxu0 %v890
    %v918 = vpop.f32.mrf.mxu0
    %v919 = vadd.f32 0.0, %v918
    %920 = vmatmul.f32.gmra.mxu0 %v893
    %v921 = vpop.f32.mrf.mxu0
    %v922 = vadd.f32 0.0, %v921
    %923 = vmatmul.f32.gmra.mxu0 %v896
    %v924 = vpop.f32.mrf.mxu0
    %v925 = vadd.f32 0.0, %v924
    %926 = vmatmul.f32.gmra.mxu0 %v899
    %v927 = vpop.f32.mrf.mxu0
    %v928 = vadd.f32 0.0, %v927
    %929 = vdwg.mxu0
    %v931 = vsel %vm417, %v873, 0
    %v934 = vsel %vm417, %v874, 0
    %v937 = vsel %vm417, %v875, 0
    %v940 = vsel %vm417, %v876, 0
    %942 = vmatpush.msra.mxu0 0.0
    %943 = vmatpush.msra.mxu0 0.0
    %944 = vmatpush.msra.mxu0 0.0
    %945 = vmatpush.msra.mxu0 0.0
    %946 = vmatpush.msra.mxu0 0.0
    %947 = vmatpush.msra.mxu0 0.0
    %948 = vmatpush.msra.mxu0 0.0
    %949 = vmatpush.msra.mxu0 0.0
    %950 = vmatpush.msra.mxu0 0.0
    %951 = vmatpush.msra.mxu0 0.0
    %952 = vmatpush.msra.mxu0 0.0
    %953 = vmatpush.msra.mxu0 0.0
    %954 = vmatpush.msra.mxu0 0.0
    %955 = vmatpush.msra.mxu0 0.0
    %956 = vmatpush.msra.mxu0 0.0
    %957 = vmatpush.msra.mxu0 %v302
    %958 = vmatmul.f32.gmra.mxu0 %v931
    %v959 = vpop.f32.mrf.mxu0
    %v960 = vadd.f32 0.0, %v959
    %961 = vmatmul.f32.gmra.mxu0 %v934
    %v962 = vpop.f32.mrf.mxu0
    %v963 = vadd.f32 0.0, %v962
    %964 = vmatmul.f32.gmra.mxu0 %v937
    %v965 = vpop.f32.mrf.mxu0
    %v966 = vadd.f32 0.0, %v965
    %967 = vmatmul.f32.gmra.mxu0 %v940
    %v968 = vpop.f32.mrf.mxu0
    %v969 = vadd.f32 0.0, %v968
    %970 = vdwg.mxu0
    %v971 = vperm.slane %v548, 7
    %v972 = vlaneseq
    %v973 = vshrl.u32 %v972, 7
    %975 = vset.pattern.permute.xlu0 %v973
    %976 = vperm.xlu0 %975, %v971
    %v977 = vpop.permute.xlu0 %976
    %v978 = vlaneseq
    %v979 = vshrl.u32 %v978, 7
    %v980 = vadd.s32 %v979, 8
    %981 = vset.pattern.permute.xlu0 %v980
    %982 = vperm.xlu0 %981, %v971
    %v983 = vpop.permute.xlu0 %982
    %v984 = vlaneseq
    %v985 = vshrl.u32 %v984, 7
    %v986 = vadd.s32 %v985, 16
    %987 = vset.pattern.permute.xlu0 %v986
    %988 = vperm.xlu0 %987, %v971
    %v989 = vpop.permute.xlu0 %988
    %v990 = vlaneseq
    %v991 = vshrl.u32 %v990, 7
    %v992 = vadd.s32 %v991, 24
    %993 = vset.pattern.permute.xlu0 %v992
    %994 = vperm.xlu0 %993, %v971
    %v995 = vpop.permute.xlu0 %994
    %v996 = vperm.slane %v550, 7
    %v997 = vlaneseq
    %v998 = vshrl.u32 %v997, 7
    %1000 = vset.pattern.permute.xlu0 %v998
    %1001 = vperm.xlu0 %1000, %v996
    %v1002 = vpop.permute.xlu0 %1001
    %v1003 = vlaneseq
    %v1004 = vshrl.u32 %v1003, 7
    %v1005 = vadd.s32 %v1004, 8
    %1006 = vset.pattern.permute.xlu0 %v1005
    %1007 = vperm.xlu0 %1006, %v996
    %v1008 = vpop.permute.xlu0 %1007
    %v1009 = vlaneseq
    %v1010 = vshrl.u32 %v1009, 7
    %v1011 = vadd.s32 %v1010, 16
    %1012 = vset.pattern.permute.xlu0 %v1011
    %1013 = vperm.xlu0 %1012, %v996
    %v1014 = vpop.permute.xlu0 %1013
    %v1015 = vlaneseq
    %v1016 = vshrl.u32 %v1015, 7
    %v1017 = vadd.s32 %v1016, 24
    %1018 = vset.pattern.permute.xlu0 %v1017
    %1019 = vperm.xlu0 %1018, %v996
    %v1020 = vpop.permute.xlu0 %1019
    %v1021 = vadd.f32 %v37, %v919
    %v1022 = vadd.f32 %v38, %v922
    %v1023 = vadd.f32 %v39, %v925
    %v1024 = vadd.f32 %v40, %v928
    %v1025 = vadd.f32 %v41, %v960
    %v1026 = vadd.f32 %v42, %v963
    %v1027 = vadd.f32 %v43, %v966
    %v1028 = vadd.f32 %v44, %v969
    %v1029 = vmul.f32 %v977, %v1021
    %v1030 = vmul.f32 %v983, %v1022
    %v1031 = vmul.f32 %v989, %v1023
    %v1032 = vmul.f32 %v995, %v1024
    %v1033 = vmul.f32 %v1002, %v1025
    %v1034 = vmul.f32 %v1008, %v1026
    %v1035 = vmul.f32 %v1014, %v1027
    %v1036 = vmul.f32 %v1020, %v1028
    %1037 = vst.msk [vmem:[#allocation5] sm:$0xff] %vm57, %v1029
    %1038 = vst.msk [vmem:[#allocation5 + $0x8] sm:$0xff] %vm57, %v1030
    %1039 = vst.msk [vmem:[#allocation5 + $0x10] sm:$0xff] %vm57, %v1031
    %1040 = vst.msk [vmem:[#allocation5 + $0x18] sm:$0xff] %vm57, %v1032
    %1041 = vst.msk [vmem:[#allocation5 + $0x20] sm:$0xff] %vm57, %v1033
    %1042 = vst.msk [vmem:[#allocation5 + $0x28] sm:$0xff] %vm57, %v1034
    %1043 = vst.msk [vmem:[#allocation5 + $0x30] sm:$0xff] %vm57, %v1035
    %1044 = vst.msk [vmem:[#allocation5 + $0x38] sm:$0xff] %vm57, %v1036
    %v1047 = vrot.slane %v778, 7
    %vm1050 = vcmask 261127
    %1051 = vst.msk [vmem:[#allocation7 - $0x7] sm:$0x80] %vm1050, %v777
    %1052 = vst.msk [vmem:[#allocation7 + $0x1] sm:$0x1] %vm473, %v1047
    %v1053 = vrot.slane %v539, 2
    %v1055 = vadd.f32 %v439, %v541
    %v1056 = vadd.f32 %v459, %v1053
    %v1059 = vrot.slane %v1056, 7
    %1062 = vst.msk [vmem:[#allocation8 - $0x7] sm:$0x80] %vm1050, %v1055
    %1063 = vst.msk [vmem:[#allocation8 + $0x1] sm:$0x1] %vm473, %v1059
    // Predicated region
    $region18: #{mlstm_forward.3} parent=1 // pred_check
      _
    $region19: #{mlstm_forward.3} parent=1 // pred_check_branch
      %1065 = sbr.rel (0) target = $region21
    $region20: #{mlstm_forward.3} parent=1 // pred_region
      %1067 = vsyncadd [#allocation4], 0
      %s1068 = sshll.u32 [#allocation3], 4
      %s1069 = int_to_ptr.vmem [resolvable:$true] %s1068
      %s1070 = sshll.u32 %s3, 4
      %s1071 = int_to_ptr.hbm [resolvable:$true] %s1070
      %1076 = dma.vmem_to_hbm [thread:$0]  %s1069, 256, %s1071, [#allocation4], 128, 128, 8
    $region21: #{mlstm_forward.3} parent=1 // pred_fallthru
      _
    // Predicated region
    $region22: #{mlstm_forward.3} parent=1 // pred_check
      _
    $region23: #{mlstm_forward.3} parent=1 // pred_check_branch
      %1078 = sbr.rel (0) target = $region25
    $region24: #{mlstm_forward.3} parent=1 // pred_region
      %1080 = vsyncadd [#allocation6], 0
      %s1081 = sshll.u32 [#allocation5], 4
      %s1082 = int_to_ptr.vmem [resolvable:$true] %s1081
      %s1083 = sshll.u32 %s4, 4
      %s1084 = int_to_ptr.hbm [resolvable:$true] %s1083
      %1089 = dma.vmem_to_hbm [thread:$0]  %s1082, 1024, %s1084, [#allocation6], 128, 128, 8
    $region25: #{mlstm_forward.3} parent=1 // pred_fallthru
      _
    // Predicated region
    $region26: #{mlstm_forward.3} parent=1 // pred_check
      _
    $region27: #{mlstm_forward.3} parent=1 // pred_check_branch
      %1091 = sbr.rel (0) target = $region29
    $region28: #{mlstm_forward.3} parent=1 // pred_region
      %1093 = vsyncadd [#allocation6], 0
      %s1095 = sshll.u32 [#allocation7], 4
      %s1096 = int_to_ptr.vmem [resolvable:$true] %s1095
      %s1097 = sshll.u32 %s5, 4
      %s1098 = int_to_ptr.hbm [resolvable:$true] %s1097
      %1100 = dma.vmem_to_hbm [thread:$0]  %s1096, 32, %s1098, [#allocation6]
    $region29: #{mlstm_forward.3} parent=1 // pred_fallthru
      _
    // Predicated region
    $region30: #{mlstm_forward.3} parent=1 // pred_check
      _
    $region31: #{mlstm_forward.3} parent=1 // pred_check_branch
      %1102 = sbr.rel (0) target = $region33
    $region32: #{mlstm_forward.3} parent=1 // pred_region
      %1104 = vsyncadd [#allocation9], 0
      %s1106 = sshll.u32 [#allocation8], 4
      %s1107 = int_to_ptr.vmem [resolvable:$true] %s1106
      %s1108 = sshll.u32 %s6, 4
      %s1109 = int_to_ptr.hbm [resolvable:$true] %s1108
      %1111 = dma.vmem_to_hbm [thread:$0]  %s1107, 32, %s1109, [#allocation9]
    $region33: #{mlstm_forward.3} parent=1 // pred_fallthru
      _
    // Predicated region
    $region34: #{mlstm_forward.3} parent=1 // pred_check
      _
    $region35: #{mlstm_forward.3} parent=1 // pred_check_branch
      %1113 = sbr.rel (0) target = $region37
    $region36: #{mlstm_forward.3} parent=1 // pred_region
      %1115 = dma.done [#allocation4], 256
    $region37: #{mlstm_forward.3} parent=1 // pred_fallthru
      _
    // Predicated region
    $region38: #{mlstm_forward.3} parent=1 // pred_check
      _
    $region39: #{mlstm_forward.3} parent=1 // pred_check_branch
      %1117 = sbr.rel (0) target = $region41
    $region40: #{mlstm_forward.3} parent=1 // pred_region
      %1119 = dma.done [#allocation6], 1024
    $region41: #{mlstm_forward.3} parent=1 // pred_fallthru
      _
    // Predicated region
    $region42: #{mlstm_forward.3} parent=1 // pred_check
      _
    $region43: #{mlstm_forward.3} parent=1 // pred_check_branch
      %1121 = sbr.rel (0) target = $region45
    $region44: #{mlstm_forward.3} parent=1 // pred_region
      %1123 = dma.done [#allocation6], 32
    $region45: #{mlstm_forward.3} parent=1 // pred_fallthru
      _
    // Predicated region
    $region46: #{mlstm_forward.3} parent=1 // pred_check
      _
    $region47: #{mlstm_forward.3} parent=1 // pred_check_branch
      %1125 = sbr.rel (0) target = $region49
    $region48: #{mlstm_forward.3} parent=1 // pred_region
      %1127 = dma.done [#allocation9], 32
    $region49: #{mlstm_forward.3} parent=1 // pred_fallthru
      _
    %1128 = vsyncpa [#allocation4], 1
    %1129 = vsyncpa [#allocation6], 1
    %1130 = vsyncpa [#allocation9], 1

// kernel: mlstm_forward.2
$region0: #{mlstm_forward.2}
  #allocation0 [shape = 'u32[]', space=smem, size = 0x4, offset = 0x4, fixed_abs, tag = 'smem constant byte address 0x4 - core index']
  #allocation1 [shape = 'u32[72,128]{1,0:T(1,128)}', space=vmem, size = 0x9000, scoped, tag = 'internal scratch']
  #allocation2 [shape = 'f32[2,8,32]{2,1,0:T(8,128)}', space=vmem, size = 0x2000, scoped, tag = 'scratch operand']
  %s0 = inlined_call_operand.vmem [shape: f32[2,8,16], index: 0, kind: input, shape index: {}]
  %s1 = inlined_call_operand.vmem [shape: f32[6,16,32], index: 1, kind: input, shape index: {}]
  %s2 = inlined_call_operand.vmem [shape: f32[6,1,32], index: 2, kind: input, shape index: {}]
  %s3 = inlined_call_operand.vmem [shape: f32[2,8,32], index: 3, kind: output, shape index: {0}]
  %s4 = inlined_call_operand.hbm [shape: f32[2,32,32], index: 4, kind: output, shape index: {1}]
  %s5 = inlined_call_operand.hbm [shape: f32[2,32], index: 5, kind: output, shape index: {2}]
  %s6 = inlined_call_operand.hbm [shape: f32[2,32], index: 6, kind: output, shape index: {3}]
  %7 = xla_tuple %s3, %s4, %s5, %s6
  %s8 = sld [smem:[#allocation0]]
  $region50: #{mlstm_forward.2} parent=0
    _
  %s10 = ssub.s32 1, %s8
  %s11 = scalar_select 0, %s10, %s8
  $region1: #{mlstm_forward.2} parent=0
    #allocation3 [shape = 'u8[32768]{0}', space=vmem, size = 0x8000, scoped, tag = 'output window, operand 1, single buffered']
    #allocation4 [shape = 's32[1]{0}', space=sflag, size = 0x4, scoped, tag = 'scoped memory for mlstm_forward.2']
    #allocation5 [shape = 'u8[1024]{0}', space=vmem, size = 0x400, scoped, tag = 'output window, operand 2, single buffered']
    #allocation6 [shape = 's32[1]{0}', space=sflag, size = 0x4, scoped, tag = 'scoped memory for mlstm_forward.2']
    #allocation7 [shape = 'u8[1024]{0}', space=vmem, size = 0x400, scoped, tag = 'output window, operand 3, single buffered']
    %12 = vsyncpa [#allocation4], 0
    %13 = vsyncpa [#allocation6], 0
    // Predicated region
    $region2: #{mlstm_forward.2} parent=1 // pred_check
      _
    $region3: #{mlstm_forward.2} parent=1 // pred_check_branch
      %15 = sbr.rel (0) target = $region5
    $region4: #{mlstm_forward.2} parent=1 // pred_region
      _
    $region5: #{mlstm_forward.2} parent=1 // pred_fallthru
      _
    // Predicated region
    $region6: #{mlstm_forward.2} parent=1 // pred_check
      _
    $region7: #{mlstm_forward.2} parent=1 // pred_check_branch
      %17 = sbr.rel (0) target = $region9
    $region8: #{mlstm_forward.2} parent=1 // pred_region
      _
    $region9: #{mlstm_forward.2} parent=1 // pred_fallthru
      _
    // Predicated region
    $region10: #{mlstm_forward.2} parent=1 // pred_check
      _
    $region11: #{mlstm_forward.2} parent=1 // pred_check_branch
      %19 = sbr.rel (0) target = $region13
    $region12: #{mlstm_forward.2} parent=1 // pred_region
      _
    $region13: #{mlstm_forward.2} parent=1 // pred_fallthru
      _
    %p20 = scmp.eq.s32.totalorder 0, 0
    // Predicated region
    $region14: #{mlstm_forward.2} parent=1 // pred_check
      %p21 = pneg %p20
    $region15: #{mlstm_forward.2} parent=1 // pred_check_branch
      %23 = sbr.rel (%p21) target = $region17
    $region16: #{mlstm_forward.2} parent=1 // pred_region
      %vm24 = vcmask 261120
      %25 = vst.msk [vmem:[#allocation3] sm:$0xff] %vm24, 0.0
      %26 = vst.msk [vmem:[#allocation3 + $0x8] sm:$0xff] %vm24, 0.0
      %27 = vst.msk [vmem:[#allocation3 + $0x10] sm:$0xff] %vm24, 0.0
      %28 = vst.msk [vmem:[#allocation3 + $0x18] sm:$0xff] %vm24, 0.0
      %29 = vst.msk [vmem:[#allocation3 + $0x20] sm:$0xff] %vm24, 0.0
      %30 = vst.msk [vmem:[#allocation3 + $0x28] sm:$0xff] %vm24, 0.0
      %31 = vst.msk [vmem:[#allocation3 + $0x30] sm:$0xff] %vm24, 0.0
      %32 = vst.msk [vmem:[#allocation3 + $0x38] sm:$0xff] %vm24, 0.0
      %vm33 = vcmask 254976
      %34 = vst.msk [vmem:[#allocation5] sm:$0x3] %vm33, 0.0
      %35 = vst.msk [vmem:[#allocation7] sm:$0x3] %vm33, 0.0
    $region17: #{mlstm_forward.2} parent=1 // pred_fallthru
      _
    %v36 = vld [vmem:[#allocation3] sm:$0xff]
    %v37 = vld [vmem:[#allocation3 + $0x8] sm:$0xff]
    %v38 = vld [vmem:[#allocation3 + $0x10] sm:$0xff]
    %v39 = vld [vmem:[#allocation3 + $0x18] sm:$0xff]
    %v40 = vld [vmem:[#allocation3 + $0x20] sm:$0xff]
    %v41 = vld [vmem:[#allocation3 + $0x28] sm:$0xff]
    %v42 = vld [vmem:[#allocation3 + $0x30] sm:$0xff]
    %v43 = vld [vmem:[#allocation3 + $0x38] sm:$0xff]
    %v44 = vld [vmem:[#allocation5] sm:$0x3]
    %v45 = vld [vmem:[#allocation7] sm:$0x3]
    %v46 = vld [vmem:[%s0] sm:$0xff]
    %v47 = vld [vmem:[%s0 + $0x8] sm:$0xff]
    %v48 = vld [vmem:[%s1] sm:$0xff]
    %v49 = vld [vmem:[%s1 + $0x8] sm:$0xff]
    %v50 = vld [vmem:[%s2] sm:$0x1]
    %v52 = vperm.slane %v50, 0
    %vm54 = vcmask 130048
    %v56 = vsel %vm54, %v46, 0
    %58 = vmatpush.msra.mxu0 0.0
    %59 = vmatpush.msra.mxu0 0.0
    %60 = vmatpush.msra.mxu0 0.0
    %61 = vmatpush.msra.mxu0 0.0
    %62 = vmatpush.msra.mxu0 0.0
    %63 = vmatpush.msra.mxu0 0.0
    %64 = vmatpush.msra.mxu0 0.0
    %65 = vmatpush.msra.mxu0 0.0
    %66 = vmatpush.msra.mxu0 0.0
    %67 = vmatpush.msra.mxu0 0.0
    %68 = vmatpush.msra.mxu0 0.0
    %69 = vmatpush.msra.mxu0 0.0
    %70 = vmatpush.msra.mxu0 0.0
    %71 = vmatpush.msra.mxu0 0.0
    %72 = vmatpush.msra.mxu0 %v49
    %73 = vmatpush.msra.mxu0 %v48
    %74 = vmatmul.f32.gmra.mxu0 %v56
    %v75 = vpop.f32.mrf.mxu0
    %v76 = vadd.f32 %v52, %v75
    %77 = vdwg.mxu0
    %v79 = vsel %vm54, %v47, 0
    %81 = vmatpush.msra.mxu0 0.0
    %82 = vmatpush.msra.mxu0 0.0
    %83 = vmatpush.msra.mxu0 0.0
    %84 = vmatpush.msra.mxu0 0.0
    %85 = vmatpush.msra.mxu0 0.0
    %86 = vmatpush.msra.mxu0 0.0
    %87 = vmatpush.msra.mxu0 0.0
    %88 = vmatpush.msra.mxu0 0.0
    %89 = vmatpush.msra.mxu0 0.0
    %90 = vmatpush.msra.mxu0 0.0
    %91 = vmatpush.msra.mxu0 0.0
    %92 = vmatpush.msra.mxu0 0.0
    %93 = vmatpush.msra.mxu0 0.0
    %94 = vmatpush.msra.mxu0 0.0
    %95 = vmatpush.msra.mxu0 %v49
    %96 = vmatpush.msra.mxu0 %v48
    %97 = vmatmul.f32.gmra.mxu0 %v79
    %v98 = vpop.f32.mrf.mxu0
    %v99 = vadd.f32 %v52, %v98
    %100 = vdwg.mxu0
    %s101 = scalar_lea.vmem %s1, 16
    %v102 = vld [vmem:[%s101] sm:$0xff]
    %v103 = vld [vmem:[%s101 + $0x8] sm:$0xff]
    %s104 = scalar_lea.vmem %s2, 1
    %v105 = vld [vmem:[%s104] sm:$0x1]
    %v107 = vperm.slane %v105, 0
    %109 = vmatpush.msra.mxu0 0.0
    %110 = vmatpush.msra.mxu0 0.0
    %111 = vmatpush.msra.mxu0 0.0
    %112 = vmatpush.msra.mxu0 0.0
    %113 = vmatpush.msra.mxu0 0.0
    %114 = vmatpush.msra.mxu0 0.0
    %115 = vmatpush.msra.mxu0 0.0
    %116 = vmatpush.msra.mxu0 0.0
    %117 = vmatpush.msra.mxu0 0.0
    %118 = vmatpush.msra.mxu0 0.0
    %119 = vmatpush.msra.mxu0 0.0
    %120 = vmatpush.msra.mxu0 0.0
    %121 = vmatpush.msra.mxu0 0.0
    %122 = vmatpush.msra.mxu0 0.0
    %123 = vmatpush.msra.mxu0 %v103
    %124 = vmatpush.msra.mxu0 %v102
    %125 = vmatmul.f32.gmra.mxu0 %v56
    %v126 = vpop.f32.mrf.mxu0
    %v127 = vadd.f32 %v107, %v126
    %128 = vdwg.mxu0
    %129 = vmatpush.msra.mxu0 0.0
    %130 = vmatpush.msra.mxu0 0.0
    %131 = vmatpush.msra.mxu0 0.0
    %132 = vmatpush.msra.mxu0 0.0
    %133 = vmatpush.msra.mxu0 0.0
    %134 = vmatpush.msra.mxu0 0.0
    %135 = vmatpush.msra.mxu0 0.0
    %136 = vmatpush.msra.mxu0 0.0
    %137 = vmatpush.msra.mxu0 0.0
    %138 = vmatpush.msra.mxu0 0.0
    %139 = vmatpush.msra.mxu0 0.0
    %140 = vmatpush.msra.mxu0 0.0
    %141 = vmatpush.msra.mxu0 0.0
    %142 = vmatpush.msra.mxu0 0.0
    %143 = vmatpush.msra.mxu0 %v103
    %144 = vmatpush.msra.mxu0 %v102
    %145 = vmatmul.f32.gmra.mxu0 %v79
    %v146 = vpop.f32.mrf.mxu0
    %v147 = vadd.f32 %v107, %v146
    %148 = vdwg.mxu0
    %s149 = scalar_lea.vmem %s1, 32
    %v150 = vld [vmem:[%s149] sm:$0xff]
    %v151 = vld [vmem:[%s149 + $0x8] sm:$0xff]
    %s152 = scalar_lea.vmem %s2, 2
    %v153 = vld [vmem:[%s152] sm:$0x1]
    %v155 = vperm.slane %v153, 0
    %157 = vmatpush.msra.mxu0 0.0
    %158 = vmatpush.msra.mxu0 0.0
    %159 = vmatpush.msra.mxu0 0.0
    %160 = vmatpush.msra.mxu0 0.0
    %161 = vmatpush.msra.mxu0 0.0
    %162 = vmatpush.msra.mxu0 0.0
    %163 = vmatpush.msra.mxu0 0.0
    %164 = vmatpush.msra.mxu0 0.0
    %165 = vmatpush.msra.mxu0 0.0
    %166 = vmatpush.msra.mxu0 0.0
    %167 = vmatpush.msra.mxu0 0.0
    %168 = vmatpush.msra.mxu0 0.0
    %169 = vmatpush.msra.mxu0 0.0
    %170 = vmatpush.msra.mxu0 0.0
    %171 = vmatpush.msra.mxu0 %v151
    %172 = vmatpush.msra.mxu0 %v150
    %173 = vmatmul.f32.gmra.mxu0 %v56
    %v174 = vpop.f32.mrf.mxu0
    %v175 = vadd.f32 %v155, %v174
    %176 = vdwg.mxu0
    %177 = vmatpush.msra.mxu0 0.0
    %178 = vmatpush.msra.mxu0 0.0
    %179 = vmatpush.msra.mxu0 0.0
    %180 = vmatpush.msra.mxu0 0.0
    %181 = vmatpush.msra.mxu0 0.0
    %182 = vmatpush.msra.mxu0 0.0
    %183 = vmatpush.msra.mxu0 0.0
    %184 = vmatpush.msra.mxu0 0.0
    %185 = vmatpush.msra.mxu0 0.0
    %186 = vmatpush.msra.mxu0 0.0
    %187 = vmatpush.msra.mxu0 0.0
    %188 = vmatpush.msra.mxu0 0.0
    %189 = vmatpush.msra.mxu0 0.0
    %190 = vmatpush.msra.mxu0 0.0
    %191 = vmatpush.msra.mxu0 %v151
    %192 = vmatpush.msra.mxu0 %v150
    %193 = vmatmul.f32.gmra.mxu0 %v79
    %v194 = vpop.f32.mrf.mxu0
    %v195 = vadd.f32 %v155, %v194
    %196 = vdwg.mxu0
    %s197 = scalar_lea.vmem %s1, 48
    %v198 = vld [vmem:[%s197] sm:$0xff]
    %v199 = vld [vmem:[%s197 + $0x8] sm:$0xff]
    %s200 = scalar_lea.vmem %s2, 3
    %v201 = vld [vmem:[%s200] sm:$0x1]
    %v203 = vperm.slane %v201, 0
    %205 = vmatpush.msra.mxu0 0.0
    %206 = vmatpush.msra.mxu0 0.0
    %207 = vmatpush.msra.mxu0 0.0
    %208 = vmatpush.msra.mxu0 0.0
    %209 = vmatpush.msra.mxu0 0.0
    %210 = vmatpush.msra.mxu0 0.0
    %211 = vmatpush.msra.mxu0 0.0
    %212 = vmatpush.msra.mxu0 0.0
    %213 = vmatpush.msra.mxu0 0.0
    %214 = vmatpush.msra.mxu0 0.0
    %215 = vmatpush.msra.mxu0 0.0
    %216 = vmatpush.msra.mxu0 0.0
    %217 = vmatpush.msra.mxu0 0.0
    %218 = vmatpush.msra.mxu0 0.0
    %219 = vmatpush.msra.mxu0 %v199
    %220 = vmatpush.msra.mxu0 %v198
    %221 = vmatmul.f32.gmra.mxu0 %v56
    %v222 = vpop.f32.mrf.mxu0
    %v223 = vadd.f32 %v203, %v222
    %224 = vdwg.mxu0
    %225 = vmatpush.msra.mxu0 0.0
    %226 = vmatpush.msra.mxu0 0.0
    %227 = vmatpush.msra.mxu0 0.0
    %228 = vmatpush.msra.mxu0 0.0
    %229 = vmatpush.msra.mxu0 0.0
    %230 = vmatpush.msra.mxu0 0.0
    %231 = vmatpush.msra.mxu0 0.0
    %232 = vmatpush.msra.mxu0 0.0
    %233 = vmatpush.msra.mxu0 0.0
    %234 = vmatpush.msra.mxu0 0.0
    %235 = vmatpush.msra.mxu0 0.0
    %236 = vmatpush.msra.mxu0 0.0
    %237 = vmatpush.msra.mxu0 0.0
    %238 = vmatpush.msra.mxu0 0.0
    %239 = vmatpush.msra.mxu0 %v199
    %240 = vmatpush.msra.mxu0 %v198
    %241 = vmatmul.f32.gmra.mxu0 %v79
    %v242 = vpop.f32.mrf.mxu0
    %v243 = vadd.f32 %v203, %v242
    %244 = vdwg.mxu0
    %s245 = scalar_lea.vmem %s1, 64
    %v246 = vld [vmem:[%s245] sm:$0xff]
    %v247 = vld [vmem:[%s245 + $0x8] sm:$0xff]
    %s248 = scalar_lea.vmem %s2, 4
    %v249 = vld [vmem:[%s248] sm:$0x1]
    %v251 = vperm.slane %v249, 0
    %253 = vmatpush.msra.mxu0 0.0
    %254 = vmatpush.msra.mxu0 0.0
    %255 = vmatpush.msra.mxu0 0.0
    %256 = vmatpush.msra.mxu0 0.0
    %257 = vmatpush.msra.mxu0 0.0
    %258 = vmatpush.msra.mxu0 0.0
    %259 = vmatpush.msra.mxu0 0.0
    %260 = vmatpush.msra.mxu0 0.0
    %261 = vmatpush.msra.mxu0 0.0
    %262 = vmatpush.msra.mxu0 0.0
    %263 = vmatpush.msra.mxu0 0.0
    %264 = vmatpush.msra.mxu0 0.0
    %265 = vmatpush.msra.mxu0 0.0
    %266 = vmatpush.msra.mxu0 0.0
    %267 = vmatpush.msra.mxu0 %v247
    %268 = vmatpush.msra.mxu0 %v246
    %269 = vmatmul.f32.gmra.mxu0 %v56
    %v270 = vpop.f32.mrf.mxu0
    %v271 = vadd.f32 %v251, %v270
    %272 = vdwg.mxu0
    %273 = vmatpush.msra.mxu0 0.0
    %274 = vmatpush.msra.mxu0 0.0
    %275 = vmatpush.msra.mxu0 0.0
    %276 = vmatpush.msra.mxu0 0.0
    %277 = vmatpush.msra.mxu0 0.0
    %278 = vmatpush.msra.mxu0 0.0
    %279 = vmatpush.msra.mxu0 0.0
    %280 = vmatpush.msra.mxu0 0.0
    %281 = vmatpush.msra.mxu0 0.0
    %282 = vmatpush.msra.mxu0 0.0
    %283 = vmatpush.msra.mxu0 0.0
    %284 = vmatpush.msra.mxu0 0.0
    %285 = vmatpush.msra.mxu0 0.0
    %286 = vmatpush.msra.mxu0 0.0
    %287 = vmatpush.msra.mxu0 %v247
    %288 = vmatpush.msra.mxu0 %v246
    %289 = vmatmul.f32.gmra.mxu0 %v79
    %v290 = vpop.f32.mrf.mxu0
    %v291 = vadd.f32 %v251, %v290
    %292 = vdwg.mxu0
    %s293 = scalar_lea.vmem %s1, 80
    %v294 = vld [vmem:[%s293] sm:$0xff]
    %v295 = vld [vmem:[%s293 + $0x8] sm:$0xff]
    %s296 = scalar_lea.vmem %s2, 5
    %v297 = vld [vmem:[%s296] sm:$0x1]
    %v299 = vperm.slane %v297, 0
    %301 = vmatpush.msra.mxu0 0.0
    %302 = vmatpush.msra.mxu0 0.0
    %303 = vmatpush.msra.mxu0 0.0
    %304 = vmatpush.msra.mxu0 0.0
    %305 = vmatpush.msra.mxu0 0.0
    %306 = vmatpush.msra.mxu0 0.0
    %307 = vmatpush.msra.mxu0 0.0
    %308 = vmatpush.msra.mxu0 0.0
    %309 = vmatpush.msra.mxu0 0.0
    %310 = vmatpush.msra.mxu0 0.0
    %311 = vmatpush.msra.mxu0 0.0
    %312 = vmatpush.msra.mxu0 0.0
    %313 = vmatpush.msra.mxu0 0.0
    %314 = vmatpush.msra.mxu0 0.0
    %315 = vmatpush.msra.mxu0 %v295
    %316 = vmatpush.msra.mxu0 %v294
    %317 = vmatmul.f32.gmra.mxu0 %v56
    %v318 = vpop.f32.mrf.mxu0
    %v319 = vadd.f32 %v299, %v318
    %320 = vdwg.mxu0
    %321 = vmatpush.msra.mxu0 0.0
    %322 = vmatpush.msra.mxu0 0.0
    %323 = vmatpush.msra.mxu0 0.0
    %324 = vmatpush.msra.mxu0 0.0
    %325 = vmatpush.msra.mxu0 0.0
    %326 = vmatpush.msra.mxu0 0.0
    %327 = vmatpush.msra.mxu0 0.0
    %328 = vmatpush.msra.mxu0 0.0
    %329 = vmatpush.msra.mxu0 0.0
    %330 = vmatpush.msra.mxu0 0.0
    %331 = vmatpush.msra.mxu0 0.0
    %332 = vmatpush.msra.mxu0 0.0
    %333 = vmatpush.msra.mxu0 0.0
    %334 = vmatpush.msra.mxu0 0.0
    %335 = vmatpush.msra.mxu0 %v295
    %336 = vmatpush.msra.mxu0 %v294
    %337 = vmatmul.f32.gmra.mxu0 %v79
    %v338 = vpop.f32.mrf.mxu0
    %v339 = vadd.f32 %v299, %v338
    %340 = vdwg.mxu0
    %v341 = vxor.u32 %v175, 2147483648
    %v342 = vxor.u32 %v195, 2147483648
    %v343 = vmul.f32 %v341, 1.442695
    %v344 = vpow.pop %v343
    %v345 = vmul.f32 %v342, 1.442695
    %v346 = vpow.pop %v345
    %v347 = vadd.f32 %v344, 1.0
    %v348 = vadd.f32 %v346, 1.0
    %v349 = vrcp.pop %v347
    %v350 = vmul.f32 %v347, %v349
    %v351 = vsub.f32 1.0, %v350
    %v352 = vmul.f32 %v349, %v351
    %v353 = vadd.f32 %v349, %v352
    %vm354 = vweird.f32 %v347
    %vm355 = vweird.f32 %v349
    %vm356 = vmor %vm354, %vm355
    %v357 = vsel %vm356, %v349, %v353
    %v358 = vand.u32 2147483647, %v347
    %vm359 = vcmp.eq.f32.partialorder %v358, 8.507059e+37
    %v360 = vand.u32 %v347, 2147483648
    %v361 = vor.u32 1.1754944e-38, %v360
    %v362 = vsel %vm359, %v361, %v357
    %v363 = vmul.f32 1.0, %v362
    %v364 = vrcp.pop %v348
    %v365 = vmul.f32 %v348, %v364
    %v366 = vsub.f32 1.0, %v365
    %v367 = vmul.f32 %v364, %v366
    %v368 = vadd.f32 %v364, %v367
    %vm369 = vweird.f32 %v348
    %vm370 = vweird.f32 %v364
    %vm371 = vmor %vm369, %vm370
    %v372 = vsel %vm371, %v364, %v368
    %v373 = vand.u32 2147483647, %v348
    %vm374 = vcmp.eq.f32.partialorder %v373, 8.507059e+37
    %v375 = vand.u32 %v348, 2147483648
    %v376 = vor.u32 1.1754944e-38, %v375
    %v377 = vsel %vm374, %v376, %v372
    %v378 = vmul.f32 1.0, %v377
    %v379 = vmin.f32 %v127, 0.0
    %v380 = vmin.f32 %v147, 0.0
    %v381 = vand.u32 2147483647, %v127
    %v382 = vand.u32 2147483647, %v147
    %v383 = vsub.f32 0.0, %v381
    %v384 = vsub.f32 0.0, %v382
    %v385 = vmul.f32 %v383, 1.442695
    %v386 = vpow.pop %v385
    %v387 = vmul.f32 %v384, 1.442695
    %v388 = vpow.pop %v387
    %v389 = vadd.f32 %v386, 1.0
    %v390 = vadd.f32 %v388, 1.0
    %v391 = vlog2.pop %v389
    %v392 = vmul.f32 %v391, 0.6931472
    %v393 = vlog2.pop %v390
    %v394 = vmul.f32 %v393, 0.6931472
    %v395 = vsub.f32 %v379, %v392
    %v396 = vsub.f32 %v380, %v394
    %v397 = vlaneseq
    %v398 = vshrl.u32 %v397, 7
    %v399 = vlaneseq
    %v400 = vand.u32 %v399, 127
    %vm401 = vcmp.le.s32.totalorder %v400, %v398
    %v402 = vsel %vm401, 1, 0
    %v403 = vcvt.s32.f32 %v402
    %vm404 = vcmask 64512
    %v406 = vsel %vm404, %v403, 0
    %408 = vmatpush.msra.mxu0 0.0
    %409 = vmatpush.msra.mxu0 0.0
    %410 = vmatpush.msra.mxu0 0.0
    %411 = vmatpush.msra.mxu0 0.0
    %412 = vmatpush.msra.mxu0 0.0
    %413 = vmatpush.msra.mxu0 0.0
    %414 = vmatpush.msra.mxu0 0.0
    %415 = vmatpush.msra.mxu0 0.0
    %416 = vmatpush.msra.mxu0 0.0
    %417 = vmatpush.msra.mxu0 0.0
    %418 = vmatpush.msra.mxu0 0.0
    %419 = vmatpush.msra.mxu0 0.0
    %420 = vmatpush.msra.mxu0 0.0
    %421 = vmatpush.msra.mxu0 0.0
    %422 = vmatpush.msra.mxu0 0.0
    %423 = vmatpush.msra.mxu0 %v395
    %424 = vmatmul.f32.gmra.mxu0 %v406
    %v425 = vpop.f32.mrf.mxu0
    %v426 = vadd.f32 0.0, %v425
    %427 = vdwg.mxu0
    %428 = vmatpush.msra.mxu0 0.0
    %429 = vmatpush.msra.mxu0 0.0
    %430 = vmatpush.msra.mxu0 0.0
    %431 = vmatpush.msra.mxu0 0.0
    %432 = vmatpush.msra.mxu0 0.0
    %433 = vmatpush.msra.mxu0 0.0
    %434 = vmatpush.msra.mxu0 0.0
    %435 = vmatpush.msra.mxu0 0.0
    %436 = vmatpush.msra.mxu0 0.0
    %437 = vmatpush.msra.mxu0 0.0
    %438 = vmatpush.msra.mxu0 0.0
    %439 = vmatpush.msra.mxu0 0.0
    %440 = vmatpush.msra.mxu0 0.0
    %441 = vmatpush.msra.mxu0 0.0
    %442 = vmatpush.msra.mxu0 0.0
    %443 = vmatpush.msra.mxu0 %v396
    %444 = vmatmul.f32.gmra.mxu0 %v406
    %v445 = vpop.f32.mrf.mxu0
    %v446 = vadd.f32 0.0, %v445
    %447 = vdwg.mxu0
    %v448 = vsub.f32 %v76, %v426
    %v449 = vsub.f32 %v99, %v446
    %v452 = vrot.slane %v449, 7
    %vm453 = vcmask 1041409
    %v454 = vsel %vm453, %v452, %v448
    %v456 = vmax.f32 %v45, %v454
    %v458 = vrot.slane %v456, 1
    %vm460 = vcmask 253952
    %461 = vst.msk [vmem:[#allocation2] sm:$0x1] %vm460, %v456
    %462 = vst.msk [vmem:[#allocation2 + $0x8] sm:$0x1] %vm460, %v458
    %v463 = vrot.slane %v448, 1
    %v464 = vsel %vm453, %v449, %v463
    %v466 = vmax.f32 %v456, %v464
    %v468 = vrot.slane %v466, 1
    %470 = vst.msk [vmem:[#allocation2 + $0x1] sm:$0x1] %vm460, %v466
    %471 = vst.msk [vmem:[#allocation2 + $0x9] sm:$0x1] %vm460, %v468
    %v472 = vrot.slane %v448, 2
    %v473 = vrot.slane %v449, 1
    %v474 = vsel %vm453, %v473, %v472
    %v476 = vmax.f32 %v466, %v474
    %v478 = vrot.slane %v476, 1
    %480 = vst.msk [vmem:[#allocation2 + $0x2] sm:$0x1] %vm460, %v476
    %481 = vst.msk [vmem:[#allocation2 + $0xa] sm:$0x1] %vm460, %v478
    %v482 = vrot.slane %v448, 3
    %v483 = vrot.slane %v449, 2
    %v484 = vsel %vm453, %v483, %v482
    %v486 = vmax.f32 %v476, %v484
    %v488 = vrot.slane %v486, 1
    %490 = vst.msk [vmem:[#allocation2 + $0x3] sm:$0x1] %vm460, %v486
    %491 = vst.msk [vmem:[#allocation2 + $0xb] sm:$0x1] %vm460, %v488
    %v492 = vrot.slane %v448, 4
    %v493 = vrot.slane %v449, 3
    %v494 = vsel %vm453, %v493, %v492
    %v496 = vmax.f32 %v486, %v494
    %v498 = vrot.slane %v496, 1
    %500 = vst.msk [vmem:[#allocation2 + $0x4] sm:$0x1] %vm460, %v496
    %501 = vst.msk [vmem:[#allocation2 + $0xc] sm:$0x1] %vm460, %v498
    %v502 = vrot.slane %v448, 5
    %v503 = vrot.slane %v449, 4
    %v504 = vsel %vm453, %v503, %v502
    %v506 = vmax.f32 %v496, %v504
    %v508 = vrot.slane %v506, 1
    %510 = vst.msk [vmem:[#allocation2 + $0x5] sm:$0x1] %vm460, %v506
    %511 = vst.msk [vmem:[#allocation2 + $0xd] sm:$0x1] %vm460, %v508
    %v512 = vrot.slane %v448, 6
    %v513 = vrot.slane %v449, 5
    %v514 = vsel %vm453, %v513, %v512
    %v516 = vmax.f32 %v506, %v514
    %v518 = vrot.slane %v516, 1
    %520 = vst.msk [vmem:[#allocation2 + $0x6] sm:$0x1] %vm460, %v516
    %521 = vst.msk [vmem:[#allocation2 + $0xe] sm:$0x1] %vm460, %v518
    %v522 = vrot.slane %v448, 7
    %v523 = vrot.slane %v449, 6
    %v524 = vsel %vm453, %v523, %v522
    %v526 = vmax.f32 %v516, %v524
    %v528 = vrot.slane %v526, 1
    %530 = vst.msk [vmem:[#allocation2 + $0x7] sm:$0x1] %vm460, %v526
    %531 = vst.msk [vmem:[#allocation2 + $0xf] sm:$0x1] %vm460, %v528
    %v532 = vld [vmem:[#allocation2] sm:$0xff]
    %v533 = vld [vmem:[#allocation2 + $0x8] sm:$0xff]
    %v534 = vmul.f32 %v426, 1.442695
    %v535 = vpow.pop %v534
    %v536 = vmul.f32 %v446, 1.442695
    %v537 = vpow.pop %v536
    %v538 = vsub.f32 %v448, %v532
    %v539 = vsub.f32 %v449, %v533
    %v540 = vsub.f32 %v538, %v426
    %v541 = vsub.f32 %v539, %v446
    %v542 = vmul.f32 %v540, 1.442695
    %v543 = vpow.pop %v542
    %v544 = vmul.f32 %v541, 1.442695
    %v545 = vpow.pop %v544
    %v546 = vmul.f32 %v543, %v271
    %v547 = vmul.f32 %v545, %v291
    %v548 = vmul.f32 %v543, %v319
    %v549 = vmul.f32 %v545, %v339
    %vm550 = vcmask 261120
    %v552 = vsel %vm550, %v223, 0
    %v555 = vsel %vm550, %v271, 0
    %557 = vmatpush.xpose.msra.mxu0 0.0
    %558 = vmatpush.xpose.msra.mxu0 0.0
    %559 = vmatpush.xpose.msra.mxu0 0.0
    %560 = vmatpush.xpose.msra.mxu0 0.0
    %561 = vmatpush.xpose.msra.mxu0 0.0
    %562 = vmatpush.xpose.msra.mxu0 0.0
    %563 = vmatpush.xpose.msra.mxu0 0.0
    %564 = vmatpush.xpose.msra.mxu0 0.0
    %565 = vmatpush.xpose.msra.mxu0 0.0
    %566 = vmatpush.xpose.msra.mxu0 0.0
    %567 = vmatpush.xpose.msra.mxu0 0.0
    %568 = vmatpush.xpose.msra.mxu0 0.0
    %569 = vmatpush.xpose.msra.mxu0 0.0
    %570 = vmatpush.xpose.msra.mxu0 0.0
    %571 = vmatpush.xpose.msra.mxu0 0.0
    %572 = vmatpush.xpose.msra.mxu0 %v555
    %573 = vmatmul.f32.gmra.mxu0 %v552
    %v574 = vpop.f32.mrf.mxu0
    %v575 = vadd.f32 0.0, %v574
    %576 = vdwg.mxu0
    %v578 = vsel %vm550, %v243, 0
    %v581 = vsel %vm550, %v291, 0
    %583 = vmatpush.xpose.msra.mxu0 0.0
    %584 = vmatpush.xpose.msra.mxu0 0.0
    %585 = vmatpush.xpose.msra.mxu0 0.0
    %586 = vmatpush.xpose.msra.mxu0 0.0
    %587 = vmatpush.xpose.msra.mxu0 0.0
    %588 = vmatpush.xpose.msra.mxu0 0.0
    %589 = vmatpush.xpose.msra.mxu0 0.0
    %590 = vmatpush.xpose.msra.mxu0 0.0
    %591 = vmatpush.xpose.msra.mxu0 0.0
    %592 = vmatpush.xpose.msra.mxu0 0.0
    %593 = vmatpush.xpose.msra.mxu0 0.0
    %594 = vmatpush.xpose.msra.mxu0 0.0
    %595 = vmatpush.xpose.msra.mxu0 0.0
    %596 = vmatpush.xpose.msra.mxu0 0.0
    %597 = vmatpush.xpose.msra.mxu0 0.0
    %598 = vmatpush.xpose.msra.mxu0 %v581
    %599 = vmatmul.f32.gmra.mxu0 %v578
    %v600 = vpop.f32.mrf.mxu0
    %v601 = vadd.f32 0.0, %v600
    %602 = vdwg.mxu0
    %v603 = vmul.f32 %v575, %v403
    %v604 = vmul.f32 %v601, %v403
    %v606 = vsel %vm404, %v603, 0
    %608 = vmatpush.msra.mxu0 0.0
    %609 = vmatpush.msra.mxu0 0.0
    %610 = vmatpush.msra.mxu0 0.0
    %611 = vmatpush.msra.mxu0 0.0
    %612 = vmatpush.msra.mxu0 0.0
    %613 = vmatpush.msra.mxu0 0.0
    %614 = vmatpush.msra.mxu0 0.0
    %615 = vmatpush.msra.mxu0 0.0
    %616 = vmatpush.msra.mxu0 0.0
    %617 = vmatpush.msra.mxu0 0.0
    %618 = vmatpush.msra.mxu0 0.0
    %619 = vmatpush.msra.mxu0 0.0
    %620 = vmatpush.msra.mxu0 0.0
    %621 = vmatpush.msra.mxu0 0.0
    %622 = vmatpush.msra.mxu0 0.0
    %623 = vmatpush.msra.mxu0 %v548
    %624 = vmatmul.f32.gmra.mxu0 %v606
    %v625 = vpop.f32.mrf.mxu0
    %v626 = vadd.f32 0.0, %v625
    %627 = vdwg.mxu0
    %v629 = vsel %vm404, %v604, 0
    %631 = vmatpush.msra.mxu0 0.0
    %632 = vmatpush.msra.mxu0 0.0
    %633 = vmatpush.msra.mxu0 0.0
    %634 = vmatpush.msra.mxu0 0.0
    %635 = vmatpush.msra.mxu0 0.0
    %636 = vmatpush.msra.mxu0 0.0
    %637 = vmatpush.msra.mxu0 0.0
    %638 = vmatpush.msra.mxu0 0.0
    %639 = vmatpush.msra.mxu0 0.0
    %640 = vmatpush.msra.mxu0 0.0
    %641 = vmatpush.msra.mxu0 0.0
    %642 = vmatpush.msra.mxu0 0.0
    %643 = vmatpush.msra.mxu0 0.0
    %644 = vmatpush.msra.mxu0 0.0
    %645 = vmatpush.msra.mxu0 0.0
    %646 = vmatpush.msra.mxu0 %v549
    %647 = vmatmul.f32.gmra.mxu0 %v629
    %v648 = vpop.f32.mrf.mxu0
    %v649 = vadd.f32 0.0, %v648
    %650 = vdwg.mxu0
    %v652 = vsel %vm550, %v36, 0
    %v655 = vsel %vm550, %v37, 0
    %v658 = vsel %vm550, %v38, 0
    %v661 = vsel %vm550, %v39, 0
    %663 = vmatpush.xpose.msra.mxu0 0.0
    %664 = vmatpush.xpose.msra.mxu0 0.0
    %665 = vmatpush.xpose.msra.mxu0 0.0
    %666 = vmatpush.xpose.msra.mxu0 0.0
    %667 = vmatpush.xpose.msra.mxu0 0.0
    %668 = vmatpush.xpose.msra.mxu0 0.0
    %669 = vmatpush.xpose.msra.mxu0 0.0
    %670 = vmatpush.xpose.msra.mxu0 0.0
    %671 = vmatpush.xpose.msra.mxu0 0.0
    %672 = vmatpush.xpose.msra.mxu0 0.0
    %673 = vmatpush.xpose.msra.mxu0 0.0
    %674 = vmatpush.xpose.msra.mxu0 0.0
    %675 = vmatpush.xpose.msra.mxu0 %v661
    %676 = vmatpush.xpose.msra.mxu0 %v658
    %677 = vmatpush.xpose.msra.mxu0 %v655
    %678 = vmatpush.xpose.msra.mxu0 %v652
    %679 = vmatmul.f32.gmra.mxu0 %v552
    %v680 = vpop.f32.mrf.mxu0
    %v681 = vadd.f32 %v626, %v680
    %682 = vdwg.mxu0
    %v684 = vsel %vm550, %v40, 0
    %v687 = vsel %vm550, %v41, 0
    %v690 = vsel %vm550, %v42, 0
    %v693 = vsel %vm550, %v43, 0
    %695 = vmatpush.xpose.msra.mxu0 0.0
    %696 = vmatpush.xpose.msra.mxu0 0.0
    %697 = vmatpush.xpose.msra.mxu0 0.0
    %698 = vmatpush.xpose.msra.mxu0 0.0
    %699 = vmatpush.xpose.msra.mxu0 0.0
    %700 = vmatpush.xpose.msra.mxu0 0.0
    %701 = vmatpush.xpose.msra.mxu0 0.0
    %702 = vmatpush.xpose.msra.mxu0 0.0
    %703 = vmatpush.xpose.msra.mxu0 0.0
    %704 = vmatpush.xpose.msra.mxu0 0.0
    %705 = vmatpush.xpose.msra.mxu0 0.0
    %706 = vmatpush.xpose.msra.mxu0 0.0
    %707 = vmatpush.xpose.msra.mxu0 %v693
    %708 = vmatpush.xpose.msra.mxu0 %v690
    %709 = vmatpush.xpose.msra.mxu0 %v687
    %710 = vmatpush.xpose.msra.mxu0 %v684
    %711 = vmatmul.f32.gmra.mxu0 %v578
    %v712 = vpop.f32.mrf.mxu0
    %v713 = vadd.f32 %v649, %v712
    %714 = vdwg.mxu0
    %v715 = vmul.f32 %v535, %v681
    %v716 = vmul.f32 %v537, %v713
    %717 = vmatpush.msra.mxu0 0.0
    %718 = vmatpush.msra.mxu0 0.0
    %719 = vmatpush.msra.mxu0 0.0
    %720 = vmatpush.msra.mxu0 0.0
    %721 = vmatpush.msra.mxu0 0.0
    %722 = vmatpush.msra.mxu0 0.0
    %723 = vmatpush.msra.mxu0 0.0
    %724 = vmatpush.msra.mxu0 0.0
    %725 = vmatpush.msra.mxu0 0.0
    %726 = vmatpush.msra.mxu0 0.0
    %727 = vmatpush.msra.mxu0 0.0
    %728 = vmatpush.msra.mxu0 0.0
    %729 = vmatpush.msra.mxu0 0.0
    %730 = vmatpush.msra.mxu0 0.0
    %731 = vmatpush.msra.mxu0 0.0
    %732 = vmatpush.msra.mxu0 %v546
    %733 = vmatmul.f32.gmra.mxu0 %v406
    %v734 = vpop.f32.mrf.mxu0
    %v735 = vadd.f32 0.0, %v734
    %736 = vdwg.mxu0
    %737 = vmatpush.msra.mxu0 0.0
    %738 = vmatpush.msra.mxu0 0.0
    %739 = vmatpush.msra.mxu0 0.0
    %740 = vmatpush.msra.mxu0 0.0
    %741 = vmatpush.msra.mxu0 0.0
    %742 = vmatpush.msra.mxu0 0.0
    %743 = vmatpush.msra.mxu0 0.0
    %744 = vmatpush.msra.mxu0 0.0
    %745 = vmatpush.msra.mxu0 0.0
    %746 = vmatpush.msra.mxu0 0.0
    %747 = vmatpush.msra.mxu0 0.0
    %748 = vmatpush.msra.mxu0 0.0
    %749 = vmatpush.msra.mxu0 0.0
    %750 = vmatpush.msra.mxu0 0.0
    %751 = vmatpush.msra.mxu0 0.0
    %752 = vmatpush.msra.mxu0 %v547
    %753 = vmatmul.f32.gmra.mxu0 %v406
    %v754 = vpop.f32.mrf.mxu0
    %v755 = vadd.f32 0.0, %v754
    %756 = vdwg.mxu0
    %v758 = vrot.slane %v44, 1
    %v759 = vperm.slane %v44, 0
    %v760 = vperm.slane %v758, 0
    %v763 = vadd.f32 %v759, %v735
    %v764 = vadd.f32 %v760, %v755
    %v765 = vmul.f32 %v535, %v763
    %v766 = vmul.f32 %v537, %v764
    %v767 = vmul.f32 %v765, %v223
    %v768 = vmul.f32 %v766, %v243
    %v769 = vsel %vm550, %v767, 0.0
    %770 = vadd.xlane.f32.xlu0 %v769
    %v771 = vpop.xlane.xlu0 %770
    %v772 = vsel %vm550, %v768, 0.0
    %773 = vadd.xlane.f32.xlu0 %v772
    %v774 = vpop.xlane.xlu0 %773
    %v775 = vand.u32 2147483647, %v771
    %v776 = vand.u32 2147483647, %v774
    %v777 = vmax.f32 %v775, 1.0
    %v778 = vmax.f32 %v776, 1.0
    %v779 = vmul.f32 %v363, %v715
    %v780 = vmul.f32 %v378, %v716
    %v781 = vrcp.pop %v777
    %v782 = vmul.f32 %v777, %v781
    %v783 = vsub.f32 1.0, %v782
    %v784 = vmul.f32 %v781, %v783
    %v785 = vadd.f32 %v781, %v784
    %vm786 = vweird.f32 %v777
    %vm787 = vweird.f32 %v781
    %vm788 = vmor %vm786, %vm787
    %v789 = vsel %vm788, %v781, %v785
    %v790 = vand.u32 2147483647, %v777
    %vm791 = vcmp.eq.f32.partialorder %v790, 8.507059e+37
    %v792 = vand.u32 %v777, 2147483648
    %v793 = vor.u32 1.1754944e-38, %v792
    %v794 = vsel %vm791, %v793, %v789
    %v795 = vmul.f32 %v779, %v794
    %v796 = vrcp.pop %v778
    %v797 = vmul.f32 %v778, %v796
    %v798 = vsub.f32 1.0, %v797
    %v799 = vmul.f32 %v796, %v798
    %v800 = vadd.f32 %v796, %v799
    %vm801 = vweird.f32 %v778
    %vm802 = vweird.f32 %v796
    %vm803 = vmor %vm801, %vm802
    %v804 = vsel %vm803, %v796, %v800
    %v805 = vand.u32 2147483647, %v778
    %vm806 = vcmp.eq.f32.partialorder %v805, 8.507059e+37
    %v807 = vand.u32 %v778, 2147483648
    %v808 = vor.u32 1.1754944e-38, %v807
    %v809 = vsel %vm806, %v808, %v804
    %v810 = vmul.f32 %v780, %v809
    %811 = vst.msk [vmem:[%s3] sm:$0xff] %vm550, %v795
    %812 = vst.msk [vmem:[%s3 + $0x8] sm:$0xff] %vm550, %v810
    %813 = vxpose.xlu0.b32.start [1/16] %v548, 128
    %814 = vxpose.xlu0.b32.cont [2/16] 0.0, 128
    %815 = vxpose.xlu0.b32.cont [3/16] 0.0, 128
    %816 = vxpose.xlu0.b32.cont [4/16] 0.0, 128
    %817 = vxpose.xlu0.b32.cont [5/16] 0.0, 128
    %818 = vxpose.xlu0.b32.cont [6/16] 0.0, 128
    %819 = vxpose.xlu0.b32.cont [7/16] 0.0, 128
    %820 = vxpose.xlu0.b32.cont [8/16] 0.0, 128
    %821 = vxpose.xlu0.b32.cont [9/16] 0.0, 128
    %822 = vxpose.xlu0.b32.cont [10/16] 0.0, 128
    %823 = vxpose.xlu0.b32.cont [11/16] 0.0, 128
    %824 = vxpose.xlu0.b32.cont [12/16] 0.0, 128
    %825 = vxpose.xlu0.b32.cont [13/16] 0.0, 128
    %826 = vxpose.xlu0.b32.cont [14/16] 0.0, 128
    %827 = vxpose.xlu0.b32.cont [15/16] 0.0, 128
    %828 = vxpose.xlu0.b32.end [16/16] 0.0, 128
    %v829 = vpop.trf.xlu0
    %v830 = vpop.trf.xlu0
    %v831 = vpop.trf.xlu0
    %v832 = vpop.trf.xlu0
    %v833 = vpop.trf.xlu0
    %v834 = vpop.trf.xlu0
    %v835 = vpop.trf.xlu0
    %v836 = vpop.trf.xlu0
    %v837 = vpop.trf.xlu0
    %v838 = vpop.trf.xlu0
    %v839 = vpop.trf.xlu0
    %v840 = vpop.trf.xlu0
    %v841 = vpop.trf.xlu0
    %v842 = vpop.trf.xlu0
    %v843 = vpop.trf.xlu0
    %v844 = vpop.trf.xlu0
    %845 = vxpose.xlu0.b32.start [1/16] %v549, 128
    %846 = vxpose.xlu0.b32.cont [2/16] 0.0, 128
    %847 = vxpose.xlu0.b32.cont [3/16] 0.0, 128
    %848 = vxpose.xlu0.b32.cont [4/16] 0.0, 128
    %849 = vxpose.xlu0.b32.cont [5/16] 0.0, 128
    %850 = vxpose.xlu0.b32.cont [6/16] 0.0, 128
    %851 = vxpose.xlu0.b32.cont [7/16] 0.0, 128
    %852 = vxpose.xlu0.b32.cont [8/16] 0.0, 128
    %853 = vxpose.xlu0.b32.cont [9/16] 0.0, 128
    %854 = vxpose.xlu0.b32.cont [10/16] 0.0, 128
    %855 = vxpose.xlu0.b32.cont [11/16] 0.0, 128
    %856 = vxpose.xlu0.b32.cont [12/16] 0.0, 128
    %857 = vxpose.xlu0.b32.cont [13/16] 0.0, 128
    %858 = vxpose.xlu0.b32.cont [14/16] 0.0, 128
    %859 = vxpose.xlu0.b32.cont [15/16] 0.0, 128
    %860 = vxpose.xlu0.b32.end [16/16] 0.0, 128
    %v861 = vpop.trf.xlu0
    %v862 = vpop.trf.xlu0
    %v863 = vpop.trf.xlu0
    %v864 = vpop.trf.xlu0
    %v865 = vpop.trf.xlu0
    %v866 = vpop.trf.xlu0
    %v867 = vpop.trf.xlu0
    %v868 = vpop.trf.xlu0
    %v869 = vpop.trf.xlu0
    %v870 = vpop.trf.xlu0
    %v871 = vpop.trf.xlu0
    %v872 = vpop.trf.xlu0
    %v873 = vpop.trf.xlu0
    %v874 = vpop.trf.xlu0
    %v875 = vpop.trf.xlu0
    %v876 = vpop.trf.xlu0
    %v878 = vsel %vm404, %v829, 0
    %v881 = vsel %vm404, %v830, 0
    %v884 = vsel %vm404, %v831, 0
    %v887 = vsel %vm404, %v832, 0
    %889 = vmatpush.msra.mxu0 0.0
    %890 = vmatpush.msra.mxu0 0.0
    %891 = vmatpush.msra.mxu0 0.0
    %892 = vmatpush.msra.mxu0 0.0
    %893 = vmatpush.msra.mxu0 0.0
    %894 = vmatpush.msra.mxu0 0.0
    %895 = vmatpush.msra.mxu0 0.0
    %896 = vmatpush.msra.mxu0 0.0
    %897 = vmatpush.msra.mxu0 0.0
    %898 = vmatpush.msra.mxu0 0.0
    %899 = vmatpush.msra.mxu0 0.0
    %900 = vmatpush.msra.mxu0 0.0
    %901 = vmatpush.msra.mxu0 0.0
    %902 = vmatpush.msra.mxu0 0.0
    %903 = vmatpush.msra.mxu0 0.0
    %904 = vmatpush.msra.mxu0 %v271
    %905 = vmatmul.f32.gmra.mxu0 %v878
    %v906 = vpop.f32.mrf.mxu0
    %v907 = vadd.f32 0.0, %v906
    %908 = vmatmul.f32.gmra.mxu0 %v881
    %v909 = vpop.f32.mrf.mxu0
    %v910 = vadd.f32 0.0, %v909
    %911 = vmatmul.f32.gmra.mxu0 %v884
    %v912 = vpop.f32.mrf.mxu0
    %v913 = vadd.f32 0.0, %v912
    %914 = vmatmul.f32.gmra.mxu0 %v887
    %v915 = vpop.f32.mrf.mxu0
    %v916 = vadd.f32 0.0, %v915
    %917 = vdwg.mxu0
    %v919 = vsel %vm404, %v861, 0
    %v922 = vsel %vm404, %v862, 0
    %v925 = vsel %vm404, %v863, 0
    %v928 = vsel %vm404, %v864, 0
    %930 = vmatpush.msra.mxu0 0.0
    %931 = vmatpush.msra.mxu0 0.0
    %932 = vmatpush.msra.mxu0 0.0
    %933 = vmatpush.msra.mxu0 0.0
    %934 = vmatpush.msra.mxu0 0.0
    %935 = vmatpush.msra.mxu0 0.0
    %936 = vmatpush.msra.mxu0 0.0
    %937 = vmatpush.msra.mxu0 0.0
    %938 = vmatpush.msra.mxu0 0.0
    %939 = vmatpush.msra.mxu0 0.0
    %940 = vmatpush.msra.mxu0 0.0
    %941 = vmatpush.msra.mxu0 0.0
    %942 = vmatpush.msra.mxu0 0.0
    %943 = vmatpush.msra.mxu0 0.0
    %944 = vmatpush.msra.mxu0 0.0
    %945 = vmatpush.msra.mxu0 %v291
    %946 = vmatmul.f32.gmra.mxu0 %v919
    %v947 = vpop.f32.mrf.mxu0
    %v948 = vadd.f32 0.0, %v947
    %949 = vmatmul.f32.gmra.mxu0 %v922
    %v950 = vpop.f32.mrf.mxu0
    %v951 = vadd.f32 0.0, %v950
    %952 = vmatmul.f32.gmra.mxu0 %v925
    %v953 = vpop.f32.mrf.mxu0
    %v954 = vadd.f32 0.0, %v953
    %955 = vmatmul.f32.gmra.mxu0 %v928
    %v956 = vpop.f32.mrf.mxu0
    %v957 = vadd.f32 0.0, %v956
    %958 = vdwg.mxu0
    %v959 = vperm.slane %v535, 7
    %v960 = vlaneseq
    %v961 = vshrl.u32 %v960, 7
    %963 = vset.pattern.permute.xlu0 %v961
    %964 = vperm.xlu0 %963, %v959
    %v965 = vpop.permute.xlu0 %964
    %v966 = vlaneseq
    %v967 = vshrl.u32 %v966, 7
    %v968 = vadd.s32 %v967, 8
    %969 = vset.pattern.permute.xlu0 %v968
    %970 = vperm.xlu0 %969, %v959
    %v971 = vpop.permute.xlu0 %970
    %v972 = vlaneseq
    %v973 = vshrl.u32 %v972, 7
    %v974 = vadd.s32 %v973, 16
    %975 = vset.pattern.permute.xlu0 %v974
    %976 = vperm.xlu0 %975, %v959
    %v977 = vpop.permute.xlu0 %976
    %v978 = vlaneseq
    %v979 = vshrl.u32 %v978, 7
    %v980 = vadd.s32 %v979, 24
    %981 = vset.pattern.permute.xlu0 %v980
    %982 = vperm.xlu0 %981, %v959
    %v983 = vpop.permute.xlu0 %982
    %v984 = vperm.slane %v537, 7
    %v985 = vlaneseq
    %v986 = vshrl.u32 %v985, 7
    %988 = vset.pattern.permute.xlu0 %v986
    %989 = vperm.xlu0 %988, %v984
    %v990 = vpop.permute.xlu0 %989
    %v991 = vlaneseq
    %v992 = vshrl.u32 %v991, 7
    %v993 = vadd.s32 %v992, 8
    %994 = vset.pattern.permute.xlu0 %v993
    %995 = vperm.xlu0 %994, %v984
    %v996 = vpop.permute.xlu0 %995
    %v997 = vlaneseq
    %v998 = vshrl.u32 %v997, 7
    %v999 = vadd.s32 %v998, 16
    %1000 = vset.pattern.permute.xlu0 %v999
    %1001 = vperm.xlu0 %1000, %v984
    %v1002 = vpop.permute.xlu0 %1001
    %v1003 = vlaneseq
    %v1004 = vshrl.u32 %v1003, 7
    %v1005 = vadd.s32 %v1004, 24
    %1006 = vset.pattern.permute.xlu0 %v1005
    %1007 = vperm.xlu0 %1006, %v984
    %v1008 = vpop.permute.xlu0 %1007
    %v1009 = vadd.f32 %v36, %v907
    %v1010 = vadd.f32 %v37, %v910
    %v1011 = vadd.f32 %v38, %v913
    %v1012 = vadd.f32 %v39, %v916
    %v1013 = vadd.f32 %v40, %v948
    %v1014 = vadd.f32 %v41, %v951
    %v1015 = vadd.f32 %v42, %v954
    %v1016 = vadd.f32 %v43, %v957
    %v1017 = vmul.f32 %v965, %v1009
    %v1018 = vmul.f32 %v971, %v1010
    %v1019 = vmul.f32 %v977, %v1011
    %v1020 = vmul.f32 %v983, %v1012
    %v1021 = vmul.f32 %v990, %v1013
    %v1022 = vmul.f32 %v996, %v1014
    %v1023 = vmul.f32 %v1002, %v1015
    %v1024 = vmul.f32 %v1008, %v1016
    %1025 = vst.msk [vmem:[#allocation3] sm:$0xff] %vm550, %v1017
    %1026 = vst.msk [vmem:[#allocation3 + $0x8] sm:$0xff] %vm550, %v1018
    %1027 = vst.msk [vmem:[#allocation3 + $0x10] sm:$0xff] %vm550, %v1019
    %1028 = vst.msk [vmem:[#allocation3 + $0x18] sm:$0xff] %vm550, %v1020
    %1029 = vst.msk [vmem:[#allocation3 + $0x20] sm:$0xff] %vm550, %v1021
    %1030 = vst.msk [vmem:[#allocation3 + $0x28] sm:$0xff] %vm550, %v1022
    %1031 = vst.msk [vmem:[#allocation3 + $0x30] sm:$0xff] %vm550, %v1023
    %1032 = vst.msk [vmem:[#allocation3 + $0x38] sm:$0xff] %vm550, %v1024
    %v1035 = vrot.slane %v766, 7
    %vm1038 = vcmask 261127
    %1039 = vst.msk [vmem:[#allocation5 - $0x7] sm:$0x80] %vm1038, %v765
    %1040 = vst.msk [vmem:[#allocation5 + $0x1] sm:$0x1] %vm460, %v1035
    %v1041 = vrot.slane %v526, 2
    %v1043 = vadd.f32 %v426, %v528
    %v1044 = vadd.f32 %v446, %v1041
    %v1047 = vrot.slane %v1044, 7
    %1050 = vst.msk [vmem:[#allocation7 - $0x7] sm:$0x80] %vm1038, %v1043
    %1051 = vst.msk [vmem:[#allocation7 + $0x1] sm:$0x1] %vm460, %v1047
    // Predicated region
    $region18: #{mlstm_forward.2} parent=1 // pred_check
      _
    $region19: #{mlstm_forward.2} parent=1 // pred_check_branch
      %1053 = sbr.rel (0) target = $region21
    $region20: #{mlstm_forward.2} parent=1 // pred_region
      _
    $region21: #{mlstm_forward.2} parent=1 // pred_fallthru
      _
    // Predicated region
    $region22: #{mlstm_forward.2} parent=1 // pred_check
      _
    $region23: #{mlstm_forward.2} parent=1 // pred_check_branch
      %1055 = sbr.rel (0) target = $region25
    $region24: #{mlstm_forward.2} parent=1 // pred_region
      %1057 = vsyncadd [#allocation4], 0
      %s1058 = sshll.u32 [#allocation3], 4
      %s1059 = int_to_ptr.vmem [resolvable:$true] %s1058
      %s1060 = sshll.u32 %s4, 4
      %s1061 = int_to_ptr.hbm [resolvable:$true] %s1060
      %1066 = dma.vmem_to_hbm [thread:$0]  %s1059, 1024, %s1061, [#allocation4], 128, 128, 8
    $region25: #{mlstm_forward.2} parent=1 // pred_fallthru
      _
    // Predicated region
    $region26: #{mlstm_forward.2} parent=1 // pred_check
      _
    $region27: #{mlstm_forward.2} parent=1 // pred_check_branch
      %1068 = sbr.rel (0) target = $region29
    $region28: #{mlstm_forward.2} parent=1 // pred_region
      %1070 = vsyncadd [#allocation6], 0
      %s1072 = sshll.u32 [#allocation5], 4
      %s1073 = int_to_ptr.vmem [resolvable:$true] %s1072
      %s1074 = sshll.u32 %s5, 4
      %s1075 = int_to_ptr.hbm [resolvable:$true] %s1074
      %1077 = dma.vmem_to_hbm [thread:$0]  %s1073, 32, %s1075, [#allocation6]
    $region29: #{mlstm_forward.2} parent=1 // pred_fallthru
      _
    // Predicated region
    $region30: #{mlstm_forward.2} parent=1 // pred_check
      _
    $region31: #{mlstm_forward.2} parent=1 // pred_check_branch
      %1079 = sbr.rel (0) target = $region33
    $region32: #{mlstm_forward.2} parent=1 // pred_region
      %1081 = vsyncadd [#allocation6], 0
      %s1083 = sshll.u32 [#allocation7], 4
      %s1084 = int_to_ptr.vmem [resolvable:$true] %s1083
      %s1085 = sshll.u32 %s6, 4
      %s1086 = int_to_ptr.hbm [resolvable:$true] %s1085
      %1088 = dma.vmem_to_hbm [thread:$0]  %s1084, 32, %s1086, [#allocation6]
    $region33: #{mlstm_forward.2} parent=1 // pred_fallthru
      _
    // Predicated region
    $region34: #{mlstm_forward.2} parent=1 // pred_check
      _
    $region35: #{mlstm_forward.2} parent=1 // pred_check_branch
      %1090 = sbr.rel (0) target = $region37
    $region36: #{mlstm_forward.2} parent=1 // pred_region
      _
    $region37: #{mlstm_forward.2} parent=1 // pred_fallthru
      _
    // Predicated region
    $region38: #{mlstm_forward.2} parent=1 // pred_check
      _
    $region39: #{mlstm_forward.2} parent=1 // pred_check_branch
      %1092 = sbr.rel (0) target = $region41
    $region40: #{mlstm_forward.2} parent=1 // pred_region
      %1094 = dma.done [#allocation4], 1024
    $region41: #{mlstm_forward.2} parent=1 // pred_fallthru
      _
    // Predicated region
    $region42: #{mlstm_forward.2} parent=1 // pred_check
      _
    $region43: #{mlstm_forward.2} parent=1 // pred_check_branch
      %1096 = sbr.rel (0) target = $region45
    $region44: #{mlstm_forward.2} parent=1 // pred_region
      %1098 = dma.done [#allocation6], 32
    $region45: #{mlstm_forward.2} parent=1 // pred_fallthru
      _
    // Predicated region
    $region46: #{mlstm_forward.2} parent=1 // pred_check
      _
    $region47: #{mlstm_forward.2} parent=1 // pred_check_branch
      %1100 = sbr.rel (0) target = $region49
    $region48: #{mlstm_forward.2} parent=1 // pred_region
      %1102 = dma.done [#allocation6], 32
    $region49: #{mlstm_forward.2} parent=1 // pred_fallthru
      _
    %1103 = vsyncpa [#allocation4], 1
    %1104 = vsyncpa [#allocation6], 1

</llo_original>
